<compile_context>
chip_gen: v7x
topology: tpu7x:2x2x1
jax: 0.10.0
libtpu: 0.0.40
codegen_flags: <defaults>
</compile_context>

<pallas_src>
import jax
import jax.numpy as jnp
from jax import lax
from jax.experimental import pallas as pl
from jax.experimental.pallas import tpu as pltpu

# ---------------- synthetic stand-ins for `config` / `args` ----------------
INPUT_LIST = ["f0", "f1", "f2", "f3", "f4", "f5"]   # len = 6 total input features
DNN_LIST = ["f1", "f3", "f4", "f5"]                 # input_size = 4
SAMPLE_INDEX = tuple(INPUT_LIST.index(j) for j in DNN_LIST)
HIDDEN_SIZE = 32
NN_LAYER = (32, 16)
BATCH = 2
TIME_STEP = 8
ADD_FM = False          # args.add_FM
FM_SIZE = 4             # args.FM_size (unused when ADD_FM is False)
DROPOUT_P = 0.0         # nn.Dropout -> identity at inference time


# --------------------------- fused LSTM + MLP kernel ------------------------
def lstm_nn_kernel(x_ref, h0_ref, c0_ref, wih_ref,
                   whh_i_ref, whh_f_ref, whh_g_ref, whh_o_ref, b_ref,
                   w1_ref, b1_ref, alpha_ref, w2_ref, b2_ref, w3_ref, b3_ref,
                   out_ref, xg_s, hs_s):
    B, T, _ = x_ref.shape
    H = h0_ref.shape[-1]
    f32 = jnp.float32

    # ---- prologue: input projection for ALL time steps at once (off the serial chain).
    # Feature selection is folded into W_ih (zero rows for unused features), so the raw
    # (B, T, F_total) input is consumed directly.  xg_s rows are batch-major: row b*T + t.
    for b in range(B):
        xg_s[b * T:(b + 1) * T, :] = (
            jnp.dot(x_ref[b], wih_ref[...], preferred_element_type=f32) + b_ref[...])

    # ---- recurrence: fully unrolled (T is small & static); per step only h @ W_hh
    #      (per-gate weights => no lane slicing of h-dependent values) + elementwise math.
    h = h0_ref[...]                                   # (B, H)
    c = c0_ref[...]                                   # (B, H)
    for t in range(T):
        xg_t = xg_s[pl.ds(t, B, stride=T), :]         # rows {b*T + t}  -> (B, 4H)
        hg_i = jnp.dot(h, whh_i_ref[...], preferred_element_type=f32)
        hg_f = jnp.dot(h, whh_f_ref[...], preferred_element_type=f32)
        hg_g = jnp.dot(h, whh_g_ref[...], preferred_element_type=f32)
        hg_o = jnp.dot(h, whh_o_ref[...], preferred_element_type=f32)
        i_g = jax.nn.sigmoid(xg_t[:, 0:H] + hg_i)
        f_g = jax.nn.sigmoid(xg_t[:, H:2 * H] + hg_f)
        g_g = jnp.tanh(xg_t[:, 2 * H:3 * H] + hg_g)
        o_g = jax.nn.sigmoid(xg_t[:, 3 * H:4 * H] + hg_o)
        c = f_g * c + i_g * g_g
        h = o_g * jnp.tanh(c)
        # batch-major hidden buffer (row b*T + t) so MLP + output need no transpose.
        for b in range(B):
            hs_s[b * T + t:b * T + t + 1, :] = h[b:b + 1, :]

    # ---- MLP head on all (B*T) rows at once.
    feat = hs_s[...]                                                       # (B*T, H)
    h1 = jnp.dot(feat, w1_ref[...], preferred_element_type=f32) + b1_ref[...]
    alpha = alpha_ref[0, 0]                                                # SMEM scalar
    h1 = jnp.where(h1 >= 0.0, h1, alpha * h1)                              # PReLU
    # Dropout -> identity (eval)
    h2 = jnp.dot(h1, w2_ref[...], preferred_element_type=f32) + b2_ref[...]
    h2 = jnp.where(h2 > 20.0, h2, jnp.log1p(jnp.exp(jnp.minimum(h2, 20.0))))  # Softplus
    # Dropout -> identity (eval)
    h3 = jnp.abs(jnp.dot(h2, w3_ref[...], preferred_element_type=f32) + b3_ref[0, 0])
    # h3 rows are batch-major -> write straight to the (B, T, 1) output, once.
    for b in range(B):
        out_ref[b] = h3[b * T:(b + 1) * T, :]


def _vmem():
    return pl.BlockSpec(memory_space=pltpu.MemorySpace.VMEM)


def _smem():
    return pl.BlockSpec(memory_space=pltpu.MemorySpace.SMEM)


def fused_lstm_nn(x, h0, c0, p):
    B, T, _ = x.shape
    H = h0.shape[-1]
    return pl.pallas_call(
        lstm_nn_kernel,
        out_shape=jax.ShapeDtypeStruct((B, T, 1), jnp.float32),
        in_specs=[
            _vmem(),                               # x            (B, T, F_total)
            _vmem(), _vmem(),                      # h0, c0       (B, H)
            _vmem(),                               # W_ih^T padded (F_total, 4H)
            _vmem(), _vmem(), _vmem(), _vmem(),    # W_hh^T per gate (H, H)
            _vmem(),                               # bias_ih + bias_hh (1, 4H)
            _vmem(), _vmem(),                      # W1^T, b1
            _smem(),                               # PReLU alpha  (1, 1)  scalar
            _vmem(), _vmem(),                      # W2^T, b2
            _vmem(),                               # W3^T
            _smem(),                               # b3           (1, 1)  scalar
        ],
        out_specs=_vmem(),
        scratch_shapes=[
            pltpu.VMEM((B * T, 4 * H), jnp.float32),   # precomputed input gates
            pltpu.VMEM((B * T, H), jnp.float32),       # hidden states (batch-major)
        ],
    )(x, h0, c0, p["wih_pad_t"],
      p["whh_i_t"], p["whh_f_t"], p["whh_g_t"], p["whh_o_t"], p["b_lstm"],
      p["w1_t"], p["b1"], p["alpha"], p["w2_t"], p["b2"], p["w3_t"], p["b3"])


@jax.jit
def lstm_nn_forward(params, x, fm, h0, c0):
    del fm  # ADD_FM is False (torch module ignores fm in that case too)
    return fused_lstm_nn(x, h0, c0, params)        # zero wrapper glue ops


# ------------------------- pure-JAX reference (check) ----------------------
def ref_forward(params, x, fm, h0, c0):
    idx = jnp.asarray(SAMPLE_INDEX, dtype=jnp.int32)
    x_sel = x[:, :, idx]
    H = HIDDEN_SIZE

    def step(carry, x_t):
        h, c = carry
        gates = x_t @ params["wih_t"] + h @ params["whh_t"] + params["b_lstm"]
        i_g = jax.nn.sigmoid(gates[:, 0:H])
        f_g = jax.nn.sigmoid(gates[:, H:2 * H])
        g_g = jnp.tanh(gates[:, 2 * H:3 * H])
        o_g = jax.nn.sigmoid(gates[:, 3 * H:4 * H])
        c = f_g * c + i_g * g_g
        h = o_g * jnp.tanh(c)
        return (h, c), h

    (_, _), hs = lax.scan(step, (h0, c0), jnp.transpose(x_sel, (1, 0, 2)))   # (T, B, H)
    feat = hs
    if ADD_FM:
        feat = jnp.concatenate(
            [feat, jnp.broadcast_to(fm[None], (hs.shape[0],) + fm.shape)], axis=-1)
    h1 = feat @ params["w1_t"] + params["b1"]
    h1 = jnp.where(h1 >= 0.0, h1, params["alpha"][0, 0] * h1)
    h2 = h1 @ params["w2_t"] + params["b2"]
    h2 = jnp.where(h2 > 20.0, h2, jnp.log1p(jnp.exp(jnp.minimum(h2, 20.0))))
    h3 = jnp.abs(h2 @ params["w3_t"] + params["b3"])
    return jnp.transpose(h3, (1, 0, 2))                 # (B, T, 1)


# ------------------------------- param init --------------------------------
def init_params(key):
    D_in = len(DNN_LIST)
    F_total = len(INPUT_LIST)
    H = HIDDEN_SIZE
    n0, n1 = NN_LAYER
    mlp_in = H + (FM_SIZE if ADD_FM else 0)
    ks = jax.random.split(key, 10)
    s = 0.1
    # LSTM (stored transposed for right-multiplication; gate order i,f,g,o)
    wih_t = s * jax.random.normal(ks[0], (D_in, 4 * H), jnp.float32)
    whh_t = s * jax.random.normal(ks[1], (H, 4 * H), jnp.float32)
    b_lstm = s * jax.random.normal(ks[2], (1, 4 * H), jnp.float32)   # bias_ih + bias_hh
    # Fold the x[:, :, sample_index] gather into W_ih: zero rows for unused features.
    wih_pad_t = jnp.zeros((F_total, 4 * H), jnp.float32)
    wih_pad_t = wih_pad_t.at[jnp.asarray(SAMPLE_INDEX)].set(wih_t)
    return {
        # reference-layout LSTM weights
        "wih_t": wih_t, "whh_t": whh_t, "b_lstm": b_lstm,
        # kernel-layout LSTM weights
        "wih_pad_t": wih_pad_t,
        "whh_i_t": whh_t[:, 0:H],
        "whh_f_t": whh_t[:, H:2 * H],
        "whh_g_t": whh_t[:, 2 * H:3 * H],
        "whh_o_t": whh_t[:, 3 * H:4 * H],
        # MLP head
        "w1_t": s * jax.random.normal(ks[3], (mlp_in, n0), jnp.float32),
        "b1": s * jax.random.normal(ks[4], (1, n0), jnp.float32),
        "alpha": jnp.full((1, 1), 0.25, jnp.float32),                  # PReLU init
        "w2_t": s * jax.random.normal(ks[5], (n0, n1), jnp.float32),
        "b2": s * jax.random.normal(ks[6], (1, n1), jnp.float32),
        "w3_t": s * jax.random.normal(ks[7], (n1, 1), jnp.float32),
        "b3": s * jax.random.normal(ks[8], (1, 1), jnp.float32),
    }


if __name__ == "__main__":
    key = jax.random.PRNGKey(0)
    k_p, k_x, k_fm, k_h, k_c = jax.random.split(key, 5)

    params = init_params(k_p)
    x = jax.random.normal(k_x, (BATCH, TIME_STEP, len(INPUT_LIST)), jnp.float32)
    fm = jax.random.normal(k_fm, (BATCH, FM_SIZE), jnp.float32)
    # forward_init: random initial hidden / cell states (torch.randn(1, B, H))
    h0 = jax.random.normal(k_h, (BATCH, HIDDEN_SIZE), jnp.float32)
    c0 = jax.random.normal(k_c, (BATCH, HIDDEN_SIZE), jnp.float32)

    out = lstm_nn_forward(params, x, fm, h0, c0)
    out = jax.block_until_ready(out)
    assert out.shape == (BATCH, TIME_STEP, 1), out.shape

    ref = jax.block_until_ready(ref_forward(params, x, fm, h0, c0))
    assert jnp.allclose(out, ref, atol=3e-5, rtol=3e-5), \
        float(jnp.max(jnp.abs(out - ref)))

    print("KERNEL_OK")
</pallas_src>

<mosaic_0001>
module attributes {stable_mosaic.version = 11 : i64} {
  func.func @lstm_nn_kernel(%arg0: memref<2x8x6xf32, #tpu.memory_space<vmem>>, %arg1: memref<2x32xf32, #tpu.memory_space<vmem>>, %arg2: memref<2x32xf32, #tpu.memory_space<vmem>>, %arg3: memref<6x128xf32, #tpu.memory_space<vmem>>, %arg4: memref<32x32xf32, #tpu.memory_space<vmem>>, %arg5: memref<32x32xf32, #tpu.memory_space<vmem>>, %arg6: memref<32x32xf32, #tpu.memory_space<vmem>>, %arg7: memref<32x32xf32, #tpu.memory_space<vmem>>, %arg8: memref<1x128xf32, #tpu.memory_space<vmem>>, %arg9: memref<32x32xf32, #tpu.memory_space<vmem>>, %arg10: memref<1x32xf32, #tpu.memory_space<vmem>>, %arg11: memref<1x1xf32, #tpu.memory_space<smem>>, %arg12: memref<32x16xf32, #tpu.memory_space<vmem>>, %arg13: memref<1x16xf32, #tpu.memory_space<vmem>>, %arg14: memref<16x1xf32, #tpu.memory_space<vmem>>, %arg15: memref<1x1xf32, #tpu.memory_space<smem>>, %arg16: memref<2x8x1xf32, #tpu.memory_space<vmem>>, %arg17: memref<16x128xf32, #tpu.memory_space<vmem>>, %arg18: memref<16x32xf32, #tpu.memory_space<vmem>>) attributes {dimension_semantics = [], scalar_prefetch = 0 : i64, scratch_operands = 2 : i64, tpu.core_type = #tpu.core_type<tc>} {
    %c0 = arith.constant 0 : index
    %c0_0 = arith.constant 0 : index
    %c0_1 = arith.constant 0 : index
    %0 = vector.load %arg0[%c0, %c0_0, %c0_1] : memref<2x8x6xf32, #tpu.memory_space<vmem>>, vector<1x8x6xf32>
    %1 = vector.shape_cast %0 : vector<1x8x6xf32> to vector<8x6xf32>
    %c0_2 = arith.constant 0 : index
    %c0_3 = arith.constant 0 : index
    %2 = vector.load %arg3[%c0_2, %c0_3] : memref<6x128xf32, #tpu.memory_space<vmem>>, vector<6x128xf32>
    %cst = arith.constant dense<0.000000e+00> : vector<8x128xf32>
    %3 = tpu.matmul %1, %2, %cst {dimension_numbers = #tpu.dot_dimension_numbers<[1], [0], [0], [1], [0, 0, 1, 1], [], []>} : vector<8x6xf32>, vector<6x128xf32>, vector<8x128xf32> -> vector<8x128xf32>
    %c0_4 = arith.constant 0 : index
    %c0_5 = arith.constant 0 : index
    %4 = vector.load %arg8[%c0_4, %c0_5] : memref<1x128xf32, #tpu.memory_space<vmem>>, vector<1x128xf32>
    %5 = vector.broadcast %4 : vector<1x128xf32> to vector<8x128xf32>
    %6 = arith.addf %3, %5 : vector<8x128xf32>
    %c0_6 = arith.constant 0 : index
    %c0_7 = arith.constant 0 : index
    %7 = vector.load %arg17[%c0_6, %c0_7] : memref<16x128xf32, #tpu.memory_space<vmem>>, vector<8x128xf32>
    tpu.vector_store %arg17[%c0_6, %c0_7], %6 {strides = array<i32>} : memref<16x128xf32, #tpu.memory_space<vmem>>, vector<8x128xf32>,
    %c1 = arith.constant 1 : index
    %c0_8 = arith.constant 0 : index
    %c0_9 = arith.constant 0 : index
    %8 = vector.load %arg0[%c1, %c0_8, %c0_9] : memref<2x8x6xf32, #tpu.memory_space<vmem>>, vector<1x8x6xf32>
    %9 = vector.shape_cast %8 : vector<1x8x6xf32> to vector<8x6xf32>
    %c0_10 = arith.constant 0 : index
    %c0_11 = arith.constant 0 : index
    %10 = vector.load %arg3[%c0_10, %c0_11] : memref<6x128xf32, #tpu.memory_space<vmem>>, vector<6x128xf32>
    %cst_12 = arith.constant dense<0.000000e+00> : vector<8x128xf32>
    %11 = tpu.matmul %9, %10, %cst_12 {dimension_numbers = #tpu.dot_dimension_numbers<[1], [0], [0], [1], [0, 0, 1, 1], [], []>} : vector<8x6xf32>, vector<6x128xf32>, vector<8x128xf32> -> vector<8x128xf32>
    %c0_13 = arith.constant 0 : index
    %c0_14 = arith.constant 0 : index
    %12 = vector.load %arg8[%c0_13, %c0_14] : memref<1x128xf32, #tpu.memory_space<vmem>>, vector<1x128xf32>
    %13 = vector.broadcast %12 : vector<1x128xf32> to vector<8x128xf32>
    %14 = arith.addf %11, %13 : vector<8x128xf32>
    %c8 = arith.constant 8 : index
    %c0_15 = arith.constant 0 : index
    %15 = vector.load %arg17[%c8, %c0_15] : memref<16x128xf32, #tpu.memory_space<vmem>>, vector<8x128xf32>
    tpu.vector_store %arg17[%c8, %c0_15], %14 {strides = array<i32>} : memref<16x128xf32, #tpu.memory_space<vmem>>, vector<8x128xf32>,
    %c0_16 = arith.constant 0 : index
    %c0_17 = arith.constant 0 : index
    %16 = vector.load %arg1[%c0_16, %c0_17] : memref<2x32xf32, #tpu.memory_space<vmem>>, vector<2x32xf32>
    %c0_18 = arith.constant 0 : index
    %c0_19 = arith.constant 0 : index
    %17 = vector.load %arg2[%c0_18, %c0_19] : memref<2x32xf32, #tpu.memory_space<vmem>>, vector<2x32xf32>
    %c0_20 = arith.constant 0 : index
    %c0_21 = arith.constant 0 : index
    %18 = tpu.strided_load %arg17[%c0_20, %c0_21] {strides = array<i32: 8, 1>} : memref<16x128xf32, #tpu.memory_space<vmem>>, vector<2x128xf32>
    %c0_22 = arith.constant 0 : index
    %c0_23 = arith.constant 0 : index
    %19 = vector.load %arg4[%c0_22, %c0_23] : memref<32x32xf32, #tpu.memory_space<vmem>>, vector<32x32xf32>
    %cst_24 = arith.constant dense<0.000000e+00> : vector<2x32xf32>
    %20 = tpu.matmul %16, %19, %cst_24 {dimension_numbers = #tpu.dot_dimension_numbers<[1], [0], [0], [1], [0, 0, 1, 1], [], []>} : vector<2x32xf32>, vector<32x32xf32>, vector<2x32xf32> -> vector<2x32xf32>
    %c0_25 = arith.constant 0 : index
    %c0_26 = arith.constant 0 : index
    %21 = vector.load %arg5[%c0_25, %c0_26] : memref<32x32xf32, #tpu.memory_space<vmem>>, vector<32x32xf32>
    %cst_27 = arith.constant dense<0.000000e+00> : vector<2x32xf32>
    %22 = tpu.matmul %16, %21, %cst_27 {dimension_numbers = #tpu.dot_dimension_numbers<[1], [0], [0], [1], [0, 0, 1, 1], [], []>} : vector<2x32xf32>, vector<32x32xf32>, vector<2x32xf32> -> vector<2x32xf32>
    %c0_28 = arith.constant 0 : index
    %c0_29 = arith.constant 0 : index
    %23 = vector.load %arg6[%c0_28, %c0_29] : memref<32x32xf32, #tpu.memory_space<vmem>>, vector<32x32xf32>
    %cst_30 = arith.constant dense<0.000000e+00> : vector<2x32xf32>
    %24 = tpu.matmul %16, %23, %cst_30 {dimension_numbers = #tpu.dot_dimension_numbers<[1], [0], [0], [1], [0, 0, 1, 1], [], []>} : vector<2x32xf32>, vector<32x32xf32>, vector<2x32xf32> -> vector<2x32xf32>
    %c0_31 = arith.constant 0 : index
    %c0_32 = arith.constant 0 : index
    %25 = vector.load %arg7[%c0_31, %c0_32] : memref<32x32xf32, #tpu.memory_space<vmem>>, vector<32x32xf32>
    %cst_33 = arith.constant dense<0.000000e+00> : vector<2x32xf32>
    %26 = tpu.matmul %16, %25, %cst_33 {dimension_numbers = #tpu.dot_dimension_numbers<[1], [0], [0], [1], [0, 0, 1, 1], [], []>} : vector<2x32xf32>, vector<32x32xf32>, vector<2x32xf32> -> vector<2x32xf32>
    %27 = vector.extract_strided_slice %18 {offsets = [0, 0], sizes = [2, 32], strides = [1, 1]} : vector<2x128xf32> to vector<2x32xf32>
    %28 = arith.addf %27, %20 : vector<2x32xf32>
    %29 = arith.negf %28 : vector<2x32xf32>
    %30 = math.exp %29 : vector<2x32xf32>
    %cst_34 = arith.constant 1.000000e+00 : f32
    %31 = vector.broadcast %cst_34 : f32 to vector<2x32xf32>
    %32 = arith.addf %31, %30 : vector<2x32xf32>
    %33 = arith.divf %31, %32 : vector<2x32xf32>
    %34 = vector.extract_strided_slice %18 {offsets = [0, 32], sizes = [2, 32], strides = [1, 1]} : vector<2x128xf32> to vector<2x32xf32>
    %35 = arith.addf %34, %22 : vector<2x32xf32>
    %36 = arith.negf %35 : vector<2x32xf32>
    %37 = math.exp %36 : vector<2x32xf32>
    %cst_35 = arith.constant 1.000000e+00 : f32
    %38 = vector.broadcast %cst_35 : f32 to vector<2x32xf32>
    %39 = arith.addf %38, %37 : vector<2x32xf32>
    %40 = arith.divf %38, %39 : vector<2x32xf32>
    %41 = vector.extract_strided_slice %18 {offsets = [0, 64], sizes = [2, 32], strides = [1, 1]} : vector<2x128xf32> to vector<2x32xf32>
    %42 = arith.addf %41, %24 : vector<2x32xf32>
    %43 = math.tanh %42 : vector<2x32xf32>
    %44 = vector.extract_strided_slice %18 {offsets = [0, 96], sizes = [2, 32], strides = [1, 1]} : vector<2x128xf32> to vector<2x32xf32>
    %45 = arith.addf %44, %26 : vector<2x32xf32>
    %46 = arith.negf %45 : vector<2x32xf32>
    %47 = math.exp %46 : vector<2x32xf32>
    %cst_36 = arith.constant 1.000000e+00 : f32
    %48 = vector.broadcast %cst_36 : f32 to vector<2x32xf32>
    %49 = arith.addf %48, %47 : vector<2x32xf32>
    %50 = arith.divf %48, %49 : vector<2x32xf32>
    %51 = arith.mulf %40, %17 : vector<2x32xf32>
    %52 = arith.mulf %33, %43 : vector<2x32xf32>
    %53 = arith.addf %51, %52 : vector<2x32xf32>
    %54 = math.tanh %53 : vector<2x32xf32>
    %55 = arith.mulf %50, %54 : vector<2x32xf32>
    %56 = vector.extract_strided_slice %55 {offsets = [0, 0], sizes = [1, 32], strides = [1, 1]} : vector<2x32xf32> to vector<1x32xf32>
    %c0_37 = arith.constant 0 : index
    %c0_38 = arith.constant 0 : index
    %57 = vector.load %arg18[%c0_37, %c0_38] : memref<16x32xf32, #tpu.memory_space<vmem>>, vector<1x32xf32>
    tpu.vector_store %arg18[%c0_37, %c0_38], %56 {strides = array<i32>} : memref<16x32xf32, #tpu.memory_space<vmem>>, vector<1x32xf32>,
    %58 = vector.extract_strided_slice %55 {offsets = [1, 0], sizes = [1, 32], strides = [1, 1]} : vector<2x32xf32> to vector<1x32xf32>
    %c8_39 = arith.constant 8 : index
    %c0_40 = arith.constant 0 : index
    %59 = vector.load %arg18[%c8_39, %c0_40] : memref<16x32xf32, #tpu.memory_space<vmem>>, vector<1x32xf32>
    tpu.vector_store %arg18[%c8_39, %c0_40], %58 {strides = array<i32>} : memref<16x32xf32, #tpu.memory_space<vmem>>, vector<1x32xf32>,
    %c1_41 = arith.constant 1 : index
    %c0_42 = arith.constant 0 : index
    %60 = tpu.strided_load %arg17[%c1_41, %c0_42] {strides = array<i32: 8, 1>} : memref<16x128xf32, #tpu.memory_space<vmem>>, vector<2x128xf32>
    %c0_43 = arith.constant 0 : index
    %c0_44 = arith.constant 0 : index
    %61 = vector.load %arg4[%c0_43, %c0_44] : memref<32x32xf32, #tpu.memory_space<vmem>>, vector<32x32xf32>
    %cst_45 = arith.constant dense<0.000000e+00> : vector<2x32xf32>
    %62 = tpu.matmul %55, %61, %cst_45 {dimension_numbers = #tpu.dot_dimension_numbers<[1], [0], [0], [1], [0, 0, 1, 1], [], []>} : vector<2x32xf32>, vector<32x32xf32>, vector<2x32xf32> -> vector<2x32xf32>
    %c0_46 = arith.constant 0 : index
    %c0_47 = arith.constant 0 : index
    %63 = vector.load %arg5[%c0_46, %c0_47] : memref<32x32xf32, #tpu.memory_space<vmem>>, vector<32x32xf32>
    %cst_48 = arith.constant dense<0.000000e+00> : vector<2x32xf32>
    %64 = tpu.matmul %55, %63, %cst_48 {dimension_numbers = #tpu.dot_dimension_numbers<[1], [0], [0], [1], [0, 0, 1, 1], [], []>} : vector<2x32xf32>, vector<32x32xf32>, vector<2x32xf32> -> vector<2x32xf32>
    %c0_49 = arith.constant 0 : index
    %c0_50 = arith.constant 0 : index
    %65 = vector.load %arg6[%c0_49, %c0_50] : memref<32x32xf32, #tpu.memory_space<vmem>>, vector<32x32xf32>
    %cst_51 = arith.constant dense<0.000000e+00> : vector<2x32xf32>
    %66 = tpu.matmul %55, %65, %cst_51 {dimension_numbers = #tpu.dot_dimension_numbers<[1], [0], [0], [1], [0, 0, 1, 1], [], []>} : vector<2x32xf32>, vector<32x32xf32>, vector<2x32xf32> -> vector<2x32xf32>
    %c0_52 = arith.constant 0 : index
    %c0_53 = arith.constant 0 : index
    %67 = vector.load %arg7[%c0_52, %c0_53] : memref<32x32xf32, #tpu.memory_space<vmem>>, vector<32x32xf32>
    %cst_54 = arith.constant dense<0.000000e+00> : vector<2x32xf32>
    %68 = tpu.matmul %55, %67, %cst_54 {dimension_numbers = #tpu.dot_dimension_numbers<[1], [0], [0], [1], [0, 0, 1, 1], [], []>} : vector<2x32xf32>, vector<32x32xf32>, vector<2x32xf32> -> vector<2x32xf32>
    %69 = vector.extract_strided_slice %60 {offsets = [0, 0], sizes = [2, 32], strides = [1, 1]} : vector<2x128xf32> to vector<2x32xf32>
    %70 = arith.addf %69, %62 : vector<2x32xf32>
    %71 = arith.negf %70 : vector<2x32xf32>
    %72 = math.exp %71 : vector<2x32xf32>
    %cst_55 = arith.constant 1.000000e+00 : f32
    %73 = vector.broadcast %cst_55 : f32 to vector<2x32xf32>
    %74 = arith.addf %73, %72 : vector<2x32xf32>
    %75 = arith.divf %73, %74 : vector<2x32xf32>
    %76 = vector.extract_strided_slice %60 {offsets = [0, 32], sizes = [2, 32], strides = [1, 1]} : vector<2x128xf32> to vector<2x32xf32>
    %77 = arith.addf %76, %64 : vector<2x32xf32>
    %78 = arith.negf %77 : vector<2x32xf32>
    %79 = math.exp %78 : vector<2x32xf32>
    %cst_56 = arith.constant 1.000000e+00 : f32
    %80 = vector.broadcast %cst_56 : f32 to vector<2x32xf32>
    %81 = arith.addf %80, %79 : vector<2x32xf32>
    %82 = arith.divf %80, %81 : vector<2x32xf32>
    %83 = vector.extract_strided_slice %60 {offsets = [0, 64], sizes = [2, 32], strides = [1, 1]} : vector<2x128xf32> to vector<2x32xf32>
    %84 = arith.addf %83, %66 : vector<2x32xf32>
    %85 = math.tanh %84 : vector<2x32xf32>
    %86 = vector.extract_strided_slice %60 {offsets = [0, 96], sizes = [2, 32], strides = [1, 1]} : vector<2x128xf32> to vector<2x32xf32>
    %87 = arith.addf %86, %68 : vector<2x32xf32>
    %88 = arith.negf %87 : vector<2x32xf32>
    %89 = math.exp %88 : vector<2x32xf32>
    %cst_57 = arith.constant 1.000000e+00 : f32
    %90 = vector.broadcast %cst_57 : f32 to vector<2x32xf32>
    %91 = arith.addf %90, %89 : vector<2x32xf32>
    %92 = arith.divf %90, %91 : vector<2x32xf32>
    %93 = arith.mulf %82, %53 : vector<2x32xf32>
    %94 = arith.mulf %75, %85 : vector<2x32xf32>
    %95 = arith.addf %93, %94 : vector<2x32xf32>
    %96 = math.tanh %95 : vector<2x32xf32>
    %97 = arith.mulf %92, %96 : vector<2x32xf32>
    %98 = vector.extract_strided_slice %97 {offsets = [0, 0], sizes = [1, 32], strides = [1, 1]} : vector<2x32xf32> to vector<1x32xf32>
    %c1_58 = arith.constant 1 : index
    %c0_59 = arith.constant 0 : index
    %99 = vector.load %arg18[%c1_58, %c0_59] : memref<16x32xf32, #tpu.memory_space<vmem>>, vector<1x32xf32>
    tpu.vector_store %arg18[%c1_58, %c0_59], %98 {strides = array<i32>} : memref<16x32xf32, #tpu.memory_space<vmem>>, vector<1x32xf32>,
    %100 = vector.extract_strided_slice %97 {offsets = [1, 0], sizes = [1, 32], strides = [1, 1]} : vector<2x32xf32> to vector<1x32xf32>
    %c9 = arith.constant 9 : index
    %c0_60 = arith.constant 0 : index
    %101 = vector.load %arg18[%c9, %c0_60] : memref<16x32xf32, #tpu.memory_space<vmem>>, vector<1x32xf32>
    tpu.vector_store %arg18[%c9, %c0_60], %100 {strides = array<i32>} : memref<16x32xf32, #tpu.memory_space<vmem>>, vector<1x32xf32>,
    %c2 = arith.constant 2 : index
    %c0_61 = arith.constant 0 : index
    %102 = tpu.strided_load %arg17[%c2, %c0_61] {strides = array<i32: 8, 1>} : memref<16x128xf32, #tpu.memory_space<vmem>>, vector<2x128xf32>
    %c0_62 = arith.constant 0 : index
    %c0_63 = arith.constant 0 : index
    %103 = vector.load %arg4[%c0_62, %c0_63] : memref<32x32xf32, #tpu.memory_space<vmem>>, vector<32x32xf32>
    %cst_64 = arith.constant dense<0.000000e+00> : vector<2x32xf32>
    %104 = tpu.matmul %97, %103, %cst_64 {dimension_numbers = #tpu.dot_dimension_numbers<[1], [0], [0], [1], [0, 0, 1, 1], [], []>} : vector<2x32xf32>, vector<32x32xf32>, vector<2x32xf32> -> vector<2x32xf32>
    %c0_65 = arith.constant 0 : index
    %c0_66 = arith.constant 0 : index
    %105 = vector.load %arg5[%c0_65, %c0_66] : memref<32x32xf32, #tpu.memory_space<vmem>>, vector<32x32xf32>
    %cst_67 = arith.constant dense<0.000000e+00> : vector<2x32xf32>
    %106 = tpu.matmul %97, %105, %cst_67 {dimension_numbers = #tpu.dot_dimension_numbers<[1], [0], [0], [1], [0, 0, 1, 1], [], []>} : vector<2x32xf32>, vector<32x32xf32>, vector<2x32xf32> -> vector<2x32xf32>
    %c0_68 = arith.constant 0 : index
    %c0_69 = arith.constant 0 : index
    %107 = vector.load %arg6[%c0_68, %c0_69] : memref<32x32xf32, #tpu.memory_space<vmem>>, vector<32x32xf32>
    %cst_70 = arith.constant dense<0.000000e+00> : vector<2x32xf32>
    %108 = tpu.matmul %97, %107, %cst_70 {dimension_numbers = #tpu.dot_dimension_numbers<[1], [0], [0], [1], [0, 0, 1, 1], [], []>} : vector<2x32xf32>, vector<32x32xf32>, vector<2x32xf32> -> vector<2x32xf32>
    %c0_71 = arith.constant 0 : index
    %c0_72 = arith.constant 0 : index
    %109 = vector.load %arg7[%c0_71, %c0_72] : memref<32x32xf32, #tpu.memory_space<vmem>>, vector<32x32xf32>
    %cst_73 = arith.constant dense<0.000000e+00> : vector<2x32xf32>
    %110 = tpu.matmul %97, %109, %cst_73 {dimension_numbers = #tpu.dot_dimension_numbers<[1], [0], [0], [1], [0, 0, 1, 1], [], []>} : vector<2x32xf32>, vector<32x32xf32>, vector<2x32xf32> -> vector<2x32xf32>
    %111 = vector.extract_strided_slice %102 {offsets = [0, 0], sizes = [2, 32], strides = [1, 1]} : vector<2x128xf32> to vector<2x32xf32>
    %112 = arith.addf %111, %104 : vector<2x32xf32>
    %113 = arith.negf %112 : vector<2x32xf32>
    %114 = math.exp %113 : vector<2x32xf32>
    %cst_74 = arith.constant 1.000000e+00 : f32
    %115 = vector.broadcast %cst_74 : f32 to vector<2x32xf32>
    %116 = arith.addf %115, %114 : vector<2x32xf32>
    %117 = arith.divf %115, %116 : vector<2x32xf32>
    %118 = vector.extract_strided_slice %102 {offsets = [0, 32], sizes = [2, 32], strides = [1, 1]} : vector<2x128xf32> to vector<2x32xf32>
    %119 = arith.addf %118, %106 : vector<2x32xf32>
    %120 = arith.negf %119 : vector<2x32xf32>
    %121 = math.exp %120 : vector<2x32xf32>
    %cst_75 = arith.constant 1.000000e+00 : f32
    %122 = vector.broadcast %cst_75 : f32 to vector<2x32xf32>
    %123 = arith.addf %122, %121 : vector<2x32xf32>
    %124 = arith.divf %122, %123 : vector<2x32xf32>
    %125 = vector.extract_strided_slice %102 {offsets = [0, 64], sizes = [2, 32], strides = [1, 1]} : vector<2x128xf32> to vector<2x32xf32>
    %126 = arith.addf %125, %108 : vector<2x32xf32>
    %127 = math.tanh %126 : vector<2x32xf32>
    %128 = vector.extract_strided_slice %102 {offsets = [0, 96], sizes = [2, 32], strides = [1, 1]} : vector<2x128xf32> to vector<2x32xf32>
    %129 = arith.addf %128, %110 : vector<2x32xf32>
    %130 = arith.negf %129 : vector<2x32xf32>
    %131 = math.exp %130 : vector<2x32xf32>
    %cst_76 = arith.constant 1.000000e+00 : f32
    %132 = vector.broadcast %cst_76 : f32 to vector<2x32xf32>
    %133 = arith.addf %132, %131 : vector<2x32xf32>
    %134 = arith.divf %132, %133 : vector<2x32xf32>
    %135 = arith.mulf %124, %95 : vector<2x32xf32>
    %136 = arith.mulf %117, %127 : vector<2x32xf32>
    %137 = arith.addf %135, %136 : vector<2x32xf32>
    %138 = math.tanh %137 : vector<2x32xf32>
    %139 = arith.mulf %134, %138 : vector<2x32xf32>
    %140 = vector.extract_strided_slice %139 {offsets = [0, 0], sizes = [1, 32], strides = [1, 1]} : vector<2x32xf32> to vector<1x32xf32>
    %c2_77 = arith.constant 2 : index
    %c0_78 = arith.constant 0 : index
    %141 = vector.load %arg18[%c2_77, %c0_78] : memref<16x32xf32, #tpu.memory_space<vmem>>, vector<1x32xf32>
    tpu.vector_store %arg18[%c2_77, %c0_78], %140 {strides = array<i32>} : memref<16x32xf32, #tpu.memory_space<vmem>>, vector<1x32xf32>,
    %142 = vector.extract_strided_slice %139 {offsets = [1, 0], sizes = [1, 32], strides = [1, 1]} : vector<2x32xf32> to vector<1x32xf32>
    %c10 = arith.constant 10 : index
    %c0_79 = arith.constant 0 : index
    %143 = vector.load %arg18[%c10, %c0_79] : memref<16x32xf32, #tpu.memory_space<vmem>>, vector<1x32xf32>
    tpu.vector_store %arg18[%c10, %c0_79], %142 {strides = array<i32>} : memref<16x32xf32, #tpu.memory_space<vmem>>, vector<1x32xf32>,
    %c3 = arith.constant 3 : index
    %c0_80 = arith.constant 0 : index
    %144 = tpu.strided_load %arg17[%c3, %c0_80] {strides = array<i32: 8, 1>} : memref<16x128xf32, #tpu.memory_space<vmem>>, vector<2x128xf32>
    %c0_81 = arith.constant 0 : index
    %c0_82 = arith.constant 0 : index
    %145 = vector.load %arg4[%c0_81, %c0_82] : memref<32x32xf32, #tpu.memory_space<vmem>>, vector<32x32xf32>
    %cst_83 = arith.constant dense<0.000000e+00> : vector<2x32xf32>
    %146 = tpu.matmul %139, %145, %cst_83 {dimension_numbers = #tpu.dot_dimension_numbers<[1], [0], [0], [1], [0, 0, 1, 1], [], []>} : vector<2x32xf32>, vector<32x32xf32>, vector<2x32xf32> -> vector<2x32xf32>
    %c0_84 = arith.constant 0 : index
    %c0_85 = arith.constant 0 : index
    %147 = vector.load %arg5[%c0_84, %c0_85] : memref<32x32xf32, #tpu.memory_space<vmem>>, vector<32x32xf32>
    %cst_86 = arith.constant dense<0.000000e+00> : vector<2x32xf32>
    %148 = tpu.matmul %139, %147, %cst_86 {dimension_numbers = #tpu.dot_dimension_numbers<[1], [0], [0], [1], [0, 0, 1, 1], [], []>} : vector<2x32xf32>, vector<32x32xf32>, vector<2x32xf32> -> vector<2x32xf32>
    %c0_87 = arith.constant 0 : index
    %c0_88 = arith.constant 0 : index
    %149 = vector.load %arg6[%c0_87, %c0_88] : memref<32x32xf32, #tpu.memory_space<vmem>>, vector<32x32xf32>
    %cst_89 = arith.constant dense<0.000000e+00> : vector<2x32xf32>
    %150 = tpu.matmul %139, %149, %cst_89 {dimension_numbers = #tpu.dot_dimension_numbers<[1], [0], [0], [1], [0, 0, 1, 1], [], []>} : vector<2x32xf32>, vector<32x32xf32>, vector<2x32xf32> -> vector<2x32xf32>
    %c0_90 = arith.constant 0 : index
    %c0_91 = arith.constant 0 : index
    %151 = vector.load %arg7[%c0_90, %c0_91] : memref<32x32xf32, #tpu.memory_space<vmem>>, vector<32x32xf32>
    %cst_92 = arith.constant dense<0.000000e+00> : vector<2x32xf32>
    %152 = tpu.matmul %139, %151, %cst_92 {dimension_numbers = #tpu.dot_dimension_numbers<[1], [0], [0], [1], [0, 0, 1, 1], [], []>} : vector<2x32xf32>, vector<32x32xf32>, vector<2x32xf32> -> vector<2x32xf32>
    %153 = vector.extract_strided_slice %144 {offsets = [0, 0], sizes = [2, 32], strides = [1, 1]} : vector<2x128xf32> to vector<2x32xf32>
    %154 = arith.addf %153, %146 : vector<2x32xf32>
    %155 = arith.negf %154 : vector<2x32xf32>
    %156 = math.exp %155 : vector<2x32xf32>
    %cst_93 = arith.constant 1.000000e+00 : f32
    %157 = vector.broadcast %cst_93 : f32 to vector<2x32xf32>
    %158 = arith.addf %157, %156 : vector<2x32xf32>
    %159 = arith.divf %157, %158 : vector<2x32xf32>
    %160 = vector.extract_strided_slice %144 {offsets = [0, 32], sizes = [2, 32], strides = [1, 1]} : vector<2x128xf32> to vector<2x32xf32>
    %161 = arith.addf %160, %148 : vector<2x32xf32>
    %162 = arith.negf %161 : vector<2x32xf32>
    %163 = math.exp %162 : vector<2x32xf32>
    %cst_94 = arith.constant 1.000000e+00 : f32
    %164 = vector.broadcast %cst_94 : f32 to vector<2x32xf32>
    %165 = arith.addf %164, %163 : vector<2x32xf32>
    %166 = arith.divf %164, %165 : vector<2x32xf32>
    %167 = vector.extract_strided_slice %144 {offsets = [0, 64], sizes = [2, 32], strides = [1, 1]} : vector<2x128xf32> to vector<2x32xf32>
    %168 = arith.addf %167, %150 : vector<2x32xf32>
    %169 = math.tanh %168 : vector<2x32xf32>
    %170 = vector.extract_strided_slice %144 {offsets = [0, 96], sizes = [2, 32], strides = [1, 1]} : vector<2x128xf32> to vector<2x32xf32>
    %171 = arith.addf %170, %152 : vector<2x32xf32>
    %172 = arith.negf %171 : vector<2x32xf32>
    %173 = math.exp %172 : vector<2x32xf32>
    %cst_95 = arith.constant 1.000000e+00 : f32
    %174 = vector.broadcast %cst_95 : f32 to vector<2x32xf32>
    %175 = arith.addf %174, %173 : vector<2x32xf32>
    %176 = arith.divf %174, %175 : vector<2x32xf32>
    %177 = arith.mulf %166, %137 : vector<2x32xf32>
    %178 = arith.mulf %159, %169 : vector<2x32xf32>
    %179 = arith.addf %177, %178 : vector<2x32xf32>
    %180 = math.tanh %179 : vector<2x32xf32>
    %181 = arith.mulf %176, %180 : vector<2x32xf32>
    %182 = vector.extract_strided_slice %181 {offsets = [0, 0], sizes = [1, 32], strides = [1, 1]} : vector<2x32xf32> to vector<1x32xf32>
    %c3_96 = arith.constant 3 : index
    %c0_97 = arith.constant 0 : index
    %183 = vector.load %arg18[%c3_96, %c0_97] : memref<16x32xf32, #tpu.memory_space<vmem>>, vector<1x32xf32>
    tpu.vector_store %arg18[%c3_96, %c0_97], %182 {strides = array<i32>} : memref<16x32xf32, #tpu.memory_space<vmem>>, vector<1x32xf32>,
    %184 = vector.extract_strided_slice %181 {offsets = [1, 0], sizes = [1, 32], strides = [1, 1]} : vector<2x32xf32> to vector<1x32xf32>
    %c11 = arith.constant 11 : index
    %c0_98 = arith.constant 0 : index
    %185 = vector.load %arg18[%c11, %c0_98] : memref<16x32xf32, #tpu.memory_space<vmem>>, vector<1x32xf32>
    tpu.vector_store %arg18[%c11, %c0_98], %184 {strides = array<i32>} : memref<16x32xf32, #tpu.memory_space<vmem>>, vector<1x32xf32>,
    %c4 = arith.constant 4 : index
    %c0_99 = arith.constant 0 : index
    %186 = tpu.strided_load %arg17[%c4, %c0_99] {strides = array<i32: 8, 1>} : memref<16x128xf32, #tpu.memory_space<vmem>>, vector<2x128xf32>
    %c0_100 = arith.constant 0 : index
    %c0_101 = arith.constant 0 : index
    %187 = vector.load %arg4[%c0_100, %c0_101] : memref<32x32xf32, #tpu.memory_space<vmem>>, vector<32x32xf32>
    %cst_102 = arith.constant dense<0.000000e+00> : vector<2x32xf32>
    %188 = tpu.matmul %181, %187, %cst_102 {dimension_numbers = #tpu.dot_dimension_numbers<[1], [0], [0], [1], [0, 0, 1, 1], [], []>} : vector<2x32xf32>, vector<32x32xf32>, vector<2x32xf32> -> vector<2x32xf32>
    %c0_103 = arith.constant 0 : index
    %c0_104 = arith.constant 0 : index
    %189 = vector.load %arg5[%c0_103, %c0_104] : memref<32x32xf32, #tpu.memory_space<vmem>>, vector<32x32xf32>
    %cst_105 = arith.constant dense<0.000000e+00> : vector<2x32xf32>
    %190 = tpu.matmul %181, %189, %cst_105 {dimension_numbers = #tpu.dot_dimension_numbers<[1], [0], [0], [1], [0, 0, 1, 1], [], []>} : vector<2x32xf32>, vector<32x32xf32>, vector<2x32xf32> -> vector<2x32xf32>
    %c0_106 = arith.constant 0 : index
    %c0_107 = arith.constant 0 : index
    %191 = vector.load %arg6[%c0_106, %c0_107] : memref<32x32xf32, #tpu.memory_space<vmem>>, vector<32x32xf32>
    %cst_108 = arith.constant dense<0.000000e+00> : vector<2x32xf32>
    %192 = tpu.matmul %181, %191, %cst_108 {dimension_numbers = #tpu.dot_dimension_numbers<[1], [0], [0], [1], [0, 0, 1, 1], [], []>} : vector<2x32xf32>, vector<32x32xf32>, vector<2x32xf32> -> vector<2x32xf32>
    %c0_109 = arith.constant 0 : index
    %c0_110 = arith.constant 0 : index
    %193 = vector.load %arg7[%c0_109, %c0_110] : memref<32x32xf32, #tpu.memory_space<vmem>>, vector<32x32xf32>
    %cst_111 = arith.constant dense<0.000000e+00> : vector<2x32xf32>
    %194 = tpu.matmul %181, %193, %cst_111 {dimension_numbers = #tpu.dot_dimension_numbers<[1], [0], [0], [1], [0, 0, 1, 1], [], []>} : vector<2x32xf32>, vector<32x32xf32>, vector<2x32xf32> -> vector<2x32xf32>
    %195 = vector.extract_strided_slice %186 {offsets = [0, 0], sizes = [2, 32], strides = [1, 1]} : vector<2x128xf32> to vector<2x32xf32>
    %196 = arith.addf %195, %188 : vector<2x32xf32>
    %197 = arith.negf %196 : vector<2x32xf32>
    %198 = math.exp %197 : vector<2x32xf32>
    %cst_112 = arith.constant 1.000000e+00 : f32
    %199 = vector.broadcast %cst_112 : f32 to vector<2x32xf32>
    %200 = arith.addf %199, %198 : vector<2x32xf32>
    %201 = arith.divf %199, %200 : vector<2x32xf32>
    %202 = vector.extract_strided_slice %186 {offsets = [0, 32], sizes = [2, 32], strides = [1, 1]} : vector<2x128xf32> to vector<2x32xf32>
    %203 = arith.addf %202, %190 : vector<2x32xf32>
    %204 = arith.negf %203 : vector<2x32xf32>
    %205 = math.exp %204 : vector<2x32xf32>
    %cst_113 = arith.constant 1.000000e+00 : f32
    %206 = vector.broadcast %cst_113 : f32 to vector<2x32xf32>
    %207 = arith.addf %206, %205 : vector<2x32xf32>
    %208 = arith.divf %206, %207 : vector<2x32xf32>
    %209 = vector.extract_strided_slice %186 {offsets = [0, 64], sizes = [2, 32], strides = [1, 1]} : vector<2x128xf32> to vector<2x32xf32>
    %210 = arith.addf %209, %192 : vector<2x32xf32>
    %211 = math.tanh %210 : vector<2x32xf32>
    %212 = vector.extract_strided_slice %186 {offsets = [0, 96], sizes = [2, 32], strides = [1, 1]} : vector<2x128xf32> to vector<2x32xf32>
    %213 = arith.addf %212, %194 : vector<2x32xf32>
    %214 = arith.negf %213 : vector<2x32xf32>
    %215 = math.exp %214 : vector<2x32xf32>
    %cst_114 = arith.constant 1.000000e+00 : f32
    %216 = vector.broadcast %cst_114 : f32 to vector<2x32xf32>
    %217 = arith.addf %216, %215 : vector<2x32xf32>
    %218 = arith.divf %216, %217 : vector<2x32xf32>
    %219 = arith.mulf %208, %179 : vector<2x32xf32>
    %220 = arith.mulf %201, %211 : vector<2x32xf32>
    %221 = arith.addf %219, %220 : vector<2x32xf32>
    %222 = math.tanh %221 : vector<2x32xf32>
    %223 = arith.mulf %218, %222 : vector<2x32xf32>
    %224 = vector.extract_strided_slice %223 {offsets = [0, 0], sizes = [1, 32], strides = [1, 1]} : vector<2x32xf32> to vector<1x32xf32>
    %c4_115 = arith.constant 4 : index
    %c0_116 = arith.constant 0 : index
    %225 = vector.load %arg18[%c4_115, %c0_116] : memref<16x32xf32, #tpu.memory_space<vmem>>, vector<1x32xf32>
    tpu.vector_store %arg18[%c4_115, %c0_116], %224 {strides = array<i32>} : memref<16x32xf32, #tpu.memory_space<vmem>>, vector<1x32xf32>,
    %226 = vector.extract_strided_slice %223 {offsets = [1, 0], sizes = [1, 32], strides = [1, 1]} : vector<2x32xf32> to vector<1x32xf32>
    %c12 = arith.constant 12 : index
    %c0_117 = arith.constant 0 : index
    %227 = vector.load %arg18[%c12, %c0_117] : memref<16x32xf32, #tpu.memory_space<vmem>>, vector<1x32xf32>
    tpu.vector_store %arg18[%c12, %c0_117], %226 {strides = array<i32>} : memref<16x32xf32, #tpu.memory_space<vmem>>, vector<1x32xf32>,
    %c5 = arith.constant 5 : index
    %c0_118 = arith.constant 0 : index
    %228 = tpu.strided_load %arg17[%c5, %c0_118] {strides = array<i32: 8, 1>} : memref<16x128xf32, #tpu.memory_space<vmem>>, vector<2x128xf32>
    %c0_119 = arith.constant 0 : index
    %c0_120 = arith.constant 0 : index
    %229 = vector.load %arg4[%c0_119, %c0_120] : memref<32x32xf32, #tpu.memory_space<vmem>>, vector<32x32xf32>
    %cst_121 = arith.constant dense<0.000000e+00> : vector<2x32xf32>
    %230 = tpu.matmul %223, %229, %cst_121 {dimension_numbers = #tpu.dot_dimension_numbers<[1], [0], [0], [1], [0, 0, 1, 1], [], []>} : vector<2x32xf32>, vector<32x32xf32>, vector<2x32xf32> -> vector<2x32xf32>
    %c0_122 = arith.constant 0 : index
    %c0_123 = arith.constant 0 : index
    %231 = vector.load %arg5[%c0_122, %c0_123] : memref<32x32xf32, #tpu.memory_space<vmem>>, vector<32x32xf32>
    %cst_124 = arith.constant dense<0.000000e+00> : vector<2x32xf32>
    %232 = tpu.matmul %223, %231, %cst_124 {dimension_numbers = #tpu.dot_dimension_numbers<[1], [0], [0], [1], [0, 0, 1, 1], [], []>} : vector<2x32xf32>, vector<32x32xf32>, vector<2x32xf32> -> vector<2x32xf32>
    %c0_125 = arith.constant 0 : index
    %c0_126 = arith.constant 0 : index
    %233 = vector.load %arg6[%c0_125, %c0_126] : memref<32x32xf32, #tpu.memory_space<vmem>>, vector<32x32xf32>
    %cst_127 = arith.constant dense<0.000000e+00> : vector<2x32xf32>
    %234 = tpu.matmul %223, %233, %cst_127 {dimension_numbers = #tpu.dot_dimension_numbers<[1], [0], [0], [1], [0, 0, 1, 1], [], []>} : vector<2x32xf32>, vector<32x32xf32>, vector<2x32xf32> -> vector<2x32xf32>
    %c0_128 = arith.constant 0 : index
    %c0_129 = arith.constant 0 : index
    %235 = vector.load %arg7[%c0_128, %c0_129] : memref<32x32xf32, #tpu.memory_space<vmem>>, vector<32x32xf32>
    %cst_130 = arith.constant dense<0.000000e+00> : vector<2x32xf32>
    %236 = tpu.matmul %223, %235, %cst_130 {dimension_numbers = #tpu.dot_dimension_numbers<[1], [0], [0], [1], [0, 0, 1, 1], [], []>} : vector<2x32xf32>, vector<32x32xf32>, vector<2x32xf32> -> vector<2x32xf32>
    %237 = vector.extract_strided_slice %228 {offsets = [0, 0], sizes = [2, 32], strides = [1, 1]} : vector<2x128xf32> to vector<2x32xf32>
    %238 = arith.addf %237, %230 : vector<2x32xf32>
    %239 = arith.negf %238 : vector<2x32xf32>
    %240 = math.exp %239 : vector<2x32xf32>
    %cst_131 = arith.constant 1.000000e+00 : f32
    %241 = vector.broadcast %cst_131 : f32 to vector<2x32xf32>
    %242 = arith.addf %241, %240 : vector<2x32xf32>
    %243 = arith.divf %241, %242 : vector<2x32xf32>
    %244 = vector.extract_strided_slice %228 {offsets = [0, 32], sizes = [2, 32], strides = [1, 1]} : vector<2x128xf32> to vector<2x32xf32>
    %245 = arith.addf %244, %232 : vector<2x32xf32>
    %246 = arith.negf %245 : vector<2x32xf32>
    %247 = math.exp %246 : vector<2x32xf32>
    %cst_132 = arith.constant 1.000000e+00 : f32
    %248 = vector.broadcast %cst_132 : f32 to vector<2x32xf32>
    %249 = arith.addf %248, %247 : vector<2x32xf32>
    %250 = arith.divf %248, %249 : vector<2x32xf32>
    %251 = vector.extract_strided_slice %228 {offsets = [0, 64], sizes = [2, 32], strides = [1, 1]} : vector<2x128xf32> to vector<2x32xf32>
    %252 = arith.addf %251, %234 : vector<2x32xf32>
    %253 = math.tanh %252 : vector<2x32xf32>
    %254 = vector.extract_strided_slice %228 {offsets = [0, 96], sizes = [2, 32], strides = [1, 1]} : vector<2x128xf32> to vector<2x32xf32>
    %255 = arith.addf %254, %236 : vector<2x32xf32>
    %256 = arith.negf %255 : vector<2x32xf32>
    %257 = math.exp %256 : vector<2x32xf32>
    %cst_133 = arith.constant 1.000000e+00 : f32
    %258 = vector.broadcast %cst_133 : f32 to vector<2x32xf32>
    %259 = arith.addf %258, %257 : vector<2x32xf32>
    %260 = arith.divf %258, %259 : vector<2x32xf32>
    %261 = arith.mulf %250, %221 : vector<2x32xf32>
    %262 = arith.mulf %243, %253 : vector<2x32xf32>
    %263 = arith.addf %261, %262 : vector<2x32xf32>
    %264 = math.tanh %263 : vector<2x32xf32>
    %265 = arith.mulf %260, %264 : vector<2x32xf32>
    %266 = vector.extract_strided_slice %265 {offsets = [0, 0], sizes = [1, 32], strides = [1, 1]} : vector<2x32xf32> to vector<1x32xf32>
    %c5_134 = arith.constant 5 : index
    %c0_135 = arith.constant 0 : index
    %267 = vector.load %arg18[%c5_134, %c0_135] : memref<16x32xf32, #tpu.memory_space<vmem>>, vector<1x32xf32>
    tpu.vector_store %arg18[%c5_134, %c0_135], %266 {strides = array<i32>} : memref<16x32xf32, #tpu.memory_space<vmem>>, vector<1x32xf32>,
    %268 = vector.extract_strided_slice %265 {offsets = [1, 0], sizes = [1, 32], strides = [1, 1]} : vector<2x32xf32> to vector<1x32xf32>
    %c13 = arith.constant 13 : index
    %c0_136 = arith.constant 0 : index
    %269 = vector.load %arg18[%c13, %c0_136] : memref<16x32xf32, #tpu.memory_space<vmem>>, vector<1x32xf32>
    tpu.vector_store %arg18[%c13, %c0_136], %268 {strides = array<i32>} : memref<16x32xf32, #tpu.memory_space<vmem>>, vector<1x32xf32>,
    %c6 = arith.constant 6 : index
    %c0_137 = arith.constant 0 : index
    %270 = tpu.strided_load %arg17[%c6, %c0_137] {strides = array<i32: 8, 1>} : memref<16x128xf32, #tpu.memory_space<vmem>>, vector<2x128xf32>
    %c0_138 = arith.constant 0 : index
    %c0_139 = arith.constant 0 : index
    %271 = vector.load %arg4[%c0_138, %c0_139] : memref<32x32xf32, #tpu.memory_space<vmem>>, vector<32x32xf32>
    %cst_140 = arith.constant dense<0.000000e+00> : vector<2x32xf32>
    %272 = tpu.matmul %265, %271, %cst_140 {dimension_numbers = #tpu.dot_dimension_numbers<[1], [0], [0], [1], [0, 0, 1, 1], [], []>} : vector<2x32xf32>, vector<32x32xf32>, vector<2x32xf32> -> vector<2x32xf32>
    %c0_141 = arith.constant 0 : index
    %c0_142 = arith.constant 0 : index
    %273 = vector.load %arg5[%c0_141, %c0_142] : memref<32x32xf32, #tpu.memory_space<vmem>>, vector<32x32xf32>
    %cst_143 = arith.constant dense<0.000000e+00> : vector<2x32xf32>
    %274 = tpu.matmul %265, %273, %cst_143 {dimension_numbers = #tpu.dot_dimension_numbers<[1], [0], [0], [1], [0, 0, 1, 1], [], []>} : vector<2x32xf32>, vector<32x32xf32>, vector<2x32xf32> -> vector<2x32xf32>
    %c0_144 = arith.constant 0 : index
    %c0_145 = arith.constant 0 : index
    %275 = vector.load %arg6[%c0_144, %c0_145] : memref<32x32xf32, #tpu.memory_space<vmem>>, vector<32x32xf32>
    %cst_146 = arith.constant dense<0.000000e+00> : vector<2x32xf32>
    %276 = tpu.matmul %265, %275, %cst_146 {dimension_numbers = #tpu.dot_dimension_numbers<[1], [0], [0], [1], [0, 0, 1, 1], [], []>} : vector<2x32xf32>, vector<32x32xf32>, vector<2x32xf32> -> vector<2x32xf32>
    %c0_147 = arith.constant 0 : index
    %c0_148 = arith.constant 0 : index
    %277 = vector.load %arg7[%c0_147, %c0_148] : memref<32x32xf32, #tpu.memory_space<vmem>>, vector<32x32xf32>
    %cst_149 = arith.constant dense<0.000000e+00> : vector<2x32xf32>
    %278 = tpu.matmul %265, %277, %cst_149 {dimension_numbers = #tpu.dot_dimension_numbers<[1], [0], [0], [1], [0, 0, 1, 1], [], []>} : vector<2x32xf32>, vector<32x32xf32>, vector<2x32xf32> -> vector<2x32xf32>
    %279 = vector.extract_strided_slice %270 {offsets = [0, 0], sizes = [2, 32], strides = [1, 1]} : vector<2x128xf32> to vector<2x32xf32>
    %280 = arith.addf %279, %272 : vector<2x32xf32>
    %281 = arith.negf %280 : vector<2x32xf32>
    %282 = math.exp %281 : vector<2x32xf32>
    %cst_150 = arith.constant 1.000000e+00 : f32
    %283 = vector.broadcast %cst_150 : f32 to vector<2x32xf32>
    %284 = arith.addf %283, %282 : vector<2x32xf32>
    %285 = arith.divf %283, %284 : vector<2x32xf32>
    %286 = vector.extract_strided_slice %270 {offsets = [0, 32], sizes = [2, 32], strides = [1, 1]} : vector<2x128xf32> to vector<2x32xf32>
    %287 = arith.addf %286, %274 : vector<2x32xf32>
    %288 = arith.negf %287 : vector<2x32xf32>
    %289 = math.exp %288 : vector<2x32xf32>
    %cst_151 = arith.constant 1.000000e+00 : f32
    %290 = vector.broadcast %cst_151 : f32 to vector<2x32xf32>
    %291 = arith.addf %290, %289 : vector<2x32xf32>
    %292 = arith.divf %290, %291 : vector<2x32xf32>
    %293 = vector.extract_strided_slice %270 {offsets = [0, 64], sizes = [2, 32], strides = [1, 1]} : vector<2x128xf32> to vector<2x32xf32>
    %294 = arith.addf %293, %276 : vector<2x32xf32>
    %295 = math.tanh %294 : vector<2x32xf32>
    %296 = vector.extract_strided_slice %270 {offsets = [0, 96], sizes = [2, 32], strides = [1, 1]} : vector<2x128xf32> to vector<2x32xf32>
    %297 = arith.addf %296, %278 : vector<2x32xf32>
    %298 = arith.negf %297 : vector<2x32xf32>
    %299 = math.exp %298 : vector<2x32xf32>
    %cst_152 = arith.constant 1.000000e+00 : f32
    %300 = vector.broadcast %cst_152 : f32 to vector<2x32xf32>
    %301 = arith.addf %300, %299 : vector<2x32xf32>
    %302 = arith.divf %300, %301 : vector<2x32xf32>
    %303 = arith.mulf %292, %263 : vector<2x32xf32>
    %304 = arith.mulf %285, %295 : vector<2x32xf32>
    %305 = arith.addf %303, %304 : vector<2x32xf32>
    %306 = math.tanh %305 : vector<2x32xf32>
    %307 = arith.mulf %302, %306 : vector<2x32xf32>
    %308 = vector.extract_strided_slice %307 {offsets = [0, 0], sizes = [1, 32], strides = [1, 1]} : vector<2x32xf32> to vector<1x32xf32>
    %c6_153 = arith.constant 6 : index
    %c0_154 = arith.constant 0 : index
    %309 = vector.load %arg18[%c6_153, %c0_154] : memref<16x32xf32, #tpu.memory_space<vmem>>, vector<1x32xf32>
    tpu.vector_store %arg18[%c6_153, %c0_154], %308 {strides = array<i32>} : memref<16x32xf32, #tpu.memory_space<vmem>>, vector<1x32xf32>,
    %310 = vector.extract_strided_slice %307 {offsets = [1, 0], sizes = [1, 32], strides = [1, 1]} : vector<2x32xf32> to vector<1x32xf32>
    %c14 = arith.constant 14 : index
    %c0_155 = arith.constant 0 : index
    %311 = vector.load %arg18[%c14, %c0_155] : memref<16x32xf32, #tpu.memory_space<vmem>>, vector<1x32xf32>
    tpu.vector_store %arg18[%c14, %c0_155], %310 {strides = array<i32>} : memref<16x32xf32, #tpu.memory_space<vmem>>, vector<1x32xf32>,
    %c7 = arith.constant 7 : index
    %c0_156 = arith.constant 0 : index
    %312 = tpu.strided_load %arg17[%c7, %c0_156] {strides = array<i32: 8, 1>} : memref<16x128xf32, #tpu.memory_space<vmem>>, vector<2x128xf32>
    %c0_157 = arith.constant 0 : index
    %c0_158 = arith.constant 0 : index
    %313 = vector.load %arg4[%c0_157, %c0_158] : memref<32x32xf32, #tpu.memory_space<vmem>>, vector<32x32xf32>
    %cst_159 = arith.constant dense<0.000000e+00> : vector<2x32xf32>
    %314 = tpu.matmul %307, %313, %cst_159 {dimension_numbers = #tpu.dot_dimension_numbers<[1], [0], [0], [1], [0, 0, 1, 1], [], []>} : vector<2x32xf32>, vector<32x32xf32>, vector<2x32xf32> -> vector<2x32xf32>
    %c0_160 = arith.constant 0 : index
    %c0_161 = arith.constant 0 : index
    %315 = vector.load %arg5[%c0_160, %c0_161] : memref<32x32xf32, #tpu.memory_space<vmem>>, vector<32x32xf32>
    %cst_162 = arith.constant dense<0.000000e+00> : vector<2x32xf32>
    %316 = tpu.matmul %307, %315, %cst_162 {dimension_numbers = #tpu.dot_dimension_numbers<[1], [0], [0], [1], [0, 0, 1, 1], [], []>} : vector<2x32xf32>, vector<32x32xf32>, vector<2x32xf32> -> vector<2x32xf32>
    %c0_163 = arith.constant 0 : index
    %c0_164 = arith.constant 0 : index
    %317 = vector.load %arg6[%c0_163, %c0_164] : memref<32x32xf32, #tpu.memory_space<vmem>>, vector<32x32xf32>
    %cst_165 = arith.constant dense<0.000000e+00> : vector<2x32xf32>
    %318 = tpu.matmul %307, %317, %cst_165 {dimension_numbers = #tpu.dot_dimension_numbers<[1], [0], [0], [1], [0, 0, 1, 1], [], []>} : vector<2x32xf32>, vector<32x32xf32>, vector<2x32xf32> -> vector<2x32xf32>
    %c0_166 = arith.constant 0 : index
    %c0_167 = arith.constant 0 : index
    %319 = vector.load %arg7[%c0_166, %c0_167] : memref<32x32xf32, #tpu.memory_space<vmem>>, vector<32x32xf32>
    %cst_168 = arith.constant dense<0.000000e+00> : vector<2x32xf32>
    %320 = tpu.matmul %307, %319, %cst_168 {dimension_numbers = #tpu.dot_dimension_numbers<[1], [0], [0], [1], [0, 0, 1, 1], [], []>} : vector<2x32xf32>, vector<32x32xf32>, vector<2x32xf32> -> vector<2x32xf32>
    %321 = vector.extract_strided_slice %312 {offsets = [0, 0], sizes = [2, 32], strides = [1, 1]} : vector<2x128xf32> to vector<2x32xf32>
    %322 = arith.addf %321, %314 : vector<2x32xf32>
    %323 = arith.negf %322 : vector<2x32xf32>
    %324 = math.exp %323 : vector<2x32xf32>
    %cst_169 = arith.constant 1.000000e+00 : f32
    %325 = vector.broadcast %cst_169 : f32 to vector<2x32xf32>
    %326 = arith.addf %325, %324 : vector<2x32xf32>
    %327 = arith.divf %325, %326 : vector<2x32xf32>
    %328 = vector.extract_strided_slice %312 {offsets = [0, 32], sizes = [2, 32], strides = [1, 1]} : vector<2x128xf32> to vector<2x32xf32>
    %329 = arith.addf %328, %316 : vector<2x32xf32>
    %330 = arith.negf %329 : vector<2x32xf32>
    %331 = math.exp %330 : vector<2x32xf32>
    %cst_170 = arith.constant 1.000000e+00 : f32
    %332 = vector.broadcast %cst_170 : f32 to vector<2x32xf32>
    %333 = arith.addf %332, %331 : vector<2x32xf32>
    %334 = arith.divf %332, %333 : vector<2x32xf32>
    %335 = vector.extract_strided_slice %312 {offsets = [0, 64], sizes = [2, 32], strides = [1, 1]} : vector<2x128xf32> to vector<2x32xf32>
    %336 = arith.addf %335, %318 : vector<2x32xf32>
    %337 = math.tanh %336 : vector<2x32xf32>
    %338 = vector.extract_strided_slice %312 {offsets = [0, 96], sizes = [2, 32], strides = [1, 1]} : vector<2x128xf32> to vector<2x32xf32>
    %339 = arith.addf %338, %320 : vector<2x32xf32>
    %340 = arith.negf %339 : vector<2x32xf32>
    %341 = math.exp %340 : vector<2x32xf32>
    %cst_171 = arith.constant 1.000000e+00 : f32
    %342 = vector.broadcast %cst_171 : f32 to vector<2x32xf32>
    %343 = arith.addf %342, %341 : vector<2x32xf32>
    %344 = arith.divf %342, %343 : vector<2x32xf32>
    %345 = arith.mulf %334, %305 : vector<2x32xf32>
    %346 = arith.mulf %327, %337 : vector<2x32xf32>
    %347 = arith.addf %345, %346 : vector<2x32xf32>
    %348 = math.tanh %347 : vector<2x32xf32>
    %349 = arith.mulf %344, %348 : vector<2x32xf32>
    %350 = vector.extract_strided_slice %349 {offsets = [0, 0], sizes = [1, 32], strides = [1, 1]} : vector<2x32xf32> to vector<1x32xf32>
    %c7_172 = arith.constant 7 : index
    %c0_173 = arith.constant 0 : index
    %351 = vector.load %arg18[%c7_172, %c0_173] : memref<16x32xf32, #tpu.memory_space<vmem>>, vector<1x32xf32>
    tpu.vector_store %arg18[%c7_172, %c0_173], %350 {strides = array<i32>} : memref<16x32xf32, #tpu.memory_space<vmem>>, vector<1x32xf32>,
    %352 = vector.extract_strided_slice %349 {offsets = [1, 0], sizes = [1, 32], strides = [1, 1]} : vector<2x32xf32> to vector<1x32xf32>
    %c15 = arith.constant 15 : index
    %c0_174 = arith.constant 0 : index
    %353 = vector.load %arg18[%c15, %c0_174] : memref<16x32xf32, #tpu.memory_space<vmem>>, vector<1x32xf32>
    tpu.vector_store %arg18[%c15, %c0_174], %352 {strides = array<i32>} : memref<16x32xf32, #tpu.memory_space<vmem>>, vector<1x32xf32>,
    %c0_175 = arith.constant 0 : index
    %c0_176 = arith.constant 0 : index
    %354 = vector.load %arg18[%c0_175, %c0_176] : memref<16x32xf32, #tpu.memory_space<vmem>>, vector<16x32xf32>
    %c0_177 = arith.constant 0 : index
    %c0_178 = arith.constant 0 : index
    %355 = vector.load %arg9[%c0_177, %c0_178] : memref<32x32xf32, #tpu.memory_space<vmem>>, vector<32x32xf32>
    %cst_179 = arith.constant dense<0.000000e+00> : vector<16x32xf32>
    %356 = tpu.matmul %354, %355, %cst_179 {dimension_numbers = #tpu.dot_dimension_numbers<[1], [0], [0], [1], [0, 0, 1, 1], [], []>} : vector<16x32xf32>, vector<32x32xf32>, vector<16x32xf32> -> vector<16x32xf32>
    %c0_180 = arith.constant 0 : index
    %c0_181 = arith.constant 0 : index
    %357 = vector.load %arg10[%c0_180, %c0_181] : memref<1x32xf32, #tpu.memory_space<vmem>>, vector<1x32xf32>
    %358 = vector.broadcast %357 : vector<1x32xf32> to vector<16x32xf32>
    %359 = arith.addf %356, %358 : vector<16x32xf32>
    %c0_182 = arith.constant 0 : index
    %c0_183 = arith.constant 0 : index
    %360 = memref.load %arg11[%c0_182, %c0_183] : memref<1x1xf32, #tpu.memory_space<smem>>
    %cst_184 = arith.constant 0.000000e+00 : f32
    %361 = vector.broadcast %cst_184 : f32 to vector<16x32xf32>
    %362 = arith.cmpf oge, %359, %361 : vector<16x32xf32>
    %363 = vector.broadcast %360 : f32 to vector<16x32xf32>
    %364 = arith.mulf %363, %359 : vector<16x32xf32>
    %365 = arith.select %362, %359, %364 : vector<16x32xi1>, vector<16x32xf32>
    %c0_185 = arith.constant 0 : index
    %c0_186 = arith.constant 0 : index
    %366 = vector.load %arg12[%c0_185, %c0_186] : memref<32x16xf32, #tpu.memory_space<vmem>>, vector<32x16xf32>
    %cst_187 = arith.constant dense<0.000000e+00> : vector<16x16xf32>
    %367 = tpu.matmul %365, %366, %cst_187 {dimension_numbers = #tpu.dot_dimension_numbers<[1], [0], [0], [1], [0, 0, 1, 1], [], []>} : vector<16x32xf32>, vector<32x16xf32>, vector<16x16xf32> -> vector<16x16xf32>
    %c0_188 = arith.constant 0 : index
    %c0_189 = arith.constant 0 : index
    %368 = vector.load %arg13[%c0_188, %c0_189] : memref<1x16xf32, #tpu.memory_space<vmem>>, vector<1x16xf32>
    %369 = vector.broadcast %368 : vector<1x16xf32> to vector<16x16xf32>
    %370 = arith.addf %367, %369 : vector<16x16xf32>
    %cst_190 = arith.constant 2.000000e+01 : f32
    %371 = vector.broadcast %cst_190 : f32 to vector<16x16xf32>
    %372 = arith.cmpf ogt, %370, %371 : vector<16x16xf32>
    %cst_191 = arith.constant 2.000000e+01 : f32
    %373 = vector.broadcast %cst_191 : f32 to vector<16x16xf32>
    %374 = arith.minimumf %370, %373 : vector<16x16xf32>
    %375 = math.exp %374 : vector<16x16xf32>
    %376 = math.log1p %375 : vector<16x16xf32>
    %377 = arith.select %372, %370, %376 : vector<16x16xi1>, vector<16x16xf32>
    %c0_192 = arith.constant 0 : index
    %c0_193 = arith.constant 0 : index
    %378 = vector.load %arg14[%c0_192, %c0_193] : memref<16x1xf32, #tpu.memory_space<vmem>>, vector<16x1xf32>
    %cst_194 = arith.constant dense<0.000000e+00> : vector<16x1xf32>
    %379 = tpu.matmul %377, %378, %cst_194 {dimension_numbers = #tpu.dot_dimension_numbers<[1], [0], [0], [1], [0, 0, 1, 1], [], []>} : vector<16x16xf32>, vector<16x1xf32>, vector<16x1xf32> -> vector<16x1xf32>
    %c0_195 = arith.constant 0 : index
    %c0_196 = arith.constant 0 : index
    %380 = memref.load %arg15[%c0_195, %c0_196] : memref<1x1xf32, #tpu.memory_space<smem>>
    %381 = vector.broadcast %380 : f32 to vector<16x1xf32>
    %382 = arith.addf %379, %381 : vector<16x1xf32>
    %383 = math.absf %382 : vector<16x1xf32>
    %384 = vector.extract_strided_slice %383 {offsets = [0, 0], sizes = [8, 1], strides = [1, 1]} : vector<16x1xf32> to vector<8x1xf32>
    %c0_197 = arith.constant 0 : index
    %c0_198 = arith.constant 0 : index
    %c0_199 = arith.constant 0 : index
    %385 = vector.load %arg16[%c0_197, %c0_198, %c0_199] : memref<2x8x1xf32, #tpu.memory_space<vmem>>, vector<1x8x1xf32>
    %386 = vector.shape_cast %385 : vector<1x8x1xf32> to vector<8x1xf32>
    %387 = vector.shape_cast %384 : vector<8x1xf32> to vector<1x8x1xf32>
    tpu.vector_store %arg16[%c0_197, %c0_198, %c0_199], %387 {strides = array<i32>} : memref<2x8x1xf32, #tpu.memory_space<vmem>>, vector<1x8x1xf32>,
    %388 = vector.extract_strided_slice %383 {offsets = [8, 0], sizes = [8, 1], strides = [1, 1]} : vector<16x1xf32> to vector<8x1xf32>
    %c1_200 = arith.constant 1 : index
    %c0_201 = arith.constant 0 : index
    %c0_202 = arith.constant 0 : index
    %389 = vector.load %arg16[%c1_200, %c0_201, %c0_202] : memref<2x8x1xf32, #tpu.memory_space<vmem>>, vector<1x8x1xf32>
    %390 = vector.shape_cast %389 : vector<1x8x1xf32> to vector<8x1xf32>
    %391 = vector.shape_cast %388 : vector<8x1xf32> to vector<1x8x1xf32>
    tpu.vector_store %arg16[%c1_200, %c0_201, %c0_202], %391 {strides = array<i32>} : memref<2x8x1xf32, #tpu.memory_space<vmem>>, vector<1x8x1xf32>,
    return
  }
}

</mosaic_0001>

<llo_original>
// kernel: lstm_nn_forward.1
$region0: #{lstm_nn_forward.1}
  #allocation0 [shape = 'u32[]', space=smem, size = 0x4, offset = 0x4, fixed_abs, tag = 'smem constant byte address 0x4 - core index']
  #allocation1 [shape = 'u32[144,128]{1,0:T(1,128)}', space=vmem, size = 0x12000, scoped, tag = 'internal scratch']
  #allocation2 [shape = 'f32[16,128]{1,0:T(8,128)}', space=vmem, size = 0x2000, scoped, tag = 'scratch operand']
  #allocation3 [shape = 'f32[16,32]{1,0:T(8,128)}', space=vmem, size = 0x2000, scoped, tag = 'scratch operand']
  #allocation4 [shape = 'f32[1,1]{1,0:T(1,128)S(6)}', space=smem, size = 0x200, scoped, tag = 'scoped memory for lstm_nn_forward.1']
  #allocation5 [shape = 'f32[1,1]{1,0:T(1,128)S(6)}', space=smem, size = 0x200, scoped, tag = 'scoped memory for lstm_nn_forward.1']
  %s0 = inlined_call_operand.vmem [shape: f32[2,8,6], index: 0, kind: input, shape index: {}]
  %s1 = inlined_call_operand.vmem [shape: f32[2,32], index: 1, kind: input, shape index: {}]
  %s2 = inlined_call_operand.vmem [shape: f32[2,32], index: 2, kind: input, shape index: {}]
  %s3 = inlined_call_operand.hbm [shape: f32[6,128], index: 3, kind: input, shape index: {}]
  %s4 = inlined_call_operand.vmem [shape: f32[32,32], index: 4, kind: input, shape index: {}]
  %s5 = inlined_call_operand.vmem [shape: f32[32,32], index: 5, kind: input, shape index: {}]
  %s6 = inlined_call_operand.vmem [shape: f32[32,32], index: 6, kind: input, shape index: {}]
  %s7 = inlined_call_operand.vmem [shape: f32[32,32], index: 7, kind: input, shape index: {}]
  %s8 = inlined_call_operand.hbm [shape: f32[1,128], index: 8, kind: input, shape index: {}]
  %s9 = inlined_call_operand.hbm [shape: f32[32,32], index: 9, kind: input, shape index: {}]
  %s10 = inlined_call_operand.hbm [shape: f32[1,32], index: 10, kind: input, shape index: {}]
  %s11 = inlined_call_operand.<no memory space> [shape: f32[1,1], index: 11, kind: input, shape index: {}]
  %s12 = inlined_call_operand.vmem [shape: f32[32,16], index: 12, kind: input, shape index: {}]
  %s13 = inlined_call_operand.hbm [shape: f32[1,16], index: 13, kind: input, shape index: {}]
  %s14 = inlined_call_operand.vmem [shape: f32[16,1], index: 14, kind: input, shape index: {}]
  %s15 = inlined_call_operand.<no memory space> [shape: f32[1,1], index: 15, kind: input, shape index: {}]
  %s16 = inlined_call_operand.vmem [shape: f32[2,8,1], index: 16, kind: output, shape index: {}]
  %s17 = sld [smem:[#allocation0]]
  $region94: #{lstm_nn_forward.1} parent=0
    _
  %s19 = ssub.s32 1, %s17
  %s20 = scalar_select 0, %s19, %s17
  %21 = sst [smem:[#allocation4]] %s11
  %22 = sst [smem:[#allocation5]] %s15
  $region1: #{lstm_nn_forward.1} parent=0
    #allocation6 [shape = 'u8[4096]{0}', space=vmem, size = 0x1000, scoped, tag = 'input window, operand 3, single buffered']
    #allocation7 [shape = 's32[1]{0}', space=sflag, size = 0x4, scoped, tag = 'scoped memory for lstm_nn_forward.1']
    #allocation8 [shape = 'u8[512]{0}', space=vmem, size = 0x400, scoped, tag = 'input window, operand 8, single buffered']
    #allocation9 [shape = 's32[1]{0}', space=sflag, size = 0x4, scoped, tag = 'scoped memory for lstm_nn_forward.1']
    #allocation10 [shape = 'u8[16384]{0}', space=vmem, size = 0x4000, scoped, tag = 'input window, operand 9, single buffered']
    #allocation11 [shape = 'u8[512]{0}', space=vmem, size = 0x400, scoped, tag = 'input window, operand 10, single buffered']
    #allocation12 [shape = 's32[1]{0}', space=sflag, size = 0x4, scoped, tag = 'scoped memory for lstm_nn_forward.1']
    #allocation13 [shape = 'u8[512]{0}', space=vmem, size = 0x400, scoped, tag = 'input window, operand 13, single buffered']
    %23 = vsyncpa [#allocation7], 0
    %24 = vsyncpa [#allocation9], 0
    %25 = vsyncpa [#allocation12], 0
    // Predicated region
    $region2: #{lstm_nn_forward.1} parent=1 // pred_check
      _
    $region3: #{lstm_nn_forward.1} parent=1 // pred_check_branch
      %27 = sbr.rel (0) target = $region5
    $region4: #{lstm_nn_forward.1} parent=1 // pred_region
      _
    $region5: #{lstm_nn_forward.1} parent=1 // pred_fallthru
      _
    // Predicated region
    $region6: #{lstm_nn_forward.1} parent=1 // pred_check
      _
    $region7: #{lstm_nn_forward.1} parent=1 // pred_check_branch
      %29 = sbr.rel (0) target = $region9
    $region8: #{lstm_nn_forward.1} parent=1 // pred_region
      _
    $region9: #{lstm_nn_forward.1} parent=1 // pred_fallthru
      _
    // Predicated region
    $region10: #{lstm_nn_forward.1} parent=1 // pred_check
      _
    $region11: #{lstm_nn_forward.1} parent=1 // pred_check_branch
      %31 = sbr.rel (0) target = $region13
    $region12: #{lstm_nn_forward.1} parent=1 // pred_region
      _
    $region13: #{lstm_nn_forward.1} parent=1 // pred_fallthru
      _
    // Predicated region
    $region14: #{lstm_nn_forward.1} parent=1 // pred_check
      _
    $region15: #{lstm_nn_forward.1} parent=1 // pred_check_branch
      %33 = sbr.rel (0) target = $region17
    $region16: #{lstm_nn_forward.1} parent=1 // pred_region
      %s35 = ssub.s32 128, 128
      %36 = vsyncadd [#allocation7], %s35
      %s38 = sshll.u32 [#allocation6], 4
      %s39 = int_to_ptr.vmem [resolvable:$true] %s38
      %41 = dma.hbm_to_vmem [thread:$0]  %s3, 128, %s39, [#allocation7]
    $region17: #{lstm_nn_forward.1} parent=1 // pred_fallthru
      _
    // Predicated region
    $region18: #{lstm_nn_forward.1} parent=1 // pred_check
      _
    $region19: #{lstm_nn_forward.1} parent=1 // pred_check_branch
      %43 = sbr.rel (0) target = $region21
    $region20: #{lstm_nn_forward.1} parent=1 // pred_region
      _
    $region21: #{lstm_nn_forward.1} parent=1 // pred_fallthru
      _
    // Predicated region
    $region22: #{lstm_nn_forward.1} parent=1 // pred_check
      _
    $region23: #{lstm_nn_forward.1} parent=1 // pred_check_branch
      %45 = sbr.rel (0) target = $region25
    $region24: #{lstm_nn_forward.1} parent=1 // pred_region
      _
    $region25: #{lstm_nn_forward.1} parent=1 // pred_fallthru
      _
    // Predicated region
    $region26: #{lstm_nn_forward.1} parent=1 // pred_check
      _
    $region27: #{lstm_nn_forward.1} parent=1 // pred_check_branch
      %47 = sbr.rel (0) target = $region29
    $region28: #{lstm_nn_forward.1} parent=1 // pred_region
      _
    $region29: #{lstm_nn_forward.1} parent=1 // pred_fallthru
      _
    // Predicated region
    $region30: #{lstm_nn_forward.1} parent=1 // pred_check
      _
    $region31: #{lstm_nn_forward.1} parent=1 // pred_check_branch
      %49 = sbr.rel (0) target = $region33
    $region32: #{lstm_nn_forward.1} parent=1 // pred_region
      _
    $region33: #{lstm_nn_forward.1} parent=1 // pred_fallthru
      _
    // Predicated region
    $region34: #{lstm_nn_forward.1} parent=1 // pred_check
      _
    $region35: #{lstm_nn_forward.1} parent=1 // pred_check_branch
      %51 = sbr.rel (0) target = $region37
    $region36: #{lstm_nn_forward.1} parent=1 // pred_region
      %s53 = ssub.s32 16, 16
      %54 = vsyncadd [#allocation9], %s53
      %s56 = sshll.u32 [#allocation8], 4
      %s57 = int_to_ptr.vmem [resolvable:$true] %s56
      %59 = dma.hbm_to_vmem [thread:$0]  %s8, 16, %s57, [#allocation9]
    $region37: #{lstm_nn_forward.1} parent=1 // pred_fallthru
      _
    // Predicated region
    $region38: #{lstm_nn_forward.1} parent=1 // pred_check
      _
    $region39: #{lstm_nn_forward.1} parent=1 // pred_check_branch
      %61 = sbr.rel (0) target = $region41
    $region40: #{lstm_nn_forward.1} parent=1 // pred_region
      %s63 = ssub.s32 512, 512
      %64 = vsyncadd [#allocation9], %s63
      %s65 = sshll.u32 [#allocation10], 4
      %s66 = int_to_ptr.vmem [resolvable:$true] %s65
      %71 = dma.hbm_to_vmem [thread:$0]  %s9, 512, %s66, [#allocation9], 128, 128, 8
    $region41: #{lstm_nn_forward.1} parent=1 // pred_fallthru
      _
    // Predicated region
    $region42: #{lstm_nn_forward.1} parent=1 // pred_check
      _
    $region43: #{lstm_nn_forward.1} parent=1 // pred_check_branch
      %73 = sbr.rel (0) target = $region45
    $region44: #{lstm_nn_forward.1} parent=1 // pred_region
      %s75 = ssub.s32 16, 16
      %76 = vsyncadd [#allocation12], %s75
      %s78 = sshll.u32 [#allocation11], 4
      %s79 = int_to_ptr.vmem [resolvable:$true] %s78
      %81 = dma.hbm_to_vmem [thread:$0]  %s10, 16, %s79, [#allocation12]
    $region45: #{lstm_nn_forward.1} parent=1 // pred_fallthru
      _
    // Predicated region
    $region46: #{lstm_nn_forward.1} parent=1 // pred_check
      _
    $region47: #{lstm_nn_forward.1} parent=1 // pred_check_branch
      %83 = sbr.rel (0) target = $region49
    $region48: #{lstm_nn_forward.1} parent=1 // pred_region
      _
    $region49: #{lstm_nn_forward.1} parent=1 // pred_fallthru
      _
    // Predicated region
    $region50: #{lstm_nn_forward.1} parent=1 // pred_check
      _
    $region51: #{lstm_nn_forward.1} parent=1 // pred_check_branch
      %85 = sbr.rel (0) target = $region53
    $region52: #{lstm_nn_forward.1} parent=1 // pred_region
      _
    $region53: #{lstm_nn_forward.1} parent=1 // pred_fallthru
      _
    // Predicated region
    $region54: #{lstm_nn_forward.1} parent=1 // pred_check
      _
    $region55: #{lstm_nn_forward.1} parent=1 // pred_check_branch
      %87 = sbr.rel (0) target = $region57
    $region56: #{lstm_nn_forward.1} parent=1 // pred_region
      %s89 = ssub.s32 16, 16
      %90 = vsyncadd [#allocation12], %s89
      %s92 = sshll.u32 [#allocation13], 4
      %s93 = int_to_ptr.vmem [resolvable:$true] %s92
      %95 = dma.hbm_to_vmem [thread:$0]  %s13, 16, %s93, [#allocation12]
    $region57: #{lstm_nn_forward.1} parent=1 // pred_fallthru
      _
    // Predicated region
    $region58: #{lstm_nn_forward.1} parent=1 // pred_check
      _
    $region59: #{lstm_nn_forward.1} parent=1 // pred_check_branch
      %97 = sbr.rel (0) target = $region61
    $region60: #{lstm_nn_forward.1} parent=1 // pred_region
      _
    $region61: #{lstm_nn_forward.1} parent=1 // pred_fallthru
      _
    // Predicated region
    $region62: #{lstm_nn_forward.1} parent=1 // pred_check
      _
    $region63: #{lstm_nn_forward.1} parent=1 // pred_check_branch
      %99 = sbr.rel (0) target = $region65
    $region64: #{lstm_nn_forward.1} parent=1 // pred_region
      _
    $region65: #{lstm_nn_forward.1} parent=1 // pred_fallthru
      _
    // Predicated region
    $region66: #{lstm_nn_forward.1} parent=1 // pred_check
      _
    $region67: #{lstm_nn_forward.1} parent=1 // pred_check_branch
      %101 = sbr.rel (0) target = $region69
    $region68: #{lstm_nn_forward.1} parent=1 // pred_region
      %102 = dma.done [#allocation7], 128
    $region69: #{lstm_nn_forward.1} parent=1 // pred_fallthru
      _
    // Predicated region
    $region70: #{lstm_nn_forward.1} parent=1 // pred_check
      _
    $region71: #{lstm_nn_forward.1} parent=1 // pred_check_branch
      %104 = sbr.rel (0) target = $region73
    $region72: #{lstm_nn_forward.1} parent=1 // pred_region
      %105 = dma.done [#allocation9], 16
    $region73: #{lstm_nn_forward.1} parent=1 // pred_fallthru
      _
    // Predicated region
    $region74: #{lstm_nn_forward.1} parent=1 // pred_check
      _
    $region75: #{lstm_nn_forward.1} parent=1 // pred_check_branch
      %107 = sbr.rel (0) target = $region77
    $region76: #{lstm_nn_forward.1} parent=1 // pred_region
      %108 = dma.done [#allocation9], 512
    $region77: #{lstm_nn_forward.1} parent=1 // pred_fallthru
      _
    // Predicated region
    $region78: #{lstm_nn_forward.1} parent=1 // pred_check
      _
    $region79: #{lstm_nn_forward.1} parent=1 // pred_check_branch
      %110 = sbr.rel (0) target = $region81
    $region80: #{lstm_nn_forward.1} parent=1 // pred_region
      %111 = dma.done [#allocation12], 16
    $region81: #{lstm_nn_forward.1} parent=1 // pred_fallthru
      _
    // Predicated region
    $region82: #{lstm_nn_forward.1} parent=1 // pred_check
      _
    $region83: #{lstm_nn_forward.1} parent=1 // pred_check_branch
      %113 = sbr.rel (0) target = $region85
    $region84: #{lstm_nn_forward.1} parent=1 // pred_region
      %114 = dma.done [#allocation12], 16
    $region85: #{lstm_nn_forward.1} parent=1 // pred_fallthru
      _
    %v115 = vld [vmem:[%s0] sm:$0xff]
    %v116 = vld [vmem:[#allocation6] sm:$0x3f]
    %v117 = vld [vmem:[#allocation8] sm:$0x1]
    %v119 = vlaneseq
    %v120 = vshrl.u32 %v119, 7
    %v121 = vsub.s32 0, %v120
    %v122 = vrot.slane %v117, %v121
    %vm124 = vcmask 48128
    %v126 = vsel %vm124, %v115, 0
    %vm128 = vcmask 1045504
    %v130 = vsel %vm128, %v116, 0
    %132 = vmatprep.subr.mxu0 0.0
    %133 = vmatpush1.msra.mxu0 %v130
    %134 = vmatprep.subr.mxu0 0.0
    %135 = vmatpush1.msra.mxu0 0.0
    %136 = vmatprep.subr.mxu0 0.0
    %137 = vmatpush1.msra.mxu0 0.0
    %138 = vmatprep.subr.mxu0 0.0
    %139 = vmatpush1.msra.mxu0 0.0
    %140 = vmatprep.subr.mxu0 0.0
    %141 = vmatpush1.msra.mxu0 0.0
    %142 = vmatprep.subr.mxu0 0.0
    %143 = vmatpush1.msra.mxu0 0.0
    %144 = vmatprep.subr.mxu0 0.0
    %145 = vmatpush1.msra.mxu0 0.0
    %146 = vmatprep.subr.mxu0 0.0
    %147 = vmatpush1.msra.mxu0 0.0
    %148 = vmatprep.subr.mxu0 0.0
    %149 = vmatpush1.msra.mxu0 0.0
    %150 = vmatprep.subr.mxu0 0.0
    %151 = vmatpush1.msra.mxu0 0.0
    %152 = vmatprep.subr.mxu0 0.0
    %153 = vmatpush1.msra.mxu0 0.0
    %154 = vmatprep.subr.mxu0 0.0
    %155 = vmatpush1.msra.mxu0 0.0
    %156 = vmatprep.subr.mxu0 0.0
    %157 = vmatpush1.msra.mxu0 0.0
    %158 = vmatprep.subr.mxu0 0.0
    %159 = vmatpush1.msra.mxu0 0.0
    %160 = vmatprep.subr.mxu0 0.0
    %161 = vmatpush1.msra.mxu0 0.0
    %162 = vmatprep.subr.mxu0 0.0
    %163 = vmatpush1.msra.mxu0 0.0
    %164 = vmatprep.subr.mxu0 0.0
    %165 = vmatpush1.msra.mxu0 0.0
    %166 = vmatprep.subr.mxu0 0.0
    %167 = vmatpush1.msra.mxu0 0.0
    %168 = vmatprep.subr.mxu0 0.0
    %169 = vmatpush1.msra.mxu0 0.0
    %170 = vmatprep.subr.mxu0 0.0
    %171 = vmatpush1.msra.mxu0 0.0
    %172 = vmatprep.subr.mxu0 0.0
    %173 = vmatpush1.msra.mxu0 0.0
    %174 = vmatprep.subr.mxu0 0.0
    %175 = vmatpush1.msra.mxu0 0.0
    %176 = vmatprep.subr.mxu0 0.0
    %177 = vmatpush1.msra.mxu0 0.0
    %178 = vmatprep.subr.mxu0 0.0
    %179 = vmatpush1.msra.mxu0 0.0
    %180 = vmatprep.subr.mxu0 0.0
    %181 = vmatpush1.msra.mxu0 0.0
    %182 = vmatprep.subr.mxu0 0.0
    %183 = vmatpush1.msra.mxu0 0.0
    %184 = vmatprep.subr.mxu0 0.0
    %185 = vmatpush1.msra.mxu0 0.0
    %186 = vmatprep.subr.mxu0 0.0
    %187 = vmatpush1.msra.mxu0 0.0
    %188 = vmatprep.subr.mxu0 0.0
    %189 = vmatpush1.msra.mxu0 0.0
    %190 = vmatprep.subr.mxu0 0.0
    %191 = vmatpush1.msra.mxu0 0.0
    %192 = vmatprep.subr.mxu0 0.0
    %193 = vmatpush1.msra.mxu0 0.0
    %194 = vmatprep.subr.mxu0 0.0
    %195 = vmatpush1.msra.mxu0 0.0
    %196 = vmatprep.mubr.f32.mxu0 0.0
    %197 = vmatmul.mubr.f32.gmra.mrb[0].mxu0 %v126
    %v198 = vpop.f32.mrb[0].mxu0
    %v199 = vadd.f32 %v122, %v198
    %v200 = vpop.f32.mrb[0].mxu0
    %201 = vdwg.mxu0
    %202 = vst [vmem:[#allocation2] sm:$0xff] %v199
    %s203 = scalar_lea.vmem %s0, 8
    %v204 = vld [vmem:[%s203] sm:$0xff]
    %v205 = vld [vmem:[#allocation6] sm:$0x3f]
    %v206 = vld [vmem:[#allocation8] sm:$0x1]
    %v208 = vlaneseq
    %v209 = vshrl.u32 %v208, 7
    %v210 = vsub.s32 0, %v209
    %v211 = vrot.slane %v206, %v210
    %v214 = vsel %vm124, %v204, 0
    %v217 = vsel %vm128, %v205, 0
    %219 = vmatprep.subr.mxu0 0.0
    %220 = vmatpush1.msra.mxu0 %v217
    %221 = vmatprep.subr.mxu0 0.0
    %222 = vmatpush1.msra.mxu0 0.0
    %223 = vmatprep.subr.mxu0 0.0
    %224 = vmatpush1.msra.mxu0 0.0
    %225 = vmatprep.subr.mxu0 0.0
    %226 = vmatpush1.msra.mxu0 0.0
    %227 = vmatprep.subr.mxu0 0.0
    %228 = vmatpush1.msra.mxu0 0.0
    %229 = vmatprep.subr.mxu0 0.0
    %230 = vmatpush1.msra.mxu0 0.0
    %231 = vmatprep.subr.mxu0 0.0
    %232 = vmatpush1.msra.mxu0 0.0
    %233 = vmatprep.subr.mxu0 0.0
    %234 = vmatpush1.msra.mxu0 0.0
    %235 = vmatprep.subr.mxu0 0.0
    %236 = vmatpush1.msra.mxu0 0.0
    %237 = vmatprep.subr.mxu0 0.0
    %238 = vmatpush1.msra.mxu0 0.0
    %239 = vmatprep.subr.mxu0 0.0
    %240 = vmatpush1.msra.mxu0 0.0
    %241 = vmatprep.subr.mxu0 0.0
    %242 = vmatpush1.msra.mxu0 0.0
    %243 = vmatprep.subr.mxu0 0.0
    %244 = vmatpush1.msra.mxu0 0.0
    %245 = vmatprep.subr.mxu0 0.0
    %246 = vmatpush1.msra.mxu0 0.0
    %247 = vmatprep.subr.mxu0 0.0
    %248 = vmatpush1.msra.mxu0 0.0
    %249 = vmatprep.subr.mxu0 0.0
    %250 = vmatpush1.msra.mxu0 0.0
    %251 = vmatprep.subr.mxu0 0.0
    %252 = vmatpush1.msra.mxu0 0.0
    %253 = vmatprep.subr.mxu0 0.0
    %254 = vmatpush1.msra.mxu0 0.0
    %255 = vmatprep.subr.mxu0 0.0
    %256 = vmatpush1.msra.mxu0 0.0
    %257 = vmatprep.subr.mxu0 0.0
    %258 = vmatpush1.msra.mxu0 0.0
    %259 = vmatprep.subr.mxu0 0.0
    %260 = vmatpush1.msra.mxu0 0.0
    %261 = vmatprep.subr.mxu0 0.0
    %262 = vmatpush1.msra.mxu0 0.0
    %263 = vmatprep.subr.mxu0 0.0
    %264 = vmatpush1.msra.mxu0 0.0
    %265 = vmatprep.subr.mxu0 0.0
    %266 = vmatpush1.msra.mxu0 0.0
    %267 = vmatprep.subr.mxu0 0.0
    %268 = vmatpush1.msra.mxu0 0.0
    %269 = vmatprep.subr.mxu0 0.0
    %270 = vmatpush1.msra.mxu0 0.0
    %271 = vmatprep.subr.mxu0 0.0
    %272 = vmatpush1.msra.mxu0 0.0
    %273 = vmatprep.subr.mxu0 0.0
    %274 = vmatpush1.msra.mxu0 0.0
    %275 = vmatprep.subr.mxu0 0.0
    %276 = vmatpush1.msra.mxu0 0.0
    %277 = vmatprep.subr.mxu0 0.0
    %278 = vmatpush1.msra.mxu0 0.0
    %279 = vmatprep.subr.mxu0 0.0
    %280 = vmatpush1.msra.mxu0 0.0
    %281 = vmatprep.subr.mxu0 0.0
    %282 = vmatpush1.msra.mxu0 0.0
    %283 = vmatprep.mubr.f32.mxu0 0.0
    %284 = vmatmul.mubr.f32.gmra.mrb[0].mxu0 %v214
    %v285 = vpop.f32.mrb[0].mxu0
    %v286 = vadd.f32 %v211, %v285
    %v287 = vpop.f32.mrb[0].mxu0
    %288 = vdwg.mxu0
    %289 = vst [vmem:[#allocation2 + $0x8] sm:$0xff] %v286
    %v290 = vld [vmem:[%s1] sm:$0x3]
    %v291 = vld [vmem:[%s2] sm:$0x3]
    %v292 = vld [vmem:[#allocation2] ss:$8 sm:$0x3]
    %v293 = vld [vmem:[%s4] sm:$0xff]
    %v294 = vld [vmem:[%s4 + $0x8] sm:$0xff]
    %v295 = vld [vmem:[%s4 + $0x10] sm:$0xff]
    %v296 = vld [vmem:[%s4 + $0x18] sm:$0xff]
    %vm297 = vcmask 261120
    %v299 = vsel %vm297, %v290, 0
    %301 = vmatprep.subr.mxu0 0.0
    %302 = vmatpush1.msra.mxu0 %v293
    %303 = vmatprep.subr.mxu0 0.0
    %304 = vmatpush1.msra.mxu0 %v294
    %305 = vmatprep.subr.mxu0 0.0
    %306 = vmatpush1.msra.mxu0 %v295
    %307 = vmatprep.subr.mxu0 0.0
    %308 = vmatpush1.msra.mxu0 %v296
    %309 = vmatprep.subr.mxu0 0.0
    %310 = vmatpush1.msra.mxu0 0.0
    %311 = vmatprep.subr.mxu0 0.0
    %312 = vmatpush1.msra.mxu0 0.0
    %313 = vmatprep.subr.mxu0 0.0
    %314 = vmatpush1.msra.mxu0 0.0
    %315 = vmatprep.subr.mxu0 0.0
    %316 = vmatpush1.msra.mxu0 0.0
    %317 = vmatprep.subr.mxu0 0.0
    %318 = vmatpush1.msra.mxu0 0.0
    %319 = vmatprep.subr.mxu0 0.0
    %320 = vmatpush1.msra.mxu0 0.0
    %321 = vmatprep.subr.mxu0 0.0
    %322 = vmatpush1.msra.mxu0 0.0
    %323 = vmatprep.subr.mxu0 0.0
    %324 = vmatpush1.msra.mxu0 0.0
    %325 = vmatprep.subr.mxu0 0.0
    %326 = vmatpush1.msra.mxu0 0.0
    %327 = vmatprep.subr.mxu0 0.0
    %328 = vmatpush1.msra.mxu0 0.0
    %329 = vmatprep.subr.mxu0 0.0
    %330 = vmatpush1.msra.mxu0 0.0
    %331 = vmatprep.subr.mxu0 0.0
    %332 = vmatpush1.msra.mxu0 0.0
    %333 = vmatprep.subr.mxu0 0.0
    %334 = vmatpush1.msra.mxu0 0.0
    %335 = vmatprep.subr.mxu0 0.0
    %336 = vmatpush1.msra.mxu0 0.0
    %337 = vmatprep.subr.mxu0 0.0
    %338 = vmatpush1.msra.mxu0 0.0
    %339 = vmatprep.subr.mxu0 0.0
    %340 = vmatpush1.msra.mxu0 0.0
    %341 = vmatprep.subr.mxu0 0.0
    %342 = vmatpush1.msra.mxu0 0.0
    %343 = vmatprep.subr.mxu0 0.0
    %344 = vmatpush1.msra.mxu0 0.0
    %345 = vmatprep.subr.mxu0 0.0
    %346 = vmatpush1.msra.mxu0 0.0
    %347 = vmatprep.subr.mxu0 0.0
    %348 = vmatpush1.msra.mxu0 0.0
    %349 = vmatprep.subr.mxu0 0.0
    %350 = vmatpush1.msra.mxu0 0.0
    %351 = vmatprep.subr.mxu0 0.0
    %352 = vmatpush1.msra.mxu0 0.0
    %353 = vmatprep.subr.mxu0 0.0
    %354 = vmatpush1.msra.mxu0 0.0
    %355 = vmatprep.subr.mxu0 0.0
    %356 = vmatpush1.msra.mxu0 0.0
    %357 = vmatprep.subr.mxu0 0.0
    %358 = vmatpush1.msra.mxu0 0.0
    %359 = vmatprep.subr.mxu0 0.0
    %360 = vmatpush1.msra.mxu0 0.0
    %361 = vmatprep.subr.mxu0 0.0
    %362 = vmatpush1.msra.mxu0 0.0
    %363 = vmatprep.subr.mxu0 0.0
    %364 = vmatpush1.msra.mxu0 0.0
    %365 = vmatprep.mubr.f32.mxu0 0.0
    %366 = vmatmul.mubr.f32.gmra.mrb[0].mxu0 %v299
    %v367 = vpop.f32.mrb[0].mxu0
    %v368 = vadd.f32 0.0, %v367
    %v369 = vpop.f32.mrb[0].mxu0
    %370 = vdwg.mxu0
    %v371 = vld [vmem:[%s5] sm:$0xff]
    %v372 = vld [vmem:[%s5 + $0x8] sm:$0xff]
    %v373 = vld [vmem:[%s5 + $0x10] sm:$0xff]
    %v374 = vld [vmem:[%s5 + $0x18] sm:$0xff]
    %375 = vmatprep.subr.mxu0 0.0
    %376 = vmatpush1.msra.mxu0 %v371
    %377 = vmatprep.subr.mxu0 0.0
    %378 = vmatpush1.msra.mxu0 %v372
    %379 = vmatprep.subr.mxu0 0.0
    %380 = vmatpush1.msra.mxu0 %v373
    %381 = vmatprep.subr.mxu0 0.0
    %382 = vmatpush1.msra.mxu0 %v374
    %383 = vmatprep.subr.mxu0 0.0
    %384 = vmatpush1.msra.mxu0 0.0
    %385 = vmatprep.subr.mxu0 0.0
    %386 = vmatpush1.msra.mxu0 0.0
    %387 = vmatprep.subr.mxu0 0.0
    %388 = vmatpush1.msra.mxu0 0.0
    %389 = vmatprep.subr.mxu0 0.0
    %390 = vmatpush1.msra.mxu0 0.0
    %391 = vmatprep.subr.mxu0 0.0
    %392 = vmatpush1.msra.mxu0 0.0
    %393 = vmatprep.subr.mxu0 0.0
    %394 = vmatpush1.msra.mxu0 0.0
    %395 = vmatprep.subr.mxu0 0.0
    %396 = vmatpush1.msra.mxu0 0.0
    %397 = vmatprep.subr.mxu0 0.0
    %398 = vmatpush1.msra.mxu0 0.0
    %399 = vmatprep.subr.mxu0 0.0
    %400 = vmatpush1.msra.mxu0 0.0
    %401 = vmatprep.subr.mxu0 0.0
    %402 = vmatpush1.msra.mxu0 0.0
    %403 = vmatprep.subr.mxu0 0.0
    %404 = vmatpush1.msra.mxu0 0.0
    %405 = vmatprep.subr.mxu0 0.0
    %406 = vmatpush1.msra.mxu0 0.0
    %407 = vmatprep.subr.mxu0 0.0
    %408 = vmatpush1.msra.mxu0 0.0
    %409 = vmatprep.subr.mxu0 0.0
    %410 = vmatpush1.msra.mxu0 0.0
    %411 = vmatprep.subr.mxu0 0.0
    %412 = vmatpush1.msra.mxu0 0.0
    %413 = vmatprep.subr.mxu0 0.0
    %414 = vmatpush1.msra.mxu0 0.0
    %415 = vmatprep.subr.mxu0 0.0
    %416 = vmatpush1.msra.mxu0 0.0
    %417 = vmatprep.subr.mxu0 0.0
    %418 = vmatpush1.msra.mxu0 0.0
    %419 = vmatprep.subr.mxu0 0.0
    %420 = vmatpush1.msra.mxu0 0.0
    %421 = vmatprep.subr.mxu0 0.0
    %422 = vmatpush1.msra.mxu0 0.0
    %423 = vmatprep.subr.mxu0 0.0
    %424 = vmatpush1.msra.mxu0 0.0
    %425 = vmatprep.subr.mxu0 0.0
    %426 = vmatpush1.msra.mxu0 0.0
    %427 = vmatprep.subr.mxu0 0.0
    %428 = vmatpush1.msra.mxu0 0.0
    %429 = vmatprep.subr.mxu0 0.0
    %430 = vmatpush1.msra.mxu0 0.0
    %431 = vmatprep.subr.mxu0 0.0
    %432 = vmatpush1.msra.mxu0 0.0
    %433 = vmatprep.subr.mxu0 0.0
    %434 = vmatpush1.msra.mxu0 0.0
    %435 = vmatprep.subr.mxu0 0.0
    %436 = vmatpush1.msra.mxu0 0.0
    %437 = vmatprep.subr.mxu0 0.0
    %438 = vmatpush1.msra.mxu0 0.0
    %439 = vmatprep.mubr.f32.mxu0 0.0
    %440 = vmatmul.mubr.f32.gmra.mrb[0].mxu0 %v299
    %v441 = vpop.f32.mrb[0].mxu0
    %v442 = vadd.f32 0.0, %v441
    %v443 = vpop.f32.mrb[0].mxu0
    %444 = vdwg.mxu0
    %v445 = vld [vmem:[%s6] sm:$0xff]
    %v446 = vld [vmem:[%s6 + $0x8] sm:$0xff]
    %v447 = vld [vmem:[%s6 + $0x10] sm:$0xff]
    %v448 = vld [vmem:[%s6 + $0x18] sm:$0xff]
    %449 = vmatprep.subr.mxu0 0.0
    %450 = vmatpush1.msra.mxu0 %v445
    %451 = vmatprep.subr.mxu0 0.0
    %452 = vmatpush1.msra.mxu0 %v446
    %453 = vmatprep.subr.mxu0 0.0
    %454 = vmatpush1.msra.mxu0 %v447
    %455 = vmatprep.subr.mxu0 0.0
    %456 = vmatpush1.msra.mxu0 %v448
    %457 = vmatprep.subr.mxu0 0.0
    %458 = vmatpush1.msra.mxu0 0.0
    %459 = vmatprep.subr.mxu0 0.0
    %460 = vmatpush1.msra.mxu0 0.0
    %461 = vmatprep.subr.mxu0 0.0
    %462 = vmatpush1.msra.mxu0 0.0
    %463 = vmatprep.subr.mxu0 0.0
    %464 = vmatpush1.msra.mxu0 0.0
    %465 = vmatprep.subr.mxu0 0.0
    %466 = vmatpush1.msra.mxu0 0.0
    %467 = vmatprep.subr.mxu0 0.0
    %468 = vmatpush1.msra.mxu0 0.0
    %469 = vmatprep.subr.mxu0 0.0
    %470 = vmatpush1.msra.mxu0 0.0
    %471 = vmatprep.subr.mxu0 0.0
    %472 = vmatpush1.msra.mxu0 0.0
    %473 = vmatprep.subr.mxu0 0.0
    %474 = vmatpush1.msra.mxu0 0.0
    %475 = vmatprep.subr.mxu0 0.0
    %476 = vmatpush1.msra.mxu0 0.0
    %477 = vmatprep.subr.mxu0 0.0
    %478 = vmatpush1.msra.mxu0 0.0
    %479 = vmatprep.subr.mxu0 0.0
    %480 = vmatpush1.msra.mxu0 0.0
    %481 = vmatprep.subr.mxu0 0.0
    %482 = vmatpush1.msra.mxu0 0.0
    %483 = vmatprep.subr.mxu0 0.0
    %484 = vmatpush1.msra.mxu0 0.0
    %485 = vmatprep.subr.mxu0 0.0
    %486 = vmatpush1.msra.mxu0 0.0
    %487 = vmatprep.subr.mxu0 0.0
    %488 = vmatpush1.msra.mxu0 0.0
    %489 = vmatprep.subr.mxu0 0.0
    %490 = vmatpush1.msra.mxu0 0.0
    %491 = vmatprep.subr.mxu0 0.0
    %492 = vmatpush1.msra.mxu0 0.0
    %493 = vmatprep.subr.mxu0 0.0
    %494 = vmatpush1.msra.mxu0 0.0
    %495 = vmatprep.subr.mxu0 0.0
    %496 = vmatpush1.msra.mxu0 0.0
    %497 = vmatprep.subr.mxu0 0.0
    %498 = vmatpush1.msra.mxu0 0.0
    %499 = vmatprep.subr.mxu0 0.0
    %500 = vmatpush1.msra.mxu0 0.0
    %501 = vmatprep.subr.mxu0 0.0
    %502 = vmatpush1.msra.mxu0 0.0
    %503 = vmatprep.subr.mxu0 0.0
    %504 = vmatpush1.msra.mxu0 0.0
    %505 = vmatprep.subr.mxu0 0.0
    %506 = vmatpush1.msra.mxu0 0.0
    %507 = vmatprep.subr.mxu0 0.0
    %508 = vmatpush1.msra.mxu0 0.0
    %509 = vmatprep.subr.mxu0 0.0
    %510 = vmatpush1.msra.mxu0 0.0
    %511 = vmatprep.subr.mxu0 0.0
    %512 = vmatpush1.msra.mxu0 0.0
    %513 = vmatprep.mubr.f32.mxu0 0.0
    %514 = vmatmul.mubr.f32.gmra.mrb[0].mxu0 %v299
    %v515 = vpop.f32.mrb[0].mxu0
    %v516 = vadd.f32 0.0, %v515
    %v517 = vpop.f32.mrb[0].mxu0
    %518 = vdwg.mxu0
    %v519 = vld [vmem:[%s7] sm:$0xff]
    %v520 = vld [vmem:[%s7 + $0x8] sm:$0xff]
    %v521 = vld [vmem:[%s7 + $0x10] sm:$0xff]
    %v522 = vld [vmem:[%s7 + $0x18] sm:$0xff]
    %523 = vmatprep.subr.mxu0 0.0
    %524 = vmatpush1.msra.mxu0 %v519
    %525 = vmatprep.subr.mxu0 0.0
    %526 = vmatpush1.msra.mxu0 %v520
    %527 = vmatprep.subr.mxu0 0.0
    %528 = vmatpush1.msra.mxu0 %v521
    %529 = vmatprep.subr.mxu0 0.0
    %530 = vmatpush1.msra.mxu0 %v522
    %531 = vmatprep.subr.mxu0 0.0
    %532 = vmatpush1.msra.mxu0 0.0
    %533 = vmatprep.subr.mxu0 0.0
    %534 = vmatpush1.msra.mxu0 0.0
    %535 = vmatprep.subr.mxu0 0.0
    %536 = vmatpush1.msra.mxu0 0.0
    %537 = vmatprep.subr.mxu0 0.0
    %538 = vmatpush1.msra.mxu0 0.0
    %539 = vmatprep.subr.mxu0 0.0
    %540 = vmatpush1.msra.mxu0 0.0
    %541 = vmatprep.subr.mxu0 0.0
    %542 = vmatpush1.msra.mxu0 0.0
    %543 = vmatprep.subr.mxu0 0.0
    %544 = vmatpush1.msra.mxu0 0.0
    %545 = vmatprep.subr.mxu0 0.0
    %546 = vmatpush1.msra.mxu0 0.0
    %547 = vmatprep.subr.mxu0 0.0
    %548 = vmatpush1.msra.mxu0 0.0
    %549 = vmatprep.subr.mxu0 0.0
    %550 = vmatpush1.msra.mxu0 0.0
    %551 = vmatprep.subr.mxu0 0.0
    %552 = vmatpush1.msra.mxu0 0.0
    %553 = vmatprep.subr.mxu0 0.0
    %554 = vmatpush1.msra.mxu0 0.0
    %555 = vmatprep.subr.mxu0 0.0
    %556 = vmatpush1.msra.mxu0 0.0
    %557 = vmatprep.subr.mxu0 0.0
    %558 = vmatpush1.msra.mxu0 0.0
    %559 = vmatprep.subr.mxu0 0.0
    %560 = vmatpush1.msra.mxu0 0.0
    %561 = vmatprep.subr.mxu0 0.0
    %562 = vmatpush1.msra.mxu0 0.0
    %563 = vmatprep.subr.mxu0 0.0
    %564 = vmatpush1.msra.mxu0 0.0
    %565 = vmatprep.subr.mxu0 0.0
    %566 = vmatpush1.msra.mxu0 0.0
    %567 = vmatprep.subr.mxu0 0.0
    %568 = vmatpush1.msra.mxu0 0.0
    %569 = vmatprep.subr.mxu0 0.0
    %570 = vmatpush1.msra.mxu0 0.0
    %571 = vmatprep.subr.mxu0 0.0
    %572 = vmatpush1.msra.mxu0 0.0
    %573 = vmatprep.subr.mxu0 0.0
    %574 = vmatpush1.msra.mxu0 0.0
    %575 = vmatprep.subr.mxu0 0.0
    %576 = vmatpush1.msra.mxu0 0.0
    %577 = vmatprep.subr.mxu0 0.0
    %578 = vmatpush1.msra.mxu0 0.0
    %579 = vmatprep.subr.mxu0 0.0
    %580 = vmatpush1.msra.mxu0 0.0
    %581 = vmatprep.subr.mxu0 0.0
    %582 = vmatpush1.msra.mxu0 0.0
    %583 = vmatprep.subr.mxu0 0.0
    %584 = vmatpush1.msra.mxu0 0.0
    %585 = vmatprep.subr.mxu0 0.0
    %586 = vmatpush1.msra.mxu0 0.0
    %587 = vmatprep.mubr.f32.mxu0 0.0
    %588 = vmatmul.mubr.f32.gmra.mrb[0].mxu0 %v299
    %v589 = vpop.f32.mrb[0].mxu0
    %v590 = vadd.f32 0.0, %v589
    %v591 = vpop.f32.mrb[0].mxu0
    %592 = vdwg.mxu0
    %v593 = vadd.f32 %v292, %v368
    %v594 = vxor.u32 %v593, 2147483648
    %v595 = vmul.f32 %v594, 1.442695
    %v596 = vpow.pop %v595
    %v597 = vadd.f32 %v596, 1.0
    %v598 = vrcp.pop %v597
    %v599 = vmul.f32 1.0, %v598
    %601 = vrot.lane.b32.xlu0 %v442, 32
    %v602 = vpop.permute.xlu0 %601
    %v604 = vadd.f32 %v292, %v602
    %v605 = vxor.u32 %v604, 2147483648
    %v606 = vmul.f32 %v605, 1.442695
    %v607 = vpow.pop %v606
    %v608 = vadd.f32 %v607, 1.0
    %v609 = vrcp.pop %v608
    %v610 = vmul.f32 1.0, %v609
    %612 = vrot.lane.b32.xlu0 %v516, 64
    %v613 = vpop.permute.xlu0 %612
    %v615 = vadd.f32 %v292, %v613
    %v616 = vtanh.pop %v615
    %618 = vrot.lane.b32.xlu0 %v590, 96
    %v619 = vpop.permute.xlu0 %618
    %v621 = vadd.f32 %v292, %v619
    %v622 = vxor.u32 %v621, 2147483648
    %v623 = vmul.f32 %v622, 1.442695
    %v624 = vpow.pop %v623
    %v625 = vadd.f32 %v624, 1.0
    %v626 = vrcp.pop %v625
    %v627 = vmul.f32 1.0, %v626
    %629 = vrot.lane.b32.xlu0 %v291, 32
    %v630 = vpop.permute.xlu0 %629
    %v632 = vmul.f32 %v610, %v630
    %634 = vrot.lane.b32.xlu0 %v616, 64
    %v635 = vpop.permute.xlu0 %634
    %v637 = vmul.f32 %v599, %v635
    %639 = vrot.lane.b32.xlu0 %v637, 32
    %v640 = vpop.permute.xlu0 %639
    %v642 = vadd.f32 %v632, %v640
    %v643 = vtanh.pop %v642
    %645 = vrot.lane.b32.xlu0 %v643, 64
    %v646 = vpop.permute.xlu0 %645
    %v648 = vmul.f32 %v627, %v646
    %650 = vrot.lane.b32.xlu0 %v648, 32
    %v651 = vpop.permute.xlu0 %650
    %vm653 = vcmask 253952
    %654 = vst.msk [vmem:[#allocation3] sm:$0x1] %vm653, %v651
    %vm655 = vcmask 254977
    %656 = vst.msk [vmem:[#allocation3 + $0x7] sm:$0x2] %vm655, %v651
    %s657 = scalar_lea.vmem [#allocation2], 1
    %v658 = vld [vmem:[%s657] ss:$8 sm:$0x3]
    %v659 = vld [vmem:[%s4] sm:$0xff]
    %v660 = vld [vmem:[%s4 + $0x8] sm:$0xff]
    %v661 = vld [vmem:[%s4 + $0x10] sm:$0xff]
    %v662 = vld [vmem:[%s4 + $0x18] sm:$0xff]
    %v663 = vsel %vm297, %v651, 0
    %665 = vmatprep.subr.mxu0 0.0
    %666 = vmatpush1.msra.mxu0 %v659
    %667 = vmatprep.subr.mxu0 0.0
    %668 = vmatpush1.msra.mxu0 %v660
    %669 = vmatprep.subr.mxu0 0.0
    %670 = vmatpush1.msra.mxu0 %v661
    %671 = vmatprep.subr.mxu0 0.0
    %672 = vmatpush1.msra.mxu0 %v662
    %673 = vmatprep.subr.mxu0 0.0
    %674 = vmatpush1.msra.mxu0 0.0
    %675 = vmatprep.subr.mxu0 0.0
    %676 = vmatpush1.msra.mxu0 0.0
    %677 = vmatprep.subr.mxu0 0.0
    %678 = vmatpush1.msra.mxu0 0.0
    %679 = vmatprep.subr.mxu0 0.0
    %680 = vmatpush1.msra.mxu0 0.0
    %681 = vmatprep.subr.mxu0 0.0
    %682 = vmatpush1.msra.mxu0 0.0
    %683 = vmatprep.subr.mxu0 0.0
    %684 = vmatpush1.msra.mxu0 0.0
    %685 = vmatprep.subr.mxu0 0.0
    %686 = vmatpush1.msra.mxu0 0.0
    %687 = vmatprep.subr.mxu0 0.0
    %688 = vmatpush1.msra.mxu0 0.0
    %689 = vmatprep.subr.mxu0 0.0
    %690 = vmatpush1.msra.mxu0 0.0
    %691 = vmatprep.subr.mxu0 0.0
    %692 = vmatpush1.msra.mxu0 0.0
    %693 = vmatprep.subr.mxu0 0.0
    %694 = vmatpush1.msra.mxu0 0.0
    %695 = vmatprep.subr.mxu0 0.0
    %696 = vmatpush1.msra.mxu0 0.0
    %697 = vmatprep.subr.mxu0 0.0
    %698 = vmatpush1.msra.mxu0 0.0
    %699 = vmatprep.subr.mxu0 0.0
    %700 = vmatpush1.msra.mxu0 0.0
    %701 = vmatprep.subr.mxu0 0.0
    %702 = vmatpush1.msra.mxu0 0.0
    %703 = vmatprep.subr.mxu0 0.0
    %704 = vmatpush1.msra.mxu0 0.0
    %705 = vmatprep.subr.mxu0 0.0
    %706 = vmatpush1.msra.mxu0 0.0
    %707 = vmatprep.subr.mxu0 0.0
    %708 = vmatpush1.msra.mxu0 0.0
    %709 = vmatprep.subr.mxu0 0.0
    %710 = vmatpush1.msra.mxu0 0.0
    %711 = vmatprep.subr.mxu0 0.0
    %712 = vmatpush1.msra.mxu0 0.0
    %713 = vmatprep.subr.mxu0 0.0
    %714 = vmatpush1.msra.mxu0 0.0
    %715 = vmatprep.subr.mxu0 0.0
    %716 = vmatpush1.msra.mxu0 0.0
    %717 = vmatprep.subr.mxu0 0.0
    %718 = vmatpush1.msra.mxu0 0.0
    %719 = vmatprep.subr.mxu0 0.0
    %720 = vmatpush1.msra.mxu0 0.0
    %721 = vmatprep.subr.mxu0 0.0
    %722 = vmatpush1.msra.mxu0 0.0
    %723 = vmatprep.subr.mxu0 0.0
    %724 = vmatpush1.msra.mxu0 0.0
    %725 = vmatprep.subr.mxu0 0.0
    %726 = vmatpush1.msra.mxu0 0.0
    %727 = vmatprep.subr.mxu0 0.0
    %728 = vmatpush1.msra.mxu0 0.0
    %729 = vmatprep.mubr.f32.mxu0 0.0
    %730 = vmatmul.mubr.f32.gmra.mrb[0].mxu0 %v663
    %v731 = vpop.f32.mrb[0].mxu0
    %v732 = vadd.f32 0.0, %v731
    %v733 = vpop.f32.mrb[0].mxu0
    %734 = vdwg.mxu0
    %v735 = vld [vmem:[%s5] sm:$0xff]
    %v736 = vld [vmem:[%s5 + $0x8] sm:$0xff]
    %v737 = vld [vmem:[%s5 + $0x10] sm:$0xff]
    %v738 = vld [vmem:[%s5 + $0x18] sm:$0xff]
    %739 = vmatprep.subr.mxu0 0.0
    %740 = vmatpush1.msra.mxu0 %v735
    %741 = vmatprep.subr.mxu0 0.0
    %742 = vmatpush1.msra.mxu0 %v736
    %743 = vmatprep.subr.mxu0 0.0
    %744 = vmatpush1.msra.mxu0 %v737
    %745 = vmatprep.subr.mxu0 0.0
    %746 = vmatpush1.msra.mxu0 %v738
    %747 = vmatprep.subr.mxu0 0.0
    %748 = vmatpush1.msra.mxu0 0.0
    %749 = vmatprep.subr.mxu0 0.0
    %750 = vmatpush1.msra.mxu0 0.0
    %751 = vmatprep.subr.mxu0 0.0
    %752 = vmatpush1.msra.mxu0 0.0
    %753 = vmatprep.subr.mxu0 0.0
    %754 = vmatpush1.msra.mxu0 0.0
    %755 = vmatprep.subr.mxu0 0.0
    %756 = vmatpush1.msra.mxu0 0.0
    %757 = vmatprep.subr.mxu0 0.0
    %758 = vmatpush1.msra.mxu0 0.0
    %759 = vmatprep.subr.mxu0 0.0
    %760 = vmatpush1.msra.mxu0 0.0
    %761 = vmatprep.subr.mxu0 0.0
    %762 = vmatpush1.msra.mxu0 0.0
    %763 = vmatprep.subr.mxu0 0.0
    %764 = vmatpush1.msra.mxu0 0.0
    %765 = vmatprep.subr.mxu0 0.0
    %766 = vmatpush1.msra.mxu0 0.0
    %767 = vmatprep.subr.mxu0 0.0
    %768 = vmatpush1.msra.mxu0 0.0
    %769 = vmatprep.subr.mxu0 0.0
    %770 = vmatpush1.msra.mxu0 0.0
    %771 = vmatprep.subr.mxu0 0.0
    %772 = vmatpush1.msra.mxu0 0.0
    %773 = vmatprep.subr.mxu0 0.0
    %774 = vmatpush1.msra.mxu0 0.0
    %775 = vmatprep.subr.mxu0 0.0
    %776 = vmatpush1.msra.mxu0 0.0
    %777 = vmatprep.subr.mxu0 0.0
    %778 = vmatpush1.msra.mxu0 0.0
    %779 = vmatprep.subr.mxu0 0.0
    %780 = vmatpush1.msra.mxu0 0.0
    %781 = vmatprep.subr.mxu0 0.0
    %782 = vmatpush1.msra.mxu0 0.0
    %783 = vmatprep.subr.mxu0 0.0
    %784 = vmatpush1.msra.mxu0 0.0
    %785 = vmatprep.subr.mxu0 0.0
    %786 = vmatpush1.msra.mxu0 0.0
    %787 = vmatprep.subr.mxu0 0.0
    %788 = vmatpush1.msra.mxu0 0.0
    %789 = vmatprep.subr.mxu0 0.0
    %790 = vmatpush1.msra.mxu0 0.0
    %791 = vmatprep.subr.mxu0 0.0
    %792 = vmatpush1.msra.mxu0 0.0
    %793 = vmatprep.subr.mxu0 0.0
    %794 = vmatpush1.msra.mxu0 0.0
    %795 = vmatprep.subr.mxu0 0.0
    %796 = vmatpush1.msra.mxu0 0.0
    %797 = vmatprep.subr.mxu0 0.0
    %798 = vmatpush1.msra.mxu0 0.0
    %799 = vmatprep.subr.mxu0 0.0
    %800 = vmatpush1.msra.mxu0 0.0
    %801 = vmatprep.subr.mxu0 0.0
    %802 = vmatpush1.msra.mxu0 0.0
    %803 = vmatprep.mubr.f32.mxu0 0.0
    %804 = vmatmul.mubr.f32.gmra.mrb[0].mxu0 %v663
    %v805 = vpop.f32.mrb[0].mxu0
    %v806 = vadd.f32 0.0, %v805
    %v807 = vpop.f32.mrb[0].mxu0
    %808 = vdwg.mxu0
    %v809 = vld [vmem:[%s6] sm:$0xff]
    %v810 = vld [vmem:[%s6 + $0x8] sm:$0xff]
    %v811 = vld [vmem:[%s6 + $0x10] sm:$0xff]
    %v812 = vld [vmem:[%s6 + $0x18] sm:$0xff]
    %813 = vmatprep.subr.mxu0 0.0
    %814 = vmatpush1.msra.mxu0 %v809
    %815 = vmatprep.subr.mxu0 0.0
    %816 = vmatpush1.msra.mxu0 %v810
    %817 = vmatprep.subr.mxu0 0.0
    %818 = vmatpush1.msra.mxu0 %v811
    %819 = vmatprep.subr.mxu0 0.0
    %820 = vmatpush1.msra.mxu0 %v812
    %821 = vmatprep.subr.mxu0 0.0
    %822 = vmatpush1.msra.mxu0 0.0
    %823 = vmatprep.subr.mxu0 0.0
    %824 = vmatpush1.msra.mxu0 0.0
    %825 = vmatprep.subr.mxu0 0.0
    %826 = vmatpush1.msra.mxu0 0.0
    %827 = vmatprep.subr.mxu0 0.0
    %828 = vmatpush1.msra.mxu0 0.0
    %829 = vmatprep.subr.mxu0 0.0
    %830 = vmatpush1.msra.mxu0 0.0
    %831 = vmatprep.subr.mxu0 0.0
    %832 = vmatpush1.msra.mxu0 0.0
    %833 = vmatprep.subr.mxu0 0.0
    %834 = vmatpush1.msra.mxu0 0.0
    %835 = vmatprep.subr.mxu0 0.0
    %836 = vmatpush1.msra.mxu0 0.0
    %837 = vmatprep.subr.mxu0 0.0
    %838 = vmatpush1.msra.mxu0 0.0
    %839 = vmatprep.subr.mxu0 0.0
    %840 = vmatpush1.msra.mxu0 0.0
    %841 = vmatprep.subr.mxu0 0.0
    %842 = vmatpush1.msra.mxu0 0.0
    %843 = vmatprep.subr.mxu0 0.0
    %844 = vmatpush1.msra.mxu0 0.0
    %845 = vmatprep.subr.mxu0 0.0
    %846 = vmatpush1.msra.mxu0 0.0
    %847 = vmatprep.subr.mxu0 0.0
    %848 = vmatpush1.msra.mxu0 0.0
    %849 = vmatprep.subr.mxu0 0.0
    %850 = vmatpush1.msra.mxu0 0.0
    %851 = vmatprep.subr.mxu0 0.0
    %852 = vmatpush1.msra.mxu0 0.0
    %853 = vmatprep.subr.mxu0 0.0
    %854 = vmatpush1.msra.mxu0 0.0
    %855 = vmatprep.subr.mxu0 0.0
    %856 = vmatpush1.msra.mxu0 0.0
    %857 = vmatprep.subr.mxu0 0.0
    %858 = vmatpush1.msra.mxu0 0.0
    %859 = vmatprep.subr.mxu0 0.0
    %860 = vmatpush1.msra.mxu0 0.0
    %861 = vmatprep.subr.mxu0 0.0
    %862 = vmatpush1.msra.mxu0 0.0
    %863 = vmatprep.subr.mxu0 0.0
    %864 = vmatpush1.msra.mxu0 0.0
    %865 = vmatprep.subr.mxu0 0.0
    %866 = vmatpush1.msra.mxu0 0.0
    %867 = vmatprep.subr.mxu0 0.0
    %868 = vmatpush1.msra.mxu0 0.0
    %869 = vmatprep.subr.mxu0 0.0
    %870 = vmatpush1.msra.mxu0 0.0
    %871 = vmatprep.subr.mxu0 0.0
    %872 = vmatpush1.msra.mxu0 0.0
    %873 = vmatprep.subr.mxu0 0.0
    %874 = vmatpush1.msra.mxu0 0.0
    %875 = vmatprep.subr.mxu0 0.0
    %876 = vmatpush1.msra.mxu0 0.0
    %877 = vmatprep.mubr.f32.mxu0 0.0
    %878 = vmatmul.mubr.f32.gmra.mrb[0].mxu0 %v663
    %v879 = vpop.f32.mrb[0].mxu0
    %v880 = vadd.f32 0.0, %v879
    %v881 = vpop.f32.mrb[0].mxu0
    %882 = vdwg.mxu0
    %v883 = vld [vmem:[%s7] sm:$0xff]
    %v884 = vld [vmem:[%s7 + $0x8] sm:$0xff]
    %v885 = vld [vmem:[%s7 + $0x10] sm:$0xff]
    %v886 = vld [vmem:[%s7 + $0x18] sm:$0xff]
    %887 = vmatprep.subr.mxu0 0.0
    %888 = vmatpush1.msra.mxu0 %v883
    %889 = vmatprep.subr.mxu0 0.0
    %890 = vmatpush1.msra.mxu0 %v884
    %891 = vmatprep.subr.mxu0 0.0
    %892 = vmatpush1.msra.mxu0 %v885
    %893 = vmatprep.subr.mxu0 0.0
    %894 = vmatpush1.msra.mxu0 %v886
    %895 = vmatprep.subr.mxu0 0.0
    %896 = vmatpush1.msra.mxu0 0.0
    %897 = vmatprep.subr.mxu0 0.0
    %898 = vmatpush1.msra.mxu0 0.0
    %899 = vmatprep.subr.mxu0 0.0
    %900 = vmatpush1.msra.mxu0 0.0
    %901 = vmatprep.subr.mxu0 0.0
    %902 = vmatpush1.msra.mxu0 0.0
    %903 = vmatprep.subr.mxu0 0.0
    %904 = vmatpush1.msra.mxu0 0.0
    %905 = vmatprep.subr.mxu0 0.0
    %906 = vmatpush1.msra.mxu0 0.0
    %907 = vmatprep.subr.mxu0 0.0
    %908 = vmatpush1.msra.mxu0 0.0
    %909 = vmatprep.subr.mxu0 0.0
    %910 = vmatpush1.msra.mxu0 0.0
    %911 = vmatprep.subr.mxu0 0.0
    %912 = vmatpush1.msra.mxu0 0.0
    %913 = vmatprep.subr.mxu0 0.0
    %914 = vmatpush1.msra.mxu0 0.0
    %915 = vmatprep.subr.mxu0 0.0
    %916 = vmatpush1.msra.mxu0 0.0
    %917 = vmatprep.subr.mxu0 0.0
    %918 = vmatpush1.msra.mxu0 0.0
    %919 = vmatprep.subr.mxu0 0.0
    %920 = vmatpush1.msra.mxu0 0.0
    %921 = vmatprep.subr.mxu0 0.0
    %922 = vmatpush1.msra.mxu0 0.0
    %923 = vmatprep.subr.mxu0 0.0
    %924 = vmatpush1.msra.mxu0 0.0
    %925 = vmatprep.subr.mxu0 0.0
    %926 = vmatpush1.msra.mxu0 0.0
    %927 = vmatprep.subr.mxu0 0.0
    %928 = vmatpush1.msra.mxu0 0.0
    %929 = vmatprep.subr.mxu0 0.0
    %930 = vmatpush1.msra.mxu0 0.0
    %931 = vmatprep.subr.mxu0 0.0
    %932 = vmatpush1.msra.mxu0 0.0
    %933 = vmatprep.subr.mxu0 0.0
    %934 = vmatpush1.msra.mxu0 0.0
    %935 = vmatprep.subr.mxu0 0.0
    %936 = vmatpush1.msra.mxu0 0.0
    %937 = vmatprep.subr.mxu0 0.0
    %938 = vmatpush1.msra.mxu0 0.0
    %939 = vmatprep.subr.mxu0 0.0
    %940 = vmatpush1.msra.mxu0 0.0
    %941 = vmatprep.subr.mxu0 0.0
    %942 = vmatpush1.msra.mxu0 0.0
    %943 = vmatprep.subr.mxu0 0.0
    %944 = vmatpush1.msra.mxu0 0.0
    %945 = vmatprep.subr.mxu0 0.0
    %946 = vmatpush1.msra.mxu0 0.0
    %947 = vmatprep.subr.mxu0 0.0
    %948 = vmatpush1.msra.mxu0 0.0
    %949 = vmatprep.subr.mxu0 0.0
    %950 = vmatpush1.msra.mxu0 0.0
    %951 = vmatprep.mubr.f32.mxu0 0.0
    %952 = vmatmul.mubr.f32.gmra.mrb[0].mxu0 %v663
    %v953 = vpop.f32.mrb[0].mxu0
    %v954 = vadd.f32 0.0, %v953
    %v955 = vpop.f32.mrb[0].mxu0
    %956 = vdwg.mxu0
    %v957 = vadd.f32 %v658, %v732
    %v958 = vxor.u32 %v957, 2147483648
    %v959 = vmul.f32 %v958, 1.442695
    %v960 = vpow.pop %v959
    %v961 = vadd.f32 %v960, 1.0
    %v962 = vrcp.pop %v961
    %v963 = vmul.f32 1.0, %v962
    %965 = vrot.lane.b32.xlu0 %v806, 32
    %v966 = vpop.permute.xlu0 %965
    %v968 = vadd.f32 %v658, %v966
    %v969 = vxor.u32 %v968, 2147483648
    %v970 = vmul.f32 %v969, 1.442695
    %v971 = vpow.pop %v970
    %v972 = vadd.f32 %v971, 1.0
    %v973 = vrcp.pop %v972
    %v974 = vmul.f32 1.0, %v973
    %976 = vrot.lane.b32.xlu0 %v880, 64
    %v977 = vpop.permute.xlu0 %976
    %v979 = vadd.f32 %v658, %v977
    %v980 = vtanh.pop %v979
    %982 = vrot.lane.b32.xlu0 %v954, 96
    %v983 = vpop.permute.xlu0 %982
    %v985 = vadd.f32 %v658, %v983
    %v986 = vxor.u32 %v985, 2147483648
    %v987 = vmul.f32 %v986, 1.442695
    %v988 = vpow.pop %v987
    %v989 = vadd.f32 %v988, 1.0
    %v990 = vrcp.pop %v989
    %v991 = vmul.f32 1.0, %v990
    %v992 = vmul.f32 %v974, %v642
    %994 = vrot.lane.b32.xlu0 %v980, 64
    %v995 = vpop.permute.xlu0 %994
    %v997 = vmul.f32 %v963, %v995
    %999 = vrot.lane.b32.xlu0 %v997, 32
    %v1000 = vpop.permute.xlu0 %999
    %v1002 = vadd.f32 %v992, %v1000
    %v1003 = vtanh.pop %v1002
    %1005 = vrot.lane.b32.xlu0 %v1003, 64
    %v1006 = vpop.permute.xlu0 %1005
    %v1008 = vmul.f32 %v991, %v1006
    %1010 = vrot.lane.b32.xlu0 %v1008, 32
    %v1011 = vpop.permute.xlu0 %1010
    %1013 = vst.msk [vmem:[#allocation3 + $0x1] sm:$0x1] %vm653, %v1011
    %1014 = vst.msk [vmem:[#allocation3 + $0x8] sm:$0x2] %vm655, %v1011
    %s1015 = scalar_lea.vmem [#allocation2], 2
    %v1016 = vld [vmem:[%s1015] ss:$8 sm:$0x3]
    %v1017 = vld [vmem:[%s4] sm:$0xff]
    %v1018 = vld [vmem:[%s4 + $0x8] sm:$0xff]
    %v1019 = vld [vmem:[%s4 + $0x10] sm:$0xff]
    %v1020 = vld [vmem:[%s4 + $0x18] sm:$0xff]
    %v1021 = vsel %vm297, %v1011, 0
    %1023 = vmatprep.subr.mxu0 0.0
    %1024 = vmatpush1.msra.mxu0 %v1017
    %1025 = vmatprep.subr.mxu0 0.0
    %1026 = vmatpush1.msra.mxu0 %v1018
    %1027 = vmatprep.subr.mxu0 0.0
    %1028 = vmatpush1.msra.mxu0 %v1019
    %1029 = vmatprep.subr.mxu0 0.0
    %1030 = vmatpush1.msra.mxu0 %v1020
    %1031 = vmatprep.subr.mxu0 0.0
    %1032 = vmatpush1.msra.mxu0 0.0
    %1033 = vmatprep.subr.mxu0 0.0
    %1034 = vmatpush1.msra.mxu0 0.0
    %1035 = vmatprep.subr.mxu0 0.0
    %1036 = vmatpush1.msra.mxu0 0.0
    %1037 = vmatprep.subr.mxu0 0.0
    %1038 = vmatpush1.msra.mxu0 0.0
    %1039 = vmatprep.subr.mxu0 0.0
    %1040 = vmatpush1.msra.mxu0 0.0
    %1041 = vmatprep.subr.mxu0 0.0
    %1042 = vmatpush1.msra.mxu0 0.0
    %1043 = vmatprep.subr.mxu0 0.0
    %1044 = vmatpush1.msra.mxu0 0.0
    %1045 = vmatprep.subr.mxu0 0.0
    %1046 = vmatpush1.msra.mxu0 0.0
    %1047 = vmatprep.subr.mxu0 0.0
    %1048 = vmatpush1.msra.mxu0 0.0
    %1049 = vmatprep.subr.mxu0 0.0
    %1050 = vmatpush1.msra.mxu0 0.0
    %1051 = vmatprep.subr.mxu0 0.0
    %1052 = vmatpush1.msra.mxu0 0.0
    %1053 = vmatprep.subr.mxu0 0.0
    %1054 = vmatpush1.msra.mxu0 0.0
    %1055 = vmatprep.subr.mxu0 0.0
    %1056 = vmatpush1.msra.mxu0 0.0
    %1057 = vmatprep.subr.mxu0 0.0
    %1058 = vmatpush1.msra.mxu0 0.0
    %1059 = vmatprep.subr.mxu0 0.0
    %1060 = vmatpush1.msra.mxu0 0.0
    %1061 = vmatprep.subr.mxu0 0.0
    %1062 = vmatpush1.msra.mxu0 0.0
    %1063 = vmatprep.subr.mxu0 0.0
    %1064 = vmatpush1.msra.mxu0 0.0
    %1065 = vmatprep.subr.mxu0 0.0
    %1066 = vmatpush1.msra.mxu0 0.0
    %1067 = vmatprep.subr.mxu0 0.0
    %1068 = vmatpush1.msra.mxu0 0.0
    %1069 = vmatprep.subr.mxu0 0.0
    %1070 = vmatpush1.msra.mxu0 0.0
    %1071 = vmatprep.subr.mxu0 0.0
    %1072 = vmatpush1.msra.mxu0 0.0
    %1073 = vmatprep.subr.mxu0 0.0
    %1074 = vmatpush1.msra.mxu0 0.0
    %1075 = vmatprep.subr.mxu0 0.0
    %1076 = vmatpush1.msra.mxu0 0.0
    %1077 = vmatprep.subr.mxu0 0.0
    %1078 = vmatpush1.msra.mxu0 0.0
    %1079 = vmatprep.subr.mxu0 0.0
    %1080 = vmatpush1.msra.mxu0 0.0
    %1081 = vmatprep.subr.mxu0 0.0
    %1082 = vmatpush1.msra.mxu0 0.0
    %1083 = vmatprep.subr.mxu0 0.0
    %1084 = vmatpush1.msra.mxu0 0.0
    %1085 = vmatprep.subr.mxu0 0.0
    %1086 = vmatpush1.msra.mxu0 0.0
    %1087 = vmatprep.mubr.f32.mxu0 0.0
    %1088 = vmatmul.mubr.f32.gmra.mrb[0].mxu0 %v1021
    %v1089 = vpop.f32.mrb[0].mxu0
    %v1090 = vadd.f32 0.0, %v1089
    %v1091 = vpop.f32.mrb[0].mxu0
    %1092 = vdwg.mxu0
    %v1093 = vld [vmem:[%s5] sm:$0xff]
    %v1094 = vld [vmem:[%s5 + $0x8] sm:$0xff]
    %v1095 = vld [vmem:[%s5 + $0x10] sm:$0xff]
    %v1096 = vld [vmem:[%s5 + $0x18] sm:$0xff]
    %1097 = vmatprep.subr.mxu0 0.0
    %1098 = vmatpush1.msra.mxu0 %v1093
    %1099 = vmatprep.subr.mxu0 0.0
    %1100 = vmatpush1.msra.mxu0 %v1094
    %1101 = vmatprep.subr.mxu0 0.0
    %1102 = vmatpush1.msra.mxu0 %v1095
    %1103 = vmatprep.subr.mxu0 0.0
    %1104 = vmatpush1.msra.mxu0 %v1096
    %1105 = vmatprep.subr.mxu0 0.0
    %1106 = vmatpush1.msra.mxu0 0.0
    %1107 = vmatprep.subr.mxu0 0.0
    %1108 = vmatpush1.msra.mxu0 0.0
    %1109 = vmatprep.subr.mxu0 0.0
    %1110 = vmatpush1.msra.mxu0 0.0
    %1111 = vmatprep.subr.mxu0 0.0
    %1112 = vmatpush1.msra.mxu0 0.0
    %1113 = vmatprep.subr.mxu0 0.0
    %1114 = vmatpush1.msra.mxu0 0.0
    %1115 = vmatprep.subr.mxu0 0.0
    %1116 = vmatpush1.msra.mxu0 0.0
    %1117 = vmatprep.subr.mxu0 0.0
    %1118 = vmatpush1.msra.mxu0 0.0
    %1119 = vmatprep.subr.mxu0 0.0
    %1120 = vmatpush1.msra.mxu0 0.0
    %1121 = vmatprep.subr.mxu0 0.0
    %1122 = vmatpush1.msra.mxu0 0.0
    %1123 = vmatprep.subr.mxu0 0.0
    %1124 = vmatpush1.msra.mxu0 0.0
    %1125 = vmatprep.subr.mxu0 0.0
    %1126 = vmatpush1.msra.mxu0 0.0
    %1127 = vmatprep.subr.mxu0 0.0
    %1128 = vmatpush1.msra.mxu0 0.0
    %1129 = vmatprep.subr.mxu0 0.0
    %1130 = vmatpush1.msra.mxu0 0.0
    %1131 = vmatprep.subr.mxu0 0.0
    %1132 = vmatpush1.msra.mxu0 0.0
    %1133 = vmatprep.subr.mxu0 0.0
    %1134 = vmatpush1.msra.mxu0 0.0
    %1135 = vmatprep.subr.mxu0 0.0
    %1136 = vmatpush1.msra.mxu0 0.0
    %1137 = vmatprep.subr.mxu0 0.0
    %1138 = vmatpush1.msra.mxu0 0.0
    %1139 = vmatprep.subr.mxu0 0.0
    %1140 = vmatpush1.msra.mxu0 0.0
    %1141 = vmatprep.subr.mxu0 0.0
    %1142 = vmatpush1.msra.mxu0 0.0
    %1143 = vmatprep.subr.mxu0 0.0
    %1144 = vmatpush1.msra.mxu0 0.0
    %1145 = vmatprep.subr.mxu0 0.0
    %1146 = vmatpush1.msra.mxu0 0.0
    %1147 = vmatprep.subr.mxu0 0.0
    %1148 = vmatpush1.msra.mxu0 0.0
    %1149 = vmatprep.subr.mxu0 0.0
    %1150 = vmatpush1.msra.mxu0 0.0
    %1151 = vmatprep.subr.mxu0 0.0
    %1152 = vmatpush1.msra.mxu0 0.0
    %1153 = vmatprep.subr.mxu0 0.0
    %1154 = vmatpush1.msra.mxu0 0.0
    %1155 = vmatprep.subr.mxu0 0.0
    %1156 = vmatpush1.msra.mxu0 0.0
    %1157 = vmatprep.subr.mxu0 0.0
    %1158 = vmatpush1.msra.mxu0 0.0
    %1159 = vmatprep.subr.mxu0 0.0
    %1160 = vmatpush1.msra.mxu0 0.0
    %1161 = vmatprep.mubr.f32.mxu0 0.0
    %1162 = vmatmul.mubr.f32.gmra.mrb[0].mxu0 %v1021
    %v1163 = vpop.f32.mrb[0].mxu0
    %v1164 = vadd.f32 0.0, %v1163
    %v1165 = vpop.f32.mrb[0].mxu0
    %1166 = vdwg.mxu0
    %v1167 = vld [vmem:[%s6] sm:$0xff]
    %v1168 = vld [vmem:[%s6 + $0x8] sm:$0xff]
    %v1169 = vld [vmem:[%s6 + $0x10] sm:$0xff]
    %v1170 = vld [vmem:[%s6 + $0x18] sm:$0xff]
    %1171 = vmatprep.subr.mxu0 0.0
    %1172 = vmatpush1.msra.mxu0 %v1167
    %1173 = vmatprep.subr.mxu0 0.0
    %1174 = vmatpush1.msra.mxu0 %v1168
    %1175 = vmatprep.subr.mxu0 0.0
    %1176 = vmatpush1.msra.mxu0 %v1169
    %1177 = vmatprep.subr.mxu0 0.0
    %1178 = vmatpush1.msra.mxu0 %v1170
    %1179 = vmatprep.subr.mxu0 0.0
    %1180 = vmatpush1.msra.mxu0 0.0
    %1181 = vmatprep.subr.mxu0 0.0
    %1182 = vmatpush1.msra.mxu0 0.0
    %1183 = vmatprep.subr.mxu0 0.0
    %1184 = vmatpush1.msra.mxu0 0.0
    %1185 = vmatprep.subr.mxu0 0.0
    %1186 = vmatpush1.msra.mxu0 0.0
    %1187 = vmatprep.subr.mxu0 0.0
    %1188 = vmatpush1.msra.mxu0 0.0
    %1189 = vmatprep.subr.mxu0 0.0
    %1190 = vmatpush1.msra.mxu0 0.0
    %1191 = vmatprep.subr.mxu0 0.0
    %1192 = vmatpush1.msra.mxu0 0.0
    %1193 = vmatprep.subr.mxu0 0.0
    %1194 = vmatpush1.msra.mxu0 0.0
    %1195 = vmatprep.subr.mxu0 0.0
    %1196 = vmatpush1.msra.mxu0 0.0
    %1197 = vmatprep.subr.mxu0 0.0
    %1198 = vmatpush1.msra.mxu0 0.0
    %1199 = vmatprep.subr.mxu0 0.0
    %1200 = vmatpush1.msra.mxu0 0.0
    %1201 = vmatprep.subr.mxu0 0.0
    %1202 = vmatpush1.msra.mxu0 0.0
    %1203 = vmatprep.subr.mxu0 0.0
    %1204 = vmatpush1.msra.mxu0 0.0
    %1205 = vmatprep.subr.mxu0 0.0
    %1206 = vmatpush1.msra.mxu0 0.0
    %1207 = vmatprep.subr.mxu0 0.0
    %1208 = vmatpush1.msra.mxu0 0.0
    %1209 = vmatprep.subr.mxu0 0.0
    %1210 = vmatpush1.msra.mxu0 0.0
    %1211 = vmatprep.subr.mxu0 0.0
    %1212 = vmatpush1.msra.mxu0 0.0
    %1213 = vmatprep.subr.mxu0 0.0
    %1214 = vmatpush1.msra.mxu0 0.0
    %1215 = vmatprep.subr.mxu0 0.0
    %1216 = vmatpush1.msra.mxu0 0.0
    %1217 = vmatprep.subr.mxu0 0.0
    %1218 = vmatpush1.msra.mxu0 0.0
    %1219 = vmatprep.subr.mxu0 0.0
    %1220 = vmatpush1.msra.mxu0 0.0
    %1221 = vmatprep.subr.mxu0 0.0
    %1222 = vmatpush1.msra.mxu0 0.0
    %1223 = vmatprep.subr.mxu0 0.0
    %1224 = vmatpush1.msra.mxu0 0.0
    %1225 = vmatprep.subr.mxu0 0.0
    %1226 = vmatpush1.msra.mxu0 0.0
    %1227 = vmatprep.subr.mxu0 0.0
    %1228 = vmatpush1.msra.mxu0 0.0
    %1229 = vmatprep.subr.mxu0 0.0
    %1230 = vmatpush1.msra.mxu0 0.0
    %1231 = vmatprep.subr.mxu0 0.0
    %1232 = vmatpush1.msra.mxu0 0.0
    %1233 = vmatprep.subr.mxu0 0.0
    %1234 = vmatpush1.msra.mxu0 0.0
    %1235 = vmatprep.mubr.f32.mxu0 0.0
    %1236 = vmatmul.mubr.f32.gmra.mrb[0].mxu0 %v1021
    %v1237 = vpop.f32.mrb[0].mxu0
    %v1238 = vadd.f32 0.0, %v1237
    %v1239 = vpop.f32.mrb[0].mxu0
    %1240 = vdwg.mxu0
    %v1241 = vld [vmem:[%s7] sm:$0xff]
    %v1242 = vld [vmem:[%s7 + $0x8] sm:$0xff]
    %v1243 = vld [vmem:[%s7 + $0x10] sm:$0xff]
    %v1244 = vld [vmem:[%s7 + $0x18] sm:$0xff]
    %1245 = vmatprep.subr.mxu0 0.0
    %1246 = vmatpush1.msra.mxu0 %v1241
    %1247 = vmatprep.subr.mxu0 0.0
    %1248 = vmatpush1.msra.mxu0 %v1242
    %1249 = vmatprep.subr.mxu0 0.0
    %1250 = vmatpush1.msra.mxu0 %v1243
    %1251 = vmatprep.subr.mxu0 0.0
    %1252 = vmatpush1.msra.mxu0 %v1244
    %1253 = vmatprep.subr.mxu0 0.0
    %1254 = vmatpush1.msra.mxu0 0.0
    %1255 = vmatprep.subr.mxu0 0.0
    %1256 = vmatpush1.msra.mxu0 0.0
    %1257 = vmatprep.subr.mxu0 0.0
    %1258 = vmatpush1.msra.mxu0 0.0
    %1259 = vmatprep.subr.mxu0 0.0
    %1260 = vmatpush1.msra.mxu0 0.0
    %1261 = vmatprep.subr.mxu0 0.0
    %1262 = vmatpush1.msra.mxu0 0.0
    %1263 = vmatprep.subr.mxu0 0.0
    %1264 = vmatpush1.msra.mxu0 0.0
    %1265 = vmatprep.subr.mxu0 0.0
    %1266 = vmatpush1.msra.mxu0 0.0
    %1267 = vmatprep.subr.mxu0 0.0
    %1268 = vmatpush1.msra.mxu0 0.0
    %1269 = vmatprep.subr.mxu0 0.0
    %1270 = vmatpush1.msra.mxu0 0.0
    %1271 = vmatprep.subr.mxu0 0.0
    %1272 = vmatpush1.msra.mxu0 0.0
    %1273 = vmatprep.subr.mxu0 0.0
    %1274 = vmatpush1.msra.mxu0 0.0
    %1275 = vmatprep.subr.mxu0 0.0
    %1276 = vmatpush1.msra.mxu0 0.0
    %1277 = vmatprep.subr.mxu0 0.0
    %1278 = vmatpush1.msra.mxu0 0.0
    %1279 = vmatprep.subr.mxu0 0.0
    %1280 = vmatpush1.msra.mxu0 0.0
    %1281 = vmatprep.subr.mxu0 0.0
    %1282 = vmatpush1.msra.mxu0 0.0
    %1283 = vmatprep.subr.mxu0 0.0
    %1284 = vmatpush1.msra.mxu0 0.0
    %1285 = vmatprep.subr.mxu0 0.0
    %1286 = vmatpush1.msra.mxu0 0.0
    %1287 = vmatprep.subr.mxu0 0.0
    %1288 = vmatpush1.msra.mxu0 0.0
    %1289 = vmatprep.subr.mxu0 0.0
    %1290 = vmatpush1.msra.mxu0 0.0
    %1291 = vmatprep.subr.mxu0 0.0
    %1292 = vmatpush1.msra.mxu0 0.0
    %1293 = vmatprep.subr.mxu0 0.0
    %1294 = vmatpush1.msra.mxu0 0.0
    %1295 = vmatprep.subr.mxu0 0.0
    %1296 = vmatpush1.msra.mxu0 0.0
    %1297 = vmatprep.subr.mxu0 0.0
    %1298 = vmatpush1.msra.mxu0 0.0
    %1299 = vmatprep.subr.mxu0 0.0
    %1300 = vmatpush1.msra.mxu0 0.0
    %1301 = vmatprep.subr.mxu0 0.0
    %1302 = vmatpush1.msra.mxu0 0.0
    %1303 = vmatprep.subr.mxu0 0.0
    %1304 = vmatpush1.msra.mxu0 0.0
    %1305 = vmatprep.subr.mxu0 0.0
    %1306 = vmatpush1.msra.mxu0 0.0
    %1307 = vmatprep.subr.mxu0 0.0
    %1308 = vmatpush1.msra.mxu0 0.0
    %1309 = vmatprep.mubr.f32.mxu0 0.0
    %1310 = vmatmul.mubr.f32.gmra.mrb[0].mxu0 %v1021
    %v1311 = vpop.f32.mrb[0].mxu0
    %v1312 = vadd.f32 0.0, %v1311
    %v1313 = vpop.f32.mrb[0].mxu0
    %1314 = vdwg.mxu0
    %v1315 = vadd.f32 %v1016, %v1090
    %v1316 = vxor.u32 %v1315, 2147483648
    %v1317 = vmul.f32 %v1316, 1.442695
    %v1318 = vpow.pop %v1317
    %v1319 = vadd.f32 %v1318, 1.0
    %v1320 = vrcp.pop %v1319
    %v1321 = vmul.f32 1.0, %v1320
    %1323 = vrot.lane.b32.xlu0 %v1164, 32
    %v1324 = vpop.permute.xlu0 %1323
    %v1326 = vadd.f32 %v1016, %v1324
    %v1327 = vxor.u32 %v1326, 2147483648
    %v1328 = vmul.f32 %v1327, 1.442695
    %v1329 = vpow.pop %v1328
    %v1330 = vadd.f32 %v1329, 1.0
    %v1331 = vrcp.pop %v1330
    %v1332 = vmul.f32 1.0, %v1331
    %1334 = vrot.lane.b32.xlu0 %v1238, 64
    %v1335 = vpop.permute.xlu0 %1334
    %v1337 = vadd.f32 %v1016, %v1335
    %v1338 = vtanh.pop %v1337
    %1340 = vrot.lane.b32.xlu0 %v1312, 96
    %v1341 = vpop.permute.xlu0 %1340
    %v1343 = vadd.f32 %v1016, %v1341
    %v1344 = vxor.u32 %v1343, 2147483648
    %v1345 = vmul.f32 %v1344, 1.442695
    %v1346 = vpow.pop %v1345
    %v1347 = vadd.f32 %v1346, 1.0
    %v1348 = vrcp.pop %v1347
    %v1349 = vmul.f32 1.0, %v1348
    %v1350 = vmul.f32 %v1332, %v1002
    %1352 = vrot.lane.b32.xlu0 %v1338, 64
    %v1353 = vpop.permute.xlu0 %1352
    %v1355 = vmul.f32 %v1321, %v1353
    %1357 = vrot.lane.b32.xlu0 %v1355, 32
    %v1358 = vpop.permute.xlu0 %1357
    %v1360 = vadd.f32 %v1350, %v1358
    %v1361 = vtanh.pop %v1360
    %1363 = vrot.lane.b32.xlu0 %v1361, 64
    %v1364 = vpop.permute.xlu0 %1363
    %v1366 = vmul.f32 %v1349, %v1364
    %1368 = vrot.lane.b32.xlu0 %v1366, 32
    %v1369 = vpop.permute.xlu0 %1368
    %1371 = vst.msk [vmem:[#allocation3 + $0x2] sm:$0x1] %vm653, %v1369
    %1372 = vst.msk [vmem:[#allocation3 + $0x9] sm:$0x2] %vm655, %v1369
    %s1373 = scalar_lea.vmem [#allocation2], 3
    %v1374 = vld [vmem:[%s1373] ss:$8 sm:$0x3]
    %v1375 = vld [vmem:[%s4] sm:$0xff]
    %v1376 = vld [vmem:[%s4 + $0x8] sm:$0xff]
    %v1377 = vld [vmem:[%s4 + $0x10] sm:$0xff]
    %v1378 = vld [vmem:[%s4 + $0x18] sm:$0xff]
    %v1379 = vsel %vm297, %v1369, 0
    %1381 = vmatprep.subr.mxu0 0.0
    %1382 = vmatpush1.msra.mxu0 %v1375
    %1383 = vmatprep.subr.mxu0 0.0
    %1384 = vmatpush1.msra.mxu0 %v1376
    %1385 = vmatprep.subr.mxu0 0.0
    %1386 = vmatpush1.msra.mxu0 %v1377
    %1387 = vmatprep.subr.mxu0 0.0
    %1388 = vmatpush1.msra.mxu0 %v1378
    %1389 = vmatprep.subr.mxu0 0.0
    %1390 = vmatpush1.msra.mxu0 0.0
    %1391 = vmatprep.subr.mxu0 0.0
    %1392 = vmatpush1.msra.mxu0 0.0
    %1393 = vmatprep.subr.mxu0 0.0
    %1394 = vmatpush1.msra.mxu0 0.0
    %1395 = vmatprep.subr.mxu0 0.0
    %1396 = vmatpush1.msra.mxu0 0.0
    %1397 = vmatprep.subr.mxu0 0.0
    %1398 = vmatpush1.msra.mxu0 0.0
    %1399 = vmatprep.subr.mxu0 0.0
    %1400 = vmatpush1.msra.mxu0 0.0
    %1401 = vmatprep.subr.mxu0 0.0
    %1402 = vmatpush1.msra.mxu0 0.0
    %1403 = vmatprep.subr.mxu0 0.0
    %1404 = vmatpush1.msra.mxu0 0.0
    %1405 = vmatprep.subr.mxu0 0.0
    %1406 = vmatpush1.msra.mxu0 0.0
    %1407 = vmatprep.subr.mxu0 0.0
    %1408 = vmatpush1.msra.mxu0 0.0
    %1409 = vmatprep.subr.mxu0 0.0
    %1410 = vmatpush1.msra.mxu0 0.0
    %1411 = vmatprep.subr.mxu0 0.0
    %1412 = vmatpush1.msra.mxu0 0.0
    %1413 = vmatprep.subr.mxu0 0.0
    %1414 = vmatpush1.msra.mxu0 0.0
    %1415 = vmatprep.subr.mxu0 0.0
    %1416 = vmatpush1.msra.mxu0 0.0
    %1417 = vmatprep.subr.mxu0 0.0
    %1418 = vmatpush1.msra.mxu0 0.0
    %1419 = vmatprep.subr.mxu0 0.0
    %1420 = vmatpush1.msra.mxu0 0.0
    %1421 = vmatprep.subr.mxu0 0.0
    %1422 = vmatpush1.msra.mxu0 0.0
    %1423 = vmatprep.subr.mxu0 0.0
    %1424 = vmatpush1.msra.mxu0 0.0
    %1425 = vmatprep.subr.mxu0 0.0
    %1426 = vmatpush1.msra.mxu0 0.0
    %1427 = vmatprep.subr.mxu0 0.0
    %1428 = vmatpush1.msra.mxu0 0.0
    %1429 = vmatprep.subr.mxu0 0.0
    %1430 = vmatpush1.msra.mxu0 0.0
    %1431 = vmatprep.subr.mxu0 0.0
    %1432 = vmatpush1.msra.mxu0 0.0
    %1433 = vmatprep.subr.mxu0 0.0
    %1434 = vmatpush1.msra.mxu0 0.0
    %1435 = vmatprep.subr.mxu0 0.0
    %1436 = vmatpush1.msra.mxu0 0.0
    %1437 = vmatprep.subr.mxu0 0.0
    %1438 = vmatpush1.msra.mxu0 0.0
    %1439 = vmatprep.subr.mxu0 0.0
    %1440 = vmatpush1.msra.mxu0 0.0
    %1441 = vmatprep.subr.mxu0 0.0
    %1442 = vmatpush1.msra.mxu0 0.0
    %1443 = vmatprep.subr.mxu0 0.0
    %1444 = vmatpush1.msra.mxu0 0.0
    %1445 = vmatprep.mubr.f32.mxu0 0.0
    %1446 = vmatmul.mubr.f32.gmra.mrb[0].mxu0 %v1379
    %v1447 = vpop.f32.mrb[0].mxu0
    %v1448 = vadd.f32 0.0, %v1447
    %v1449 = vpop.f32.mrb[0].mxu0
    %1450 = vdwg.mxu0
    %v1451 = vld [vmem:[%s5] sm:$0xff]
    %v1452 = vld [vmem:[%s5 + $0x8] sm:$0xff]
    %v1453 = vld [vmem:[%s5 + $0x10] sm:$0xff]
    %v1454 = vld [vmem:[%s5 + $0x18] sm:$0xff]
    %1455 = vmatprep.subr.mxu0 0.0
    %1456 = vmatpush1.msra.mxu0 %v1451
    %1457 = vmatprep.subr.mxu0 0.0
    %1458 = vmatpush1.msra.mxu0 %v1452
    %1459 = vmatprep.subr.mxu0 0.0
    %1460 = vmatpush1.msra.mxu0 %v1453
    %1461 = vmatprep.subr.mxu0 0.0
    %1462 = vmatpush1.msra.mxu0 %v1454
    %1463 = vmatprep.subr.mxu0 0.0
    %1464 = vmatpush1.msra.mxu0 0.0
    %1465 = vmatprep.subr.mxu0 0.0
    %1466 = vmatpush1.msra.mxu0 0.0
    %1467 = vmatprep.subr.mxu0 0.0
    %1468 = vmatpush1.msra.mxu0 0.0
    %1469 = vmatprep.subr.mxu0 0.0
    %1470 = vmatpush1.msra.mxu0 0.0
    %1471 = vmatprep.subr.mxu0 0.0
    %1472 = vmatpush1.msra.mxu0 0.0
    %1473 = vmatprep.subr.mxu0 0.0
    %1474 = vmatpush1.msra.mxu0 0.0
    %1475 = vmatprep.subr.mxu0 0.0
    %1476 = vmatpush1.msra.mxu0 0.0
    %1477 = vmatprep.subr.mxu0 0.0
    %1478 = vmatpush1.msra.mxu0 0.0
    %1479 = vmatprep.subr.mxu0 0.0
    %1480 = vmatpush1.msra.mxu0 0.0
    %1481 = vmatprep.subr.mxu0 0.0
    %1482 = vmatpush1.msra.mxu0 0.0
    %1483 = vmatprep.subr.mxu0 0.0
    %1484 = vmatpush1.msra.mxu0 0.0
    %1485 = vmatprep.subr.mxu0 0.0
    %1486 = vmatpush1.msra.mxu0 0.0
    %1487 = vmatprep.subr.mxu0 0.0
    %1488 = vmatpush1.msra.mxu0 0.0
    %1489 = vmatprep.subr.mxu0 0.0
    %1490 = vmatpush1.msra.mxu0 0.0
    %1491 = vmatprep.subr.mxu0 0.0
    %1492 = vmatpush1.msra.mxu0 0.0
    %1493 = vmatprep.subr.mxu0 0.0
    %1494 = vmatpush1.msra.mxu0 0.0
    %1495 = vmatprep.subr.mxu0 0.0
    %1496 = vmatpush1.msra.mxu0 0.0
    %1497 = vmatprep.subr.mxu0 0.0
    %1498 = vmatpush1.msra.mxu0 0.0
    %1499 = vmatprep.subr.mxu0 0.0
    %1500 = vmatpush1.msra.mxu0 0.0
    %1501 = vmatprep.subr.mxu0 0.0
    %1502 = vmatpush1.msra.mxu0 0.0
    %1503 = vmatprep.subr.mxu0 0.0
    %1504 = vmatpush1.msra.mxu0 0.0
    %1505 = vmatprep.subr.mxu0 0.0
    %1506 = vmatpush1.msra.mxu0 0.0
    %1507 = vmatprep.subr.mxu0 0.0
    %1508 = vmatpush1.msra.mxu0 0.0
    %1509 = vmatprep.subr.mxu0 0.0
    %1510 = vmatpush1.msra.mxu0 0.0
    %1511 = vmatprep.subr.mxu0 0.0
    %1512 = vmatpush1.msra.mxu0 0.0
    %1513 = vmatprep.subr.mxu0 0.0
    %1514 = vmatpush1.msra.mxu0 0.0
    %1515 = vmatprep.subr.mxu0 0.0
    %1516 = vmatpush1.msra.mxu0 0.0
    %1517 = vmatprep.subr.mxu0 0.0
    %1518 = vmatpush1.msra.mxu0 0.0
    %1519 = vmatprep.mubr.f32.mxu0 0.0
    %1520 = vmatmul.mubr.f32.gmra.mrb[0].mxu0 %v1379
    %v1521 = vpop.f32.mrb[0].mxu0
    %v1522 = vadd.f32 0.0, %v1521
    %v1523 = vpop.f32.mrb[0].mxu0
    %1524 = vdwg.mxu0
    %v1525 = vld [vmem:[%s6] sm:$0xff]
    %v1526 = vld [vmem:[%s6 + $0x8] sm:$0xff]
    %v1527 = vld [vmem:[%s6 + $0x10] sm:$0xff]
    %v1528 = vld [vmem:[%s6 + $0x18] sm:$0xff]
    %1529 = vmatprep.subr.mxu0 0.0
    %1530 = vmatpush1.msra.mxu0 %v1525
    %1531 = vmatprep.subr.mxu0 0.0
    %1532 = vmatpush1.msra.mxu0 %v1526
    %1533 = vmatprep.subr.mxu0 0.0
    %1534 = vmatpush1.msra.mxu0 %v1527
    %1535 = vmatprep.subr.mxu0 0.0
    %1536 = vmatpush1.msra.mxu0 %v1528
    %1537 = vmatprep.subr.mxu0 0.0
    %1538 = vmatpush1.msra.mxu0 0.0
    %1539 = vmatprep.subr.mxu0 0.0
    %1540 = vmatpush1.msra.mxu0 0.0
    %1541 = vmatprep.subr.mxu0 0.0
    %1542 = vmatpush1.msra.mxu0 0.0
    %1543 = vmatprep.subr.mxu0 0.0
    %1544 = vmatpush1.msra.mxu0 0.0
    %1545 = vmatprep.subr.mxu0 0.0
    %1546 = vmatpush1.msra.mxu0 0.0
    %1547 = vmatprep.subr.mxu0 0.0
    %1548 = vmatpush1.msra.mxu0 0.0
    %1549 = vmatprep.subr.mxu0 0.0
    %1550 = vmatpush1.msra.mxu0 0.0
    %1551 = vmatprep.subr.mxu0 0.0
    %1552 = vmatpush1.msra.mxu0 0.0
    %1553 = vmatprep.subr.mxu0 0.0
    %1554 = vmatpush1.msra.mxu0 0.0
    %1555 = vmatprep.subr.mxu0 0.0
    %1556 = vmatpush1.msra.mxu0 0.0
    %1557 = vmatprep.subr.mxu0 0.0
    %1558 = vmatpush1.msra.mxu0 0.0
    %1559 = vmatprep.subr.mxu0 0.0
    %1560 = vmatpush1.msra.mxu0 0.0
    %1561 = vmatprep.subr.mxu0 0.0
    %1562 = vmatpush1.msra.mxu0 0.0
    %1563 = vmatprep.subr.mxu0 0.0
    %1564 = vmatpush1.msra.mxu0 0.0
    %1565 = vmatprep.subr.mxu0 0.0
    %1566 = vmatpush1.msra.mxu0 0.0
    %1567 = vmatprep.subr.mxu0 0.0
    %1568 = vmatpush1.msra.mxu0 0.0
    %1569 = vmatprep.subr.mxu0 0.0
    %1570 = vmatpush1.msra.mxu0 0.0
    %1571 = vmatprep.subr.mxu0 0.0
    %1572 = vmatpush1.msra.mxu0 0.0
    %1573 = vmatprep.subr.mxu0 0.0
    %1574 = vmatpush1.msra.mxu0 0.0
    %1575 = vmatprep.subr.mxu0 0.0
    %1576 = vmatpush1.msra.mxu0 0.0
    %1577 = vmatprep.subr.mxu0 0.0
    %1578 = vmatpush1.msra.mxu0 0.0
    %1579 = vmatprep.subr.mxu0 0.0
    %1580 = vmatpush1.msra.mxu0 0.0
    %1581 = vmatprep.subr.mxu0 0.0
    %1582 = vmatpush1.msra.mxu0 0.0
    %1583 = vmatprep.subr.mxu0 0.0
    %1584 = vmatpush1.msra.mxu0 0.0
    %1585 = vmatprep.subr.mxu0 0.0
    %1586 = vmatpush1.msra.mxu0 0.0
    %1587 = vmatprep.subr.mxu0 0.0
    %1588 = vmatpush1.msra.mxu0 0.0
    %1589 = vmatprep.subr.mxu0 0.0
    %1590 = vmatpush1.msra.mxu0 0.0
    %1591 = vmatprep.subr.mxu0 0.0
    %1592 = vmatpush1.msra.mxu0 0.0
    %1593 = vmatprep.mubr.f32.mxu0 0.0
    %1594 = vmatmul.mubr.f32.gmra.mrb[0].mxu0 %v1379
    %v1595 = vpop.f32.mrb[0].mxu0
    %v1596 = vadd.f32 0.0, %v1595
    %v1597 = vpop.f32.mrb[0].mxu0
    %1598 = vdwg.mxu0
    %v1599 = vld [vmem:[%s7] sm:$0xff]
    %v1600 = vld [vmem:[%s7 + $0x8] sm:$0xff]
    %v1601 = vld [vmem:[%s7 + $0x10] sm:$0xff]
    %v1602 = vld [vmem:[%s7 + $0x18] sm:$0xff]
    %1603 = vmatprep.subr.mxu0 0.0
    %1604 = vmatpush1.msra.mxu0 %v1599
    %1605 = vmatprep.subr.mxu0 0.0
    %1606 = vmatpush1.msra.mxu0 %v1600
    %1607 = vmatprep.subr.mxu0 0.0
    %1608 = vmatpush1.msra.mxu0 %v1601
    %1609 = vmatprep.subr.mxu0 0.0
    %1610 = vmatpush1.msra.mxu0 %v1602
    %1611 = vmatprep.subr.mxu0 0.0
    %1612 = vmatpush1.msra.mxu0 0.0
    %1613 = vmatprep.subr.mxu0 0.0
    %1614 = vmatpush1.msra.mxu0 0.0
    %1615 = vmatprep.subr.mxu0 0.0
    %1616 = vmatpush1.msra.mxu0 0.0
    %1617 = vmatprep.subr.mxu0 0.0
    %1618 = vmatpush1.msra.mxu0 0.0
    %1619 = vmatprep.subr.mxu0 0.0
    %1620 = vmatpush1.msra.mxu0 0.0
    %1621 = vmatprep.subr.mxu0 0.0
    %1622 = vmatpush1.msra.mxu0 0.0
    %1623 = vmatprep.subr.mxu0 0.0
    %1624 = vmatpush1.msra.mxu0 0.0
    %1625 = vmatprep.subr.mxu0 0.0
    %1626 = vmatpush1.msra.mxu0 0.0
    %1627 = vmatprep.subr.mxu0 0.0
    %1628 = vmatpush1.msra.mxu0 0.0
    %1629 = vmatprep.subr.mxu0 0.0
    %1630 = vmatpush1.msra.mxu0 0.0
    %1631 = vmatprep.subr.mxu0 0.0
    %1632 = vmatpush1.msra.mxu0 0.0
    %1633 = vmatprep.subr.mxu0 0.0
    %1634 = vmatpush1.msra.mxu0 0.0
    %1635 = vmatprep.subr.mxu0 0.0
    %1636 = vmatpush1.msra.mxu0 0.0
    %1637 = vmatprep.subr.mxu0 0.0
    %1638 = vmatpush1.msra.mxu0 0.0
    %1639 = vmatprep.subr.mxu0 0.0
    %1640 = vmatpush1.msra.mxu0 0.0
    %1641 = vmatprep.subr.mxu0 0.0
    %1642 = vmatpush1.msra.mxu0 0.0
    %1643 = vmatprep.subr.mxu0 0.0
    %1644 = vmatpush1.msra.mxu0 0.0
    %1645 = vmatprep.subr.mxu0 0.0
    %1646 = vmatpush1.msra.mxu0 0.0
    %1647 = vmatprep.subr.mxu0 0.0
    %1648 = vmatpush1.msra.mxu0 0.0
    %1649 = vmatprep.subr.mxu0 0.0
    %1650 = vmatpush1.msra.mxu0 0.0
    %1651 = vmatprep.subr.mxu0 0.0
    %1652 = vmatpush1.msra.mxu0 0.0
    %1653 = vmatprep.subr.mxu0 0.0
    %1654 = vmatpush1.msra.mxu0 0.0
    %1655 = vmatprep.subr.mxu0 0.0
    %1656 = vmatpush1.msra.mxu0 0.0
    %1657 = vmatprep.subr.mxu0 0.0
    %1658 = vmatpush1.msra.mxu0 0.0
    %1659 = vmatprep.subr.mxu0 0.0
    %1660 = vmatpush1.msra.mxu0 0.0
    %1661 = vmatprep.subr.mxu0 0.0
    %1662 = vmatpush1.msra.mxu0 0.0
    %1663 = vmatprep.subr.mxu0 0.0
    %1664 = vmatpush1.msra.mxu0 0.0
    %1665 = vmatprep.subr.mxu0 0.0
    %1666 = vmatpush1.msra.mxu0 0.0
    %1667 = vmatprep.mubr.f32.mxu0 0.0
    %1668 = vmatmul.mubr.f32.gmra.mrb[0].mxu0 %v1379
    %v1669 = vpop.f32.mrb[0].mxu0
    %v1670 = vadd.f32 0.0, %v1669
    %v1671 = vpop.f32.mrb[0].mxu0
    %1672 = vdwg.mxu0
    %v1673 = vadd.f32 %v1374, %v1448
    %v1674 = vxor.u32 %v1673, 2147483648
    %v1675 = vmul.f32 %v1674, 1.442695
    %v1676 = vpow.pop %v1675
    %v1677 = vadd.f32 %v1676, 1.0
    %v1678 = vrcp.pop %v1677
    %v1679 = vmul.f32 1.0, %v1678
    %1681 = vrot.lane.b32.xlu0 %v1522, 32
    %v1682 = vpop.permute.xlu0 %1681
    %v1684 = vadd.f32 %v1374, %v1682
    %v1685 = vxor.u32 %v1684, 2147483648
    %v1686 = vmul.f32 %v1685, 1.442695
    %v1687 = vpow.pop %v1686
    %v1688 = vadd.f32 %v1687, 1.0
    %v1689 = vrcp.pop %v1688
    %v1690 = vmul.f32 1.0, %v1689
    %1692 = vrot.lane.b32.xlu0 %v1596, 64
    %v1693 = vpop.permute.xlu0 %1692
    %v1695 = vadd.f32 %v1374, %v1693
    %v1696 = vtanh.pop %v1695
    %1698 = vrot.lane.b32.xlu0 %v1670, 96
    %v1699 = vpop.permute.xlu0 %1698
    %v1701 = vadd.f32 %v1374, %v1699
    %v1702 = vxor.u32 %v1701, 2147483648
    %v1703 = vmul.f32 %v1702, 1.442695
    %v1704 = vpow.pop %v1703
    %v1705 = vadd.f32 %v1704, 1.0
    %v1706 = vrcp.pop %v1705
    %v1707 = vmul.f32 1.0, %v1706
    %v1708 = vmul.f32 %v1690, %v1360
    %1710 = vrot.lane.b32.xlu0 %v1696, 64
    %v1711 = vpop.permute.xlu0 %1710
    %v1713 = vmul.f32 %v1679, %v1711
    %1715 = vrot.lane.b32.xlu0 %v1713, 32
    %v1716 = vpop.permute.xlu0 %1715
    %v1718 = vadd.f32 %v1708, %v1716
    %v1719 = vtanh.pop %v1718
    %1721 = vrot.lane.b32.xlu0 %v1719, 64
    %v1722 = vpop.permute.xlu0 %1721
    %v1724 = vmul.f32 %v1707, %v1722
    %1726 = vrot.lane.b32.xlu0 %v1724, 32
    %v1727 = vpop.permute.xlu0 %1726
    %1729 = vst.msk [vmem:[#allocation3 + $0x3] sm:$0x1] %vm653, %v1727
    %1730 = vst.msk [vmem:[#allocation3 + $0xa] sm:$0x2] %vm655, %v1727
    %s1731 = scalar_lea.vmem [#allocation2], 4
    %v1732 = vld [vmem:[%s1731] ss:$8 sm:$0x3]
    %v1733 = vld [vmem:[%s4] sm:$0xff]
    %v1734 = vld [vmem:[%s4 + $0x8] sm:$0xff]
    %v1735 = vld [vmem:[%s4 + $0x10] sm:$0xff]
    %v1736 = vld [vmem:[%s4 + $0x18] sm:$0xff]
    %v1737 = vsel %vm297, %v1727, 0
    %1739 = vmatprep.subr.mxu0 0.0
    %1740 = vmatpush1.msra.mxu0 %v1733
    %1741 = vmatprep.subr.mxu0 0.0
    %1742 = vmatpush1.msra.mxu0 %v1734
    %1743 = vmatprep.subr.mxu0 0.0
    %1744 = vmatpush1.msra.mxu0 %v1735
    %1745 = vmatprep.subr.mxu0 0.0
    %1746 = vmatpush1.msra.mxu0 %v1736
    %1747 = vmatprep.subr.mxu0 0.0
    %1748 = vmatpush1.msra.mxu0 0.0
    %1749 = vmatprep.subr.mxu0 0.0
    %1750 = vmatpush1.msra.mxu0 0.0
    %1751 = vmatprep.subr.mxu0 0.0
    %1752 = vmatpush1.msra.mxu0 0.0
    %1753 = vmatprep.subr.mxu0 0.0
    %1754 = vmatpush1.msra.mxu0 0.0
    %1755 = vmatprep.subr.mxu0 0.0
    %1756 = vmatpush1.msra.mxu0 0.0
    %1757 = vmatprep.subr.mxu0 0.0
    %1758 = vmatpush1.msra.mxu0 0.0
    %1759 = vmatprep.subr.mxu0 0.0
    %1760 = vmatpush1.msra.mxu0 0.0
    %1761 = vmatprep.subr.mxu0 0.0
    %1762 = vmatpush1.msra.mxu0 0.0
    %1763 = vmatprep.subr.mxu0 0.0
    %1764 = vmatpush1.msra.mxu0 0.0
    %1765 = vmatprep.subr.mxu0 0.0
    %1766 = vmatpush1.msra.mxu0 0.0
    %1767 = vmatprep.subr.mxu0 0.0
    %1768 = vmatpush1.msra.mxu0 0.0
    %1769 = vmatprep.subr.mxu0 0.0
    %1770 = vmatpush1.msra.mxu0 0.0
    %1771 = vmatprep.subr.mxu0 0.0
    %1772 = vmatpush1.msra.mxu0 0.0
    %1773 = vmatprep.subr.mxu0 0.0
    %1774 = vmatpush1.msra.mxu0 0.0
    %1775 = vmatprep.subr.mxu0 0.0
    %1776 = vmatpush1.msra.mxu0 0.0
    %1777 = vmatprep.subr.mxu0 0.0
    %1778 = vmatpush1.msra.mxu0 0.0
    %1779 = vmatprep.subr.mxu0 0.0
    %1780 = vmatpush1.msra.mxu0 0.0
    %1781 = vmatprep.subr.mxu0 0.0
    %1782 = vmatpush1.msra.mxu0 0.0
    %1783 = vmatprep.subr.mxu0 0.0
    %1784 = vmatpush1.msra.mxu0 0.0
    %1785 = vmatprep.subr.mxu0 0.0
    %1786 = vmatpush1.msra.mxu0 0.0
    %1787 = vmatprep.subr.mxu0 0.0
    %1788 = vmatpush1.msra.mxu0 0.0
    %1789 = vmatprep.subr.mxu0 0.0
    %1790 = vmatpush1.msra.mxu0 0.0
    %1791 = vmatprep.subr.mxu0 0.0
    %1792 = vmatpush1.msra.mxu0 0.0
    %1793 = vmatprep.subr.mxu0 0.0
    %1794 = vmatpush1.msra.mxu0 0.0
    %1795 = vmatprep.subr.mxu0 0.0
    %1796 = vmatpush1.msra.mxu0 0.0
    %1797 = vmatprep.subr.mxu0 0.0
    %1798 = vmatpush1.msra.mxu0 0.0
    %1799 = vmatprep.subr.mxu0 0.0
    %1800 = vmatpush1.msra.mxu0 0.0
    %1801 = vmatprep.subr.mxu0 0.0
    %1802 = vmatpush1.msra.mxu0 0.0
    %1803 = vmatprep.mubr.f32.mxu0 0.0
    %1804 = vmatmul.mubr.f32.gmra.mrb[0].mxu0 %v1737
    %v1805 = vpop.f32.mrb[0].mxu0
    %v1806 = vadd.f32 0.0, %v1805
    %v1807 = vpop.f32.mrb[0].mxu0
    %1808 = vdwg.mxu0
    %v1809 = vld [vmem:[%s5] sm:$0xff]
    %v1810 = vld [vmem:[%s5 + $0x8] sm:$0xff]
    %v1811 = vld [vmem:[%s5 + $0x10] sm:$0xff]
    %v1812 = vld [vmem:[%s5 + $0x18] sm:$0xff]
    %1813 = vmatprep.subr.mxu0 0.0
    %1814 = vmatpush1.msra.mxu0 %v1809
    %1815 = vmatprep.subr.mxu0 0.0
    %1816 = vmatpush1.msra.mxu0 %v1810
    %1817 = vmatprep.subr.mxu0 0.0
    %1818 = vmatpush1.msra.mxu0 %v1811
    %1819 = vmatprep.subr.mxu0 0.0
    %1820 = vmatpush1.msra.mxu0 %v1812
    %1821 = vmatprep.subr.mxu0 0.0
    %1822 = vmatpush1.msra.mxu0 0.0
    %1823 = vmatprep.subr.mxu0 0.0
    %1824 = vmatpush1.msra.mxu0 0.0
    %1825 = vmatprep.subr.mxu0 0.0
    %1826 = vmatpush1.msra.mxu0 0.0
    %1827 = vmatprep.subr.mxu0 0.0
    %1828 = vmatpush1.msra.mxu0 0.0
    %1829 = vmatprep.subr.mxu0 0.0
    %1830 = vmatpush1.msra.mxu0 0.0
    %1831 = vmatprep.subr.mxu0 0.0
    %1832 = vmatpush1.msra.mxu0 0.0
    %1833 = vmatprep.subr.mxu0 0.0
    %1834 = vmatpush1.msra.mxu0 0.0
    %1835 = vmatprep.subr.mxu0 0.0
    %1836 = vmatpush1.msra.mxu0 0.0
    %1837 = vmatprep.subr.mxu0 0.0
    %1838 = vmatpush1.msra.mxu0 0.0
    %1839 = vmatprep.subr.mxu0 0.0
    %1840 = vmatpush1.msra.mxu0 0.0
    %1841 = vmatprep.subr.mxu0 0.0
    %1842 = vmatpush1.msra.mxu0 0.0
    %1843 = vmatprep.subr.mxu0 0.0
    %1844 = vmatpush1.msra.mxu0 0.0
    %1845 = vmatprep.subr.mxu0 0.0
    %1846 = vmatpush1.msra.mxu0 0.0
    %1847 = vmatprep.subr.mxu0 0.0
    %1848 = vmatpush1.msra.mxu0 0.0
    %1849 = vmatprep.subr.mxu0 0.0
    %1850 = vmatpush1.msra.mxu0 0.0
    %1851 = vmatprep.subr.mxu0 0.0
    %1852 = vmatpush1.msra.mxu0 0.0
    %1853 = vmatprep.subr.mxu0 0.0
    %1854 = vmatpush1.msra.mxu0 0.0
    %1855 = vmatprep.subr.mxu0 0.0
    %1856 = vmatpush1.msra.mxu0 0.0
    %1857 = vmatprep.subr.mxu0 0.0
    %1858 = vmatpush1.msra.mxu0 0.0
    %1859 = vmatprep.subr.mxu0 0.0
    %1860 = vmatpush1.msra.mxu0 0.0
    %1861 = vmatprep.subr.mxu0 0.0
    %1862 = vmatpush1.msra.mxu0 0.0
    %1863 = vmatprep.subr.mxu0 0.0
    %1864 = vmatpush1.msra.mxu0 0.0
    %1865 = vmatprep.subr.mxu0 0.0
    %1866 = vmatpush1.msra.mxu0 0.0
    %1867 = vmatprep.subr.mxu0 0.0
    %1868 = vmatpush1.msra.mxu0 0.0
    %1869 = vmatprep.subr.mxu0 0.0
    %1870 = vmatpush1.msra.mxu0 0.0
    %1871 = vmatprep.subr.mxu0 0.0
    %1872 = vmatpush1.msra.mxu0 0.0
    %1873 = vmatprep.subr.mxu0 0.0
    %1874 = vmatpush1.msra.mxu0 0.0
    %1875 = vmatprep.subr.mxu0 0.0
    %1876 = vmatpush1.msra.mxu0 0.0
    %1877 = vmatprep.mubr.f32.mxu0 0.0
    %1878 = vmatmul.mubr.f32.gmra.mrb[0].mxu0 %v1737
    %v1879 = vpop.f32.mrb[0].mxu0
    %v1880 = vadd.f32 0.0, %v1879
    %v1881 = vpop.f32.mrb[0].mxu0
    %1882 = vdwg.mxu0
    %v1883 = vld [vmem:[%s6] sm:$0xff]
    %v1884 = vld [vmem:[%s6 + $0x8] sm:$0xff]
    %v1885 = vld [vmem:[%s6 + $0x10] sm:$0xff]
    %v1886 = vld [vmem:[%s6 + $0x18] sm:$0xff]
    %1887 = vmatprep.subr.mxu0 0.0
    %1888 = vmatpush1.msra.mxu0 %v1883
    %1889 = vmatprep.subr.mxu0 0.0
    %1890 = vmatpush1.msra.mxu0 %v1884
    %1891 = vmatprep.subr.mxu0 0.0
    %1892 = vmatpush1.msra.mxu0 %v1885
    %1893 = vmatprep.subr.mxu0 0.0
    %1894 = vmatpush1.msra.mxu0 %v1886
    %1895 = vmatprep.subr.mxu0 0.0
    %1896 = vmatpush1.msra.mxu0 0.0
    %1897 = vmatprep.subr.mxu0 0.0
    %1898 = vmatpush1.msra.mxu0 0.0
    %1899 = vmatprep.subr.mxu0 0.0
    %1900 = vmatpush1.msra.mxu0 0.0
    %1901 = vmatprep.subr.mxu0 0.0
    %1902 = vmatpush1.msra.mxu0 0.0
    %1903 = vmatprep.subr.mxu0 0.0
    %1904 = vmatpush1.msra.mxu0 0.0
    %1905 = vmatprep.subr.mxu0 0.0
    %1906 = vmatpush1.msra.mxu0 0.0
    %1907 = vmatprep.subr.mxu0 0.0
    %1908 = vmatpush1.msra.mxu0 0.0
    %1909 = vmatprep.subr.mxu0 0.0
    %1910 = vmatpush1.msra.mxu0 0.0
    %1911 = vmatprep.subr.mxu0 0.0
    %1912 = vmatpush1.msra.mxu0 0.0
    %1913 = vmatprep.subr.mxu0 0.0
    %1914 = vmatpush1.msra.mxu0 0.0
    %1915 = vmatprep.subr.mxu0 0.0
    %1916 = vmatpush1.msra.mxu0 0.0
    %1917 = vmatprep.subr.mxu0 0.0
    %1918 = vmatpush1.msra.mxu0 0.0
    %1919 = vmatprep.subr.mxu0 0.0
    %1920 = vmatpush1.msra.mxu0 0.0
    %1921 = vmatprep.subr.mxu0 0.0
    %1922 = vmatpush1.msra.mxu0 0.0
    %1923 = vmatprep.subr.mxu0 0.0
    %1924 = vmatpush1.msra.mxu0 0.0
    %1925 = vmatprep.subr.mxu0 0.0
    %1926 = vmatpush1.msra.mxu0 0.0
    %1927 = vmatprep.subr.mxu0 0.0
    %1928 = vmatpush1.msra.mxu0 0.0
    %1929 = vmatprep.subr.mxu0 0.0
    %1930 = vmatpush1.msra.mxu0 0.0
    %1931 = vmatprep.subr.mxu0 0.0
    %1932 = vmatpush1.msra.mxu0 0.0
    %1933 = vmatprep.subr.mxu0 0.0
    %1934 = vmatpush1.msra.mxu0 0.0
    %1935 = vmatprep.subr.mxu0 0.0
    %1936 = vmatpush1.msra.mxu0 0.0
    %1937 = vmatprep.subr.mxu0 0.0
    %1938 = vmatpush1.msra.mxu0 0.0
    %1939 = vmatprep.subr.mxu0 0.0
    %1940 = vmatpush1.msra.mxu0 0.0
    %1941 = vmatprep.subr.mxu0 0.0
    %1942 = vmatpush1.msra.mxu0 0.0
    %1943 = vmatprep.subr.mxu0 0.0
    %1944 = vmatpush1.msra.mxu0 0.0
    %1945 = vmatprep.subr.mxu0 0.0
    %1946 = vmatpush1.msra.mxu0 0.0
    %1947 = vmatprep.subr.mxu0 0.0
    %1948 = vmatpush1.msra.mxu0 0.0
    %1949 = vmatprep.subr.mxu0 0.0
    %1950 = vmatpush1.msra.mxu0 0.0
    %1951 = vmatprep.mubr.f32.mxu0 0.0
    %1952 = vmatmul.mubr.f32.gmra.mrb[0].mxu0 %v1737
    %v1953 = vpop.f32.mrb[0].mxu0
    %v1954 = vadd.f32 0.0, %v1953
    %v1955 = vpop.f32.mrb[0].mxu0
    %1956 = vdwg.mxu0
    %v1957 = vld [vmem:[%s7] sm:$0xff]
    %v1958 = vld [vmem:[%s7 + $0x8] sm:$0xff]
    %v1959 = vld [vmem:[%s7 + $0x10] sm:$0xff]
    %v1960 = vld [vmem:[%s7 + $0x18] sm:$0xff]
    %1961 = vmatprep.subr.mxu0 0.0
    %1962 = vmatpush1.msra.mxu0 %v1957
    %1963 = vmatprep.subr.mxu0 0.0
    %1964 = vmatpush1.msra.mxu0 %v1958
    %1965 = vmatprep.subr.mxu0 0.0
    %1966 = vmatpush1.msra.mxu0 %v1959
    %1967 = vmatprep.subr.mxu0 0.0
    %1968 = vmatpush1.msra.mxu0 %v1960
    %1969 = vmatprep.subr.mxu0 0.0
    %1970 = vmatpush1.msra.mxu0 0.0
    %1971 = vmatprep.subr.mxu0 0.0
    %1972 = vmatpush1.msra.mxu0 0.0
    %1973 = vmatprep.subr.mxu0 0.0
    %1974 = vmatpush1.msra.mxu0 0.0
    %1975 = vmatprep.subr.mxu0 0.0
    %1976 = vmatpush1.msra.mxu0 0.0
    %1977 = vmatprep.subr.mxu0 0.0
    %1978 = vmatpush1.msra.mxu0 0.0
    %1979 = vmatprep.subr.mxu0 0.0
    %1980 = vmatpush1.msra.mxu0 0.0
    %1981 = vmatprep.subr.mxu0 0.0
    %1982 = vmatpush1.msra.mxu0 0.0
    %1983 = vmatprep.subr.mxu0 0.0
    %1984 = vmatpush1.msra.mxu0 0.0
    %1985 = vmatprep.subr.mxu0 0.0
    %1986 = vmatpush1.msra.mxu0 0.0
    %1987 = vmatprep.subr.mxu0 0.0
    %1988 = vmatpush1.msra.mxu0 0.0
    %1989 = vmatprep.subr.mxu0 0.0
    %1990 = vmatpush1.msra.mxu0 0.0
    %1991 = vmatprep.subr.mxu0 0.0
    %1992 = vmatpush1.msra.mxu0 0.0
    %1993 = vmatprep.subr.mxu0 0.0
    %1994 = vmatpush1.msra.mxu0 0.0
    %1995 = vmatprep.subr.mxu0 0.0
    %1996 = vmatpush1.msra.mxu0 0.0
    %1997 = vmatprep.subr.mxu0 0.0
    %1998 = vmatpush1.msra.mxu0 0.0
    %1999 = vmatprep.subr.mxu0 0.0
    %2000 = vmatpush1.msra.mxu0 0.0
    %2001 = vmatprep.subr.mxu0 0.0
    %2002 = vmatpush1.msra.mxu0 0.0
    %2003 = vmatprep.subr.mxu0 0.0
    %2004 = vmatpush1.msra.mxu0 0.0
    %2005 = vmatprep.subr.mxu0 0.0
    %2006 = vmatpush1.msra.mxu0 0.0
    %2007 = vmatprep.subr.mxu0 0.0
    %2008 = vmatpush1.msra.mxu0 0.0
    %2009 = vmatprep.subr.mxu0 0.0
    %2010 = vmatpush1.msra.mxu0 0.0
    %2011 = vmatprep.subr.mxu0 0.0
    %2012 = vmatpush1.msra.mxu0 0.0
    %2013 = vmatprep.subr.mxu0 0.0
    %2014 = vmatpush1.msra.mxu0 0.0
    %2015 = vmatprep.subr.mxu0 0.0
    %2016 = vmatpush1.msra.mxu0 0.0
    %2017 = vmatprep.subr.mxu0 0.0
    %2018 = vmatpush1.msra.mxu0 0.0
    %2019 = vmatprep.subr.mxu0 0.0
    %2020 = vmatpush1.msra.mxu0 0.0
    %2021 = vmatprep.subr.mxu0 0.0
    %2022 = vmatpush1.msra.mxu0 0.0
    %2023 = vmatprep.subr.mxu0 0.0
    %2024 = vmatpush1.msra.mxu0 0.0
    %2025 = vmatprep.mubr.f32.mxu0 0.0
    %2026 = vmatmul.mubr.f32.gmra.mrb[0].mxu0 %v1737
    %v2027 = vpop.f32.mrb[0].mxu0
    %v2028 = vadd.f32 0.0, %v2027
    %v2029 = vpop.f32.mrb[0].mxu0
    %2030 = vdwg.mxu0
    %v2031 = vadd.f32 %v1732, %v1806
    %v2032 = vxor.u32 %v2031, 2147483648
    %v2033 = vmul.f32 %v2032, 1.442695
    %v2034 = vpow.pop %v2033
    %v2035 = vadd.f32 %v2034, 1.0
    %v2036 = vrcp.pop %v2035
    %v2037 = vmul.f32 1.0, %v2036
    %2039 = vrot.lane.b32.xlu0 %v1880, 32
    %v2040 = vpop.permute.xlu0 %2039
    %v2042 = vadd.f32 %v1732, %v2040
    %v2043 = vxor.u32 %v2042, 2147483648
    %v2044 = vmul.f32 %v2043, 1.442695
    %v2045 = vpow.pop %v2044
    %v2046 = vadd.f32 %v2045, 1.0
    %v2047 = vrcp.pop %v2046
    %v2048 = vmul.f32 1.0, %v2047
    %2050 = vrot.lane.b32.xlu0 %v1954, 64
    %v2051 = vpop.permute.xlu0 %2050
    %v2053 = vadd.f32 %v1732, %v2051
    %v2054 = vtanh.pop %v2053
    %2056 = vrot.lane.b32.xlu0 %v2028, 96
    %v2057 = vpop.permute.xlu0 %2056
    %v2059 = vadd.f32 %v1732, %v2057
    %v2060 = vxor.u32 %v2059, 2147483648
    %v2061 = vmul.f32 %v2060, 1.442695
    %v2062 = vpow.pop %v2061
    %v2063 = vadd.f32 %v2062, 1.0
    %v2064 = vrcp.pop %v2063
    %v2065 = vmul.f32 1.0, %v2064
    %v2066 = vmul.f32 %v2048, %v1718
    %2068 = vrot.lane.b32.xlu0 %v2054, 64
    %v2069 = vpop.permute.xlu0 %2068
    %v2071 = vmul.f32 %v2037, %v2069
    %2073 = vrot.lane.b32.xlu0 %v2071, 32
    %v2074 = vpop.permute.xlu0 %2073
    %v2076 = vadd.f32 %v2066, %v2074
    %v2077 = vtanh.pop %v2076
    %2079 = vrot.lane.b32.xlu0 %v2077, 64
    %v2080 = vpop.permute.xlu0 %2079
    %v2082 = vmul.f32 %v2065, %v2080
    %2084 = vrot.lane.b32.xlu0 %v2082, 32
    %v2085 = vpop.permute.xlu0 %2084
    %2087 = vst.msk [vmem:[#allocation3 + $0x4] sm:$0x1] %vm653, %v2085
    %2088 = vst.msk [vmem:[#allocation3 + $0xb] sm:$0x2] %vm655, %v2085
    %s2089 = scalar_lea.vmem [#allocation2], 5
    %v2090 = vld [vmem:[%s2089] ss:$8 sm:$0x3]
    %v2091 = vld [vmem:[%s4] sm:$0xff]
    %v2092 = vld [vmem:[%s4 + $0x8] sm:$0xff]
    %v2093 = vld [vmem:[%s4 + $0x10] sm:$0xff]
    %v2094 = vld [vmem:[%s4 + $0x18] sm:$0xff]
    %v2095 = vsel %vm297, %v2085, 0
    %2097 = vmatprep.subr.mxu0 0.0
    %2098 = vmatpush1.msra.mxu0 %v2091
    %2099 = vmatprep.subr.mxu0 0.0
    %2100 = vmatpush1.msra.mxu0 %v2092
    %2101 = vmatprep.subr.mxu0 0.0
    %2102 = vmatpush1.msra.mxu0 %v2093
    %2103 = vmatprep.subr.mxu0 0.0
    %2104 = vmatpush1.msra.mxu0 %v2094
    %2105 = vmatprep.subr.mxu0 0.0
    %2106 = vmatpush1.msra.mxu0 0.0
    %2107 = vmatprep.subr.mxu0 0.0
    %2108 = vmatpush1.msra.mxu0 0.0
    %2109 = vmatprep.subr.mxu0 0.0
    %2110 = vmatpush1.msra.mxu0 0.0
    %2111 = vmatprep.subr.mxu0 0.0
    %2112 = vmatpush1.msra.mxu0 0.0
    %2113 = vmatprep.subr.mxu0 0.0
    %2114 = vmatpush1.msra.mxu0 0.0
    %2115 = vmatprep.subr.mxu0 0.0
    %2116 = vmatpush1.msra.mxu0 0.0
    %2117 = vmatprep.subr.mxu0 0.0
    %2118 = vmatpush1.msra.mxu0 0.0
    %2119 = vmatprep.subr.mxu0 0.0
    %2120 = vmatpush1.msra.mxu0 0.0
    %2121 = vmatprep.subr.mxu0 0.0
    %2122 = vmatpush1.msra.mxu0 0.0
    %2123 = vmatprep.subr.mxu0 0.0
    %2124 = vmatpush1.msra.mxu0 0.0
    %2125 = vmatprep.subr.mxu0 0.0
    %2126 = vmatpush1.msra.mxu0 0.0
    %2127 = vmatprep.subr.mxu0 0.0
    %2128 = vmatpush1.msra.mxu0 0.0
    %2129 = vmatprep.subr.mxu0 0.0
    %2130 = vmatpush1.msra.mxu0 0.0
    %2131 = vmatprep.subr.mxu0 0.0
    %2132 = vmatpush1.msra.mxu0 0.0
    %2133 = vmatprep.subr.mxu0 0.0
    %2134 = vmatpush1.msra.mxu0 0.0
    %2135 = vmatprep.subr.mxu0 0.0
    %2136 = vmatpush1.msra.mxu0 0.0
    %2137 = vmatprep.subr.mxu0 0.0
    %2138 = vmatpush1.msra.mxu0 0.0
    %2139 = vmatprep.subr.mxu0 0.0
    %2140 = vmatpush1.msra.mxu0 0.0
    %2141 = vmatprep.subr.mxu0 0.0
    %2142 = vmatpush1.msra.mxu0 0.0
    %2143 = vmatprep.subr.mxu0 0.0
    %2144 = vmatpush1.msra.mxu0 0.0
    %2145 = vmatprep.subr.mxu0 0.0
    %2146 = vmatpush1.msra.mxu0 0.0
    %2147 = vmatprep.subr.mxu0 0.0
    %2148 = vmatpush1.msra.mxu0 0.0
    %2149 = vmatprep.subr.mxu0 0.0
    %2150 = vmatpush1.msra.mxu0 0.0
    %2151 = vmatprep.subr.mxu0 0.0
    %2152 = vmatpush1.msra.mxu0 0.0
    %2153 = vmatprep.subr.mxu0 0.0
    %2154 = vmatpush1.msra.mxu0 0.0
    %2155 = vmatprep.subr.mxu0 0.0
    %2156 = vmatpush1.msra.mxu0 0.0
    %2157 = vmatprep.subr.mxu0 0.0
    %2158 = vmatpush1.msra.mxu0 0.0
    %2159 = vmatprep.subr.mxu0 0.0
    %2160 = vmatpush1.msra.mxu0 0.0
    %2161 = vmatprep.mubr.f32.mxu0 0.0
    %2162 = vmatmul.mubr.f32.gmra.mrb[0].mxu0 %v2095
    %v2163 = vpop.f32.mrb[0].mxu0
    %v2164 = vadd.f32 0.0, %v2163
    %v2165 = vpop.f32.mrb[0].mxu0
    %2166 = vdwg.mxu0
    %v2167 = vld [vmem:[%s5] sm:$0xff]
    %v2168 = vld [vmem:[%s5 + $0x8] sm:$0xff]
    %v2169 = vld [vmem:[%s5 + $0x10] sm:$0xff]
    %v2170 = vld [vmem:[%s5 + $0x18] sm:$0xff]
    %2171 = vmatprep.subr.mxu0 0.0
    %2172 = vmatpush1.msra.mxu0 %v2167
    %2173 = vmatprep.subr.mxu0 0.0
    %2174 = vmatpush1.msra.mxu0 %v2168
    %2175 = vmatprep.subr.mxu0 0.0
    %2176 = vmatpush1.msra.mxu0 %v2169
    %2177 = vmatprep.subr.mxu0 0.0
    %2178 = vmatpush1.msra.mxu0 %v2170
    %2179 = vmatprep.subr.mxu0 0.0
    %2180 = vmatpush1.msra.mxu0 0.0
    %2181 = vmatprep.subr.mxu0 0.0
    %2182 = vmatpush1.msra.mxu0 0.0
    %2183 = vmatprep.subr.mxu0 0.0
    %2184 = vmatpush1.msra.mxu0 0.0
    %2185 = vmatprep.subr.mxu0 0.0
    %2186 = vmatpush1.msra.mxu0 0.0
    %2187 = vmatprep.subr.mxu0 0.0
    %2188 = vmatpush1.msra.mxu0 0.0
    %2189 = vmatprep.subr.mxu0 0.0
    %2190 = vmatpush1.msra.mxu0 0.0
    %2191 = vmatprep.subr.mxu0 0.0
    %2192 = vmatpush1.msra.mxu0 0.0
    %2193 = vmatprep.subr.mxu0 0.0
    %2194 = vmatpush1.msra.mxu0 0.0
    %2195 = vmatprep.subr.mxu0 0.0
    %2196 = vmatpush1.msra.mxu0 0.0
    %2197 = vmatprep.subr.mxu0 0.0
    %2198 = vmatpush1.msra.mxu0 0.0
    %2199 = vmatprep.subr.mxu0 0.0
    %2200 = vmatpush1.msra.mxu0 0.0
    %2201 = vmatprep.subr.mxu0 0.0
    %2202 = vmatpush1.msra.mxu0 0.0
    %2203 = vmatprep.subr.mxu0 0.0
    %2204 = vmatpush1.msra.mxu0 0.0
    %2205 = vmatprep.subr.mxu0 0.0
    %2206 = vmatpush1.msra.mxu0 0.0
    %2207 = vmatprep.subr.mxu0 0.0
    %2208 = vmatpush1.msra.mxu0 0.0
    %2209 = vmatprep.subr.mxu0 0.0
    %2210 = vmatpush1.msra.mxu0 0.0
    %2211 = vmatprep.subr.mxu0 0.0
    %2212 = vmatpush1.msra.mxu0 0.0
    %2213 = vmatprep.subr.mxu0 0.0
    %2214 = vmatpush1.msra.mxu0 0.0
    %2215 = vmatprep.subr.mxu0 0.0
    %2216 = vmatpush1.msra.mxu0 0.0
    %2217 = vmatprep.subr.mxu0 0.0
    %2218 = vmatpush1.msra.mxu0 0.0
    %2219 = vmatprep.subr.mxu0 0.0
    %2220 = vmatpush1.msra.mxu0 0.0
    %2221 = vmatprep.subr.mxu0 0.0
    %2222 = vmatpush1.msra.mxu0 0.0
    %2223 = vmatprep.subr.mxu0 0.0
    %2224 = vmatpush1.msra.mxu0 0.0
    %2225 = vmatprep.subr.mxu0 0.0
    %2226 = vmatpush1.msra.mxu0 0.0
    %2227 = vmatprep.subr.mxu0 0.0
    %2228 = vmatpush1.msra.mxu0 0.0
    %2229 = vmatprep.subr.mxu0 0.0
    %2230 = vmatpush1.msra.mxu0 0.0
    %2231 = vmatprep.subr.mxu0 0.0
    %2232 = vmatpush1.msra.mxu0 0.0
    %2233 = vmatprep.subr.mxu0 0.0
    %2234 = vmatpush1.msra.mxu0 0.0
    %2235 = vmatprep.mubr.f32.mxu0 0.0
    %2236 = vmatmul.mubr.f32.gmra.mrb[0].mxu0 %v2095
    %v2237 = vpop.f32.mrb[0].mxu0
    %v2238 = vadd.f32 0.0, %v2237
    %v2239 = vpop.f32.mrb[0].mxu0
    %2240 = vdwg.mxu0
    %v2241 = vld [vmem:[%s6] sm:$0xff]
    %v2242 = vld [vmem:[%s6 + $0x8] sm:$0xff]
    %v2243 = vld [vmem:[%s6 + $0x10] sm:$0xff]
    %v2244 = vld [vmem:[%s6 + $0x18] sm:$0xff]
    %2245 = vmatprep.subr.mxu0 0.0
    %2246 = vmatpush1.msra.mxu0 %v2241
    %2247 = vmatprep.subr.mxu0 0.0
    %2248 = vmatpush1.msra.mxu0 %v2242
    %2249 = vmatprep.subr.mxu0 0.0
    %2250 = vmatpush1.msra.mxu0 %v2243
    %2251 = vmatprep.subr.mxu0 0.0
    %2252 = vmatpush1.msra.mxu0 %v2244
    %2253 = vmatprep.subr.mxu0 0.0
    %2254 = vmatpush1.msra.mxu0 0.0
    %2255 = vmatprep.subr.mxu0 0.0
    %2256 = vmatpush1.msra.mxu0 0.0
    %2257 = vmatprep.subr.mxu0 0.0
    %2258 = vmatpush1.msra.mxu0 0.0
    %2259 = vmatprep.subr.mxu0 0.0
    %2260 = vmatpush1.msra.mxu0 0.0
    %2261 = vmatprep.subr.mxu0 0.0
    %2262 = vmatpush1.msra.mxu0 0.0
    %2263 = vmatprep.subr.mxu0 0.0
    %2264 = vmatpush1.msra.mxu0 0.0
    %2265 = vmatprep.subr.mxu0 0.0
    %2266 = vmatpush1.msra.mxu0 0.0
    %2267 = vmatprep.subr.mxu0 0.0
    %2268 = vmatpush1.msra.mxu0 0.0
    %2269 = vmatprep.subr.mxu0 0.0
    %2270 = vmatpush1.msra.mxu0 0.0
    %2271 = vmatprep.subr.mxu0 0.0
    %2272 = vmatpush1.msra.mxu0 0.0
    %2273 = vmatprep.subr.mxu0 0.0
    %2274 = vmatpush1.msra.mxu0 0.0
    %2275 = vmatprep.subr.mxu0 0.0
    %2276 = vmatpush1.msra.mxu0 0.0
    %2277 = vmatprep.subr.mxu0 0.0
    %2278 = vmatpush1.msra.mxu0 0.0
    %2279 = vmatprep.subr.mxu0 0.0
    %2280 = vmatpush1.msra.mxu0 0.0
    %2281 = vmatprep.subr.mxu0 0.0
    %2282 = vmatpush1.msra.mxu0 0.0
    %2283 = vmatprep.subr.mxu0 0.0
    %2284 = vmatpush1.msra.mxu0 0.0
    %2285 = vmatprep.subr.mxu0 0.0
    %2286 = vmatpush1.msra.mxu0 0.0
    %2287 = vmatprep.subr.mxu0 0.0
    %2288 = vmatpush1.msra.mxu0 0.0
    %2289 = vmatprep.subr.mxu0 0.0
    %2290 = vmatpush1.msra.mxu0 0.0
    %2291 = vmatprep.subr.mxu0 0.0
    %2292 = vmatpush1.msra.mxu0 0.0
    %2293 = vmatprep.subr.mxu0 0.0
    %2294 = vmatpush1.msra.mxu0 0.0
    %2295 = vmatprep.subr.mxu0 0.0
    %2296 = vmatpush1.msra.mxu0 0.0
    %2297 = vmatprep.subr.mxu0 0.0
    %2298 = vmatpush1.msra.mxu0 0.0
    %2299 = vmatprep.subr.mxu0 0.0
    %2300 = vmatpush1.msra.mxu0 0.0
    %2301 = vmatprep.subr.mxu0 0.0
    %2302 = vmatpush1.msra.mxu0 0.0
    %2303 = vmatprep.subr.mxu0 0.0
    %2304 = vmatpush1.msra.mxu0 0.0
    %2305 = vmatprep.subr.mxu0 0.0
    %2306 = vmatpush1.msra.mxu0 0.0
    %2307 = vmatprep.subr.mxu0 0.0
    %2308 = vmatpush1.msra.mxu0 0.0
    %2309 = vmatprep.mubr.f32.mxu0 0.0
    %2310 = vmatmul.mubr.f32.gmra.mrb[0].mxu0 %v2095
    %v2311 = vpop.f32.mrb[0].mxu0
    %v2312 = vadd.f32 0.0, %v2311
    %v2313 = vpop.f32.mrb[0].mxu0
    %2314 = vdwg.mxu0
    %v2315 = vld [vmem:[%s7] sm:$0xff]
    %v2316 = vld [vmem:[%s7 + $0x8] sm:$0xff]
    %v2317 = vld [vmem:[%s7 + $0x10] sm:$0xff]
    %v2318 = vld [vmem:[%s7 + $0x18] sm:$0xff]
    %2319 = vmatprep.subr.mxu0 0.0
    %2320 = vmatpush1.msra.mxu0 %v2315
    %2321 = vmatprep.subr.mxu0 0.0
    %2322 = vmatpush1.msra.mxu0 %v2316
    %2323 = vmatprep.subr.mxu0 0.0
    %2324 = vmatpush1.msra.mxu0 %v2317
    %2325 = vmatprep.subr.mxu0 0.0
    %2326 = vmatpush1.msra.mxu0 %v2318
    %2327 = vmatprep.subr.mxu0 0.0
    %2328 = vmatpush1.msra.mxu0 0.0
    %2329 = vmatprep.subr.mxu0 0.0
    %2330 = vmatpush1.msra.mxu0 0.0
    %2331 = vmatprep.subr.mxu0 0.0
    %2332 = vmatpush1.msra.mxu0 0.0
    %2333 = vmatprep.subr.mxu0 0.0
    %2334 = vmatpush1.msra.mxu0 0.0
    %2335 = vmatprep.subr.mxu0 0.0
    %2336 = vmatpush1.msra.mxu0 0.0
    %2337 = vmatprep.subr.mxu0 0.0
    %2338 = vmatpush1.msra.mxu0 0.0
    %2339 = vmatprep.subr.mxu0 0.0
    %2340 = vmatpush1.msra.mxu0 0.0
    %2341 = vmatprep.subr.mxu0 0.0
    %2342 = vmatpush1.msra.mxu0 0.0
    %2343 = vmatprep.subr.mxu0 0.0
    %2344 = vmatpush1.msra.mxu0 0.0
    %2345 = vmatprep.subr.mxu0 0.0
    %2346 = vmatpush1.msra.mxu0 0.0
    %2347 = vmatprep.subr.mxu0 0.0
    %2348 = vmatpush1.msra.mxu0 0.0
    %2349 = vmatprep.subr.mxu0 0.0
    %2350 = vmatpush1.msra.mxu0 0.0
    %2351 = vmatprep.subr.mxu0 0.0
    %2352 = vmatpush1.msra.mxu0 0.0
    %2353 = vmatprep.subr.mxu0 0.0
    %2354 = vmatpush1.msra.mxu0 0.0
    %2355 = vmatprep.subr.mxu0 0.0
    %2356 = vmatpush1.msra.mxu0 0.0
    %2357 = vmatprep.subr.mxu0 0.0
    %2358 = vmatpush1.msra.mxu0 0.0
    %2359 = vmatprep.subr.mxu0 0.0
    %2360 = vmatpush1.msra.mxu0 0.0
    %2361 = vmatprep.subr.mxu0 0.0
    %2362 = vmatpush1.msra.mxu0 0.0
    %2363 = vmatprep.subr.mxu0 0.0
    %2364 = vmatpush1.msra.mxu0 0.0
    %2365 = vmatprep.subr.mxu0 0.0
    %2366 = vmatpush1.msra.mxu0 0.0
    %2367 = vmatprep.subr.mxu0 0.0
    %2368 = vmatpush1.msra.mxu0 0.0
    %2369 = vmatprep.subr.mxu0 0.0
    %2370 = vmatpush1.msra.mxu0 0.0
    %2371 = vmatprep.subr.mxu0 0.0
    %2372 = vmatpush1.msra.mxu0 0.0
    %2373 = vmatprep.subr.mxu0 0.0
    %2374 = vmatpush1.msra.mxu0 0.0
    %2375 = vmatprep.subr.mxu0 0.0
    %2376 = vmatpush1.msra.mxu0 0.0
    %2377 = vmatprep.subr.mxu0 0.0
    %2378 = vmatpush1.msra.mxu0 0.0
    %2379 = vmatprep.subr.mxu0 0.0
    %2380 = vmatpush1.msra.mxu0 0.0
    %2381 = vmatprep.subr.mxu0 0.0
    %2382 = vmatpush1.msra.mxu0 0.0
    %2383 = vmatprep.mubr.f32.mxu0 0.0
    %2384 = vmatmul.mubr.f32.gmra.mrb[0].mxu0 %v2095
    %v2385 = vpop.f32.mrb[0].mxu0
    %v2386 = vadd.f32 0.0, %v2385
    %v2387 = vpop.f32.mrb[0].mxu0
    %2388 = vdwg.mxu0
    %v2389 = vadd.f32 %v2090, %v2164
    %v2390 = vxor.u32 %v2389, 2147483648
    %v2391 = vmul.f32 %v2390, 1.442695
    %v2392 = vpow.pop %v2391
    %v2393 = vadd.f32 %v2392, 1.0
    %v2394 = vrcp.pop %v2393
    %v2395 = vmul.f32 1.0, %v2394
    %2397 = vrot.lane.b32.xlu0 %v2238, 32
    %v2398 = vpop.permute.xlu0 %2397
    %v2400 = vadd.f32 %v2090, %v2398
    %v2401 = vxor.u32 %v2400, 2147483648
    %v2402 = vmul.f32 %v2401, 1.442695
    %v2403 = vpow.pop %v2402
    %v2404 = vadd.f32 %v2403, 1.0
    %v2405 = vrcp.pop %v2404
    %v2406 = vmul.f32 1.0, %v2405
    %2408 = vrot.lane.b32.xlu0 %v2312, 64
    %v2409 = vpop.permute.xlu0 %2408
    %v2411 = vadd.f32 %v2090, %v2409
    %v2412 = vtanh.pop %v2411
    %2414 = vrot.lane.b32.xlu0 %v2386, 96
    %v2415 = vpop.permute.xlu0 %2414
    %v2417 = vadd.f32 %v2090, %v2415
    %v2418 = vxor.u32 %v2417, 2147483648
    %v2419 = vmul.f32 %v2418, 1.442695
    %v2420 = vpow.pop %v2419
    %v2421 = vadd.f32 %v2420, 1.0
    %v2422 = vrcp.pop %v2421
    %v2423 = vmul.f32 1.0, %v2422
    %v2424 = vmul.f32 %v2406, %v2076
    %2426 = vrot.lane.b32.xlu0 %v2412, 64
    %v2427 = vpop.permute.xlu0 %2426
    %v2429 = vmul.f32 %v2395, %v2427
    %2431 = vrot.lane.b32.xlu0 %v2429, 32
    %v2432 = vpop.permute.xlu0 %2431
    %v2434 = vadd.f32 %v2424, %v2432
    %v2435 = vtanh.pop %v2434
    %2437 = vrot.lane.b32.xlu0 %v2435, 64
    %v2438 = vpop.permute.xlu0 %2437
    %v2440 = vmul.f32 %v2423, %v2438
    %2442 = vrot.lane.b32.xlu0 %v2440, 32
    %v2443 = vpop.permute.xlu0 %2442
    %2445 = vst.msk [vmem:[#allocation3 + $0x5] sm:$0x1] %vm653, %v2443
    %2446 = vst.msk [vmem:[#allocation3 + $0xc] sm:$0x2] %vm655, %v2443
    %s2447 = scalar_lea.vmem [#allocation2], 6
    %v2448 = vld [vmem:[%s2447] ss:$8 sm:$0x3]
    %v2449 = vld [vmem:[%s4] sm:$0xff]
    %v2450 = vld [vmem:[%s4 + $0x8] sm:$0xff]
    %v2451 = vld [vmem:[%s4 + $0x10] sm:$0xff]
    %v2452 = vld [vmem:[%s4 + $0x18] sm:$0xff]
    %v2453 = vsel %vm297, %v2443, 0
    %2455 = vmatprep.subr.mxu0 0.0
    %2456 = vmatpush1.msra.mxu0 %v2449
    %2457 = vmatprep.subr.mxu0 0.0
    %2458 = vmatpush1.msra.mxu0 %v2450
    %2459 = vmatprep.subr.mxu0 0.0
    %2460 = vmatpush1.msra.mxu0 %v2451
    %2461 = vmatprep.subr.mxu0 0.0
    %2462 = vmatpush1.msra.mxu0 %v2452
    %2463 = vmatprep.subr.mxu0 0.0
    %2464 = vmatpush1.msra.mxu0 0.0
    %2465 = vmatprep.subr.mxu0 0.0
    %2466 = vmatpush1.msra.mxu0 0.0
    %2467 = vmatprep.subr.mxu0 0.0
    %2468 = vmatpush1.msra.mxu0 0.0
    %2469 = vmatprep.subr.mxu0 0.0
    %2470 = vmatpush1.msra.mxu0 0.0
    %2471 = vmatprep.subr.mxu0 0.0
    %2472 = vmatpush1.msra.mxu0 0.0
    %2473 = vmatprep.subr.mxu0 0.0
    %2474 = vmatpush1.msra.mxu0 0.0
    %2475 = vmatprep.subr.mxu0 0.0
    %2476 = vmatpush1.msra.mxu0 0.0
    %2477 = vmatprep.subr.mxu0 0.0
    %2478 = vmatpush1.msra.mxu0 0.0
    %2479 = vmatprep.subr.mxu0 0.0
    %2480 = vmatpush1.msra.mxu0 0.0
    %2481 = vmatprep.subr.mxu0 0.0
    %2482 = vmatpush1.msra.mxu0 0.0
    %2483 = vmatprep.subr.mxu0 0.0
    %2484 = vmatpush1.msra.mxu0 0.0
    %2485 = vmatprep.subr.mxu0 0.0
    %2486 = vmatpush1.msra.mxu0 0.0
    %2487 = vmatprep.subr.mxu0 0.0
    %2488 = vmatpush1.msra.mxu0 0.0
    %2489 = vmatprep.subr.mxu0 0.0
    %2490 = vmatpush1.msra.mxu0 0.0
    %2491 = vmatprep.subr.mxu0 0.0
    %2492 = vmatpush1.msra.mxu0 0.0
    %2493 = vmatprep.subr.mxu0 0.0
    %2494 = vmatpush1.msra.mxu0 0.0
    %2495 = vmatprep.subr.mxu0 0.0
    %2496 = vmatpush1.msra.mxu0 0.0
    %2497 = vmatprep.subr.mxu0 0.0
    %2498 = vmatpush1.msra.mxu0 0.0
    %2499 = vmatprep.subr.mxu0 0.0
    %2500 = vmatpush1.msra.mxu0 0.0
    %2501 = vmatprep.subr.mxu0 0.0
    %2502 = vmatpush1.msra.mxu0 0.0
    %2503 = vmatprep.subr.mxu0 0.0
    %2504 = vmatpush1.msra.mxu0 0.0
    %2505 = vmatprep.subr.mxu0 0.0
    %2506 = vmatpush1.msra.mxu0 0.0
    %2507 = vmatprep.subr.mxu0 0.0
    %2508 = vmatpush1.msra.mxu0 0.0
    %2509 = vmatprep.subr.mxu0 0.0
    %2510 = vmatpush1.msra.mxu0 0.0
    %2511 = vmatprep.subr.mxu0 0.0
    %2512 = vmatpush1.msra.mxu0 0.0
    %2513 = vmatprep.subr.mxu0 0.0
    %2514 = vmatpush1.msra.mxu0 0.0
    %2515 = vmatprep.subr.mxu0 0.0
    %2516 = vmatpush1.msra.mxu0 0.0
    %2517 = vmatprep.subr.mxu0 0.0
    %2518 = vmatpush1.msra.mxu0 0.0
    %2519 = vmatprep.mubr.f32.mxu0 0.0
    %2520 = vmatmul.mubr.f32.gmra.mrb[0].mxu0 %v2453
    %v2521 = vpop.f32.mrb[0].mxu0
    %v2522 = vadd.f32 0.0, %v2521
    %v2523 = vpop.f32.mrb[0].mxu0
    %2524 = vdwg.mxu0
    %v2525 = vld [vmem:[%s5] sm:$0xff]
    %v2526 = vld [vmem:[%s5 + $0x8] sm:$0xff]
    %v2527 = vld [vmem:[%s5 + $0x10] sm:$0xff]
    %v2528 = vld [vmem:[%s5 + $0x18] sm:$0xff]
    %2529 = vmatprep.subr.mxu0 0.0
    %2530 = vmatpush1.msra.mxu0 %v2525
    %2531 = vmatprep.subr.mxu0 0.0
    %2532 = vmatpush1.msra.mxu0 %v2526
    %2533 = vmatprep.subr.mxu0 0.0
    %2534 = vmatpush1.msra.mxu0 %v2527
    %2535 = vmatprep.subr.mxu0 0.0
    %2536 = vmatpush1.msra.mxu0 %v2528
    %2537 = vmatprep.subr.mxu0 0.0
    %2538 = vmatpush1.msra.mxu0 0.0
    %2539 = vmatprep.subr.mxu0 0.0
    %2540 = vmatpush1.msra.mxu0 0.0
    %2541 = vmatprep.subr.mxu0 0.0
    %2542 = vmatpush1.msra.mxu0 0.0
    %2543 = vmatprep.subr.mxu0 0.0
    %2544 = vmatpush1.msra.mxu0 0.0
    %2545 = vmatprep.subr.mxu0 0.0
    %2546 = vmatpush1.msra.mxu0 0.0
    %2547 = vmatprep.subr.mxu0 0.0
    %2548 = vmatpush1.msra.mxu0 0.0
    %2549 = vmatprep.subr.mxu0 0.0
    %2550 = vmatpush1.msra.mxu0 0.0
    %2551 = vmatprep.subr.mxu0 0.0
    %2552 = vmatpush1.msra.mxu0 0.0
    %2553 = vmatprep.subr.mxu0 0.0
    %2554 = vmatpush1.msra.mxu0 0.0
    %2555 = vmatprep.subr.mxu0 0.0
    %2556 = vmatpush1.msra.mxu0 0.0
    %2557 = vmatprep.subr.mxu0 0.0
    %2558 = vmatpush1.msra.mxu0 0.0
    %2559 = vmatprep.subr.mxu0 0.0
    %2560 = vmatpush1.msra.mxu0 0.0
    %2561 = vmatprep.subr.mxu0 0.0
    %2562 = vmatpush1.msra.mxu0 0.0
    %2563 = vmatprep.subr.mxu0 0.0
    %2564 = vmatpush1.msra.mxu0 0.0
    %2565 = vmatprep.subr.mxu0 0.0
    %2566 = vmatpush1.msra.mxu0 0.0
    %2567 = vmatprep.subr.mxu0 0.0
    %2568 = vmatpush1.msra.mxu0 0.0
    %2569 = vmatprep.subr.mxu0 0.0
    %2570 = vmatpush1.msra.mxu0 0.0
    %2571 = vmatprep.subr.mxu0 0.0
    %2572 = vmatpush1.msra.mxu0 0.0
    %2573 = vmatprep.subr.mxu0 0.0
    %2574 = vmatpush1.msra.mxu0 0.0
    %2575 = vmatprep.subr.mxu0 0.0
    %2576 = vmatpush1.msra.mxu0 0.0
    %2577 = vmatprep.subr.mxu0 0.0
    %2578 = vmatpush1.msra.mxu0 0.0
    %2579 = vmatprep.subr.mxu0 0.0
    %2580 = vmatpush1.msra.mxu0 0.0
    %2581 = vmatprep.subr.mxu0 0.0
    %2582 = vmatpush1.msra.mxu0 0.0
    %2583 = vmatprep.subr.mxu0 0.0
    %2584 = vmatpush1.msra.mxu0 0.0
    %2585 = vmatprep.subr.mxu0 0.0
    %2586 = vmatpush1.msra.mxu0 0.0
    %2587 = vmatprep.subr.mxu0 0.0
    %2588 = vmatpush1.msra.mxu0 0.0
    %2589 = vmatprep.subr.mxu0 0.0
    %2590 = vmatpush1.msra.mxu0 0.0
    %2591 = vmatprep.subr.mxu0 0.0
    %2592 = vmatpush1.msra.mxu0 0.0
    %2593 = vmatprep.mubr.f32.mxu0 0.0
    %2594 = vmatmul.mubr.f32.gmra.mrb[0].mxu0 %v2453
    %v2595 = vpop.f32.mrb[0].mxu0
    %v2596 = vadd.f32 0.0, %v2595
    %v2597 = vpop.f32.mrb[0].mxu0
    %2598 = vdwg.mxu0
    %v2599 = vld [vmem:[%s6] sm:$0xff]
    %v2600 = vld [vmem:[%s6 + $0x8] sm:$0xff]
    %v2601 = vld [vmem:[%s6 + $0x10] sm:$0xff]
    %v2602 = vld [vmem:[%s6 + $0x18] sm:$0xff]
    %2603 = vmatprep.subr.mxu0 0.0
    %2604 = vmatpush1.msra.mxu0 %v2599
    %2605 = vmatprep.subr.mxu0 0.0
    %2606 = vmatpush1.msra.mxu0 %v2600
    %2607 = vmatprep.subr.mxu0 0.0
    %2608 = vmatpush1.msra.mxu0 %v2601
    %2609 = vmatprep.subr.mxu0 0.0
    %2610 = vmatpush1.msra.mxu0 %v2602
    %2611 = vmatprep.subr.mxu0 0.0
    %2612 = vmatpush1.msra.mxu0 0.0
    %2613 = vmatprep.subr.mxu0 0.0
    %2614 = vmatpush1.msra.mxu0 0.0
    %2615 = vmatprep.subr.mxu0 0.0
    %2616 = vmatpush1.msra.mxu0 0.0
    %2617 = vmatprep.subr.mxu0 0.0
    %2618 = vmatpush1.msra.mxu0 0.0
    %2619 = vmatprep.subr.mxu0 0.0
    %2620 = vmatpush1.msra.mxu0 0.0
    %2621 = vmatprep.subr.mxu0 0.0
    %2622 = vmatpush1.msra.mxu0 0.0
    %2623 = vmatprep.subr.mxu0 0.0
    %2624 = vmatpush1.msra.mxu0 0.0
    %2625 = vmatprep.subr.mxu0 0.0
    %2626 = vmatpush1.msra.mxu0 0.0
    %2627 = vmatprep.subr.mxu0 0.0
    %2628 = vmatpush1.msra.mxu0 0.0
    %2629 = vmatprep.subr.mxu0 0.0
    %2630 = vmatpush1.msra.mxu0 0.0
    %2631 = vmatprep.subr.mxu0 0.0
    %2632 = vmatpush1.msra.mxu0 0.0
    %2633 = vmatprep.subr.mxu0 0.0
    %2634 = vmatpush1.msra.mxu0 0.0
    %2635 = vmatprep.subr.mxu0 0.0
    %2636 = vmatpush1.msra.mxu0 0.0
    %2637 = vmatprep.subr.mxu0 0.0
    %2638 = vmatpush1.msra.mxu0 0.0
    %2639 = vmatprep.subr.mxu0 0.0
    %2640 = vmatpush1.msra.mxu0 0.0
    %2641 = vmatprep.subr.mxu0 0.0
    %2642 = vmatpush1.msra.mxu0 0.0
    %2643 = vmatprep.subr.mxu0 0.0
    %2644 = vmatpush1.msra.mxu0 0.0
    %2645 = vmatprep.subr.mxu0 0.0
    %2646 = vmatpush1.msra.mxu0 0.0
    %2647 = vmatprep.subr.mxu0 0.0
    %2648 = vmatpush1.msra.mxu0 0.0
    %2649 = vmatprep.subr.mxu0 0.0
    %2650 = vmatpush1.msra.mxu0 0.0
    %2651 = vmatprep.subr.mxu0 0.0
    %2652 = vmatpush1.msra.mxu0 0.0
    %2653 = vmatprep.subr.mxu0 0.0
    %2654 = vmatpush1.msra.mxu0 0.0
    %2655 = vmatprep.subr.mxu0 0.0
    %2656 = vmatpush1.msra.mxu0 0.0
    %2657 = vmatprep.subr.mxu0 0.0
    %2658 = vmatpush1.msra.mxu0 0.0
    %2659 = vmatprep.subr.mxu0 0.0
    %2660 = vmatpush1.msra.mxu0 0.0
    %2661 = vmatprep.subr.mxu0 0.0
    %2662 = vmatpush1.msra.mxu0 0.0
    %2663 = vmatprep.subr.mxu0 0.0
    %2664 = vmatpush1.msra.mxu0 0.0
    %2665 = vmatprep.subr.mxu0 0.0
    %2666 = vmatpush1.msra.mxu0 0.0
    %2667 = vmatprep.mubr.f32.mxu0 0.0
    %2668 = vmatmul.mubr.f32.gmra.mrb[0].mxu0 %v2453
    %v2669 = vpop.f32.mrb[0].mxu0
    %v2670 = vadd.f32 0.0, %v2669
    %v2671 = vpop.f32.mrb[0].mxu0
    %2672 = vdwg.mxu0
    %v2673 = vld [vmem:[%s7] sm:$0xff]
    %v2674 = vld [vmem:[%s7 + $0x8] sm:$0xff]
    %v2675 = vld [vmem:[%s7 + $0x10] sm:$0xff]
    %v2676 = vld [vmem:[%s7 + $0x18] sm:$0xff]
    %2677 = vmatprep.subr.mxu0 0.0
    %2678 = vmatpush1.msra.mxu0 %v2673
    %2679 = vmatprep.subr.mxu0 0.0
    %2680 = vmatpush1.msra.mxu0 %v2674
    %2681 = vmatprep.subr.mxu0 0.0
    %2682 = vmatpush1.msra.mxu0 %v2675
    %2683 = vmatprep.subr.mxu0 0.0
    %2684 = vmatpush1.msra.mxu0 %v2676
    %2685 = vmatprep.subr.mxu0 0.0
    %2686 = vmatpush1.msra.mxu0 0.0
    %2687 = vmatprep.subr.mxu0 0.0
    %2688 = vmatpush1.msra.mxu0 0.0
    %2689 = vmatprep.subr.mxu0 0.0
    %2690 = vmatpush1.msra.mxu0 0.0
    %2691 = vmatprep.subr.mxu0 0.0
    %2692 = vmatpush1.msra.mxu0 0.0
    %2693 = vmatprep.subr.mxu0 0.0
    %2694 = vmatpush1.msra.mxu0 0.0
    %2695 = vmatprep.subr.mxu0 0.0
    %2696 = vmatpush1.msra.mxu0 0.0
    %2697 = vmatprep.subr.mxu0 0.0
    %2698 = vmatpush1.msra.mxu0 0.0
    %2699 = vmatprep.subr.mxu0 0.0
    %2700 = vmatpush1.msra.mxu0 0.0
    %2701 = vmatprep.subr.mxu0 0.0
    %2702 = vmatpush1.msra.mxu0 0.0
    %2703 = vmatprep.subr.mxu0 0.0
    %2704 = vmatpush1.msra.mxu0 0.0
    %2705 = vmatprep.subr.mxu0 0.0
    %2706 = vmatpush1.msra.mxu0 0.0
    %2707 = vmatprep.subr.mxu0 0.0
    %2708 = vmatpush1.msra.mxu0 0.0
    %2709 = vmatprep.subr.mxu0 0.0
    %2710 = vmatpush1.msra.mxu0 0.0
    %2711 = vmatprep.subr.mxu0 0.0
    %2712 = vmatpush1.msra.mxu0 0.0
    %2713 = vmatprep.subr.mxu0 0.0
    %2714 = vmatpush1.msra.mxu0 0.0
    %2715 = vmatprep.subr.mxu0 0.0
    %2716 = vmatpush1.msra.mxu0 0.0
    %2717 = vmatprep.subr.mxu0 0.0
    %2718 = vmatpush1.msra.mxu0 0.0
    %2719 = vmatprep.subr.mxu0 0.0
    %2720 = vmatpush1.msra.mxu0 0.0
    %2721 = vmatprep.subr.mxu0 0.0
    %2722 = vmatpush1.msra.mxu0 0.0
    %2723 = vmatprep.subr.mxu0 0.0
    %2724 = vmatpush1.msra.mxu0 0.0
    %2725 = vmatprep.subr.mxu0 0.0
    %2726 = vmatpush1.msra.mxu0 0.0
    %2727 = vmatprep.subr.mxu0 0.0
    %2728 = vmatpush1.msra.mxu0 0.0
    %2729 = vmatprep.subr.mxu0 0.0
    %2730 = vmatpush1.msra.mxu0 0.0
    %2731 = vmatprep.subr.mxu0 0.0
    %2732 = vmatpush1.msra.mxu0 0.0
    %2733 = vmatprep.subr.mxu0 0.0
    %2734 = vmatpush1.msra.mxu0 0.0
    %2735 = vmatprep.subr.mxu0 0.0
    %2736 = vmatpush1.msra.mxu0 0.0
    %2737 = vmatprep.subr.mxu0 0.0
    %2738 = vmatpush1.msra.mxu0 0.0
    %2739 = vmatprep.subr.mxu0 0.0
    %2740 = vmatpush1.msra.mxu0 0.0
    %2741 = vmatprep.mubr.f32.mxu0 0.0
    %2742 = vmatmul.mubr.f32.gmra.mrb[0].mxu0 %v2453
    %v2743 = vpop.f32.mrb[0].mxu0
    %v2744 = vadd.f32 0.0, %v2743
    %v2745 = vpop.f32.mrb[0].mxu0
    %2746 = vdwg.mxu0
    %v2747 = vadd.f32 %v2448, %v2522
    %v2748 = vxor.u32 %v2747, 2147483648
    %v2749 = vmul.f32 %v2748, 1.442695
    %v2750 = vpow.pop %v2749
    %v2751 = vadd.f32 %v2750, 1.0
    %v2752 = vrcp.pop %v2751
    %v2753 = vmul.f32 1.0, %v2752
    %2755 = vrot.lane.b32.xlu0 %v2596, 32
    %v2756 = vpop.permute.xlu0 %2755
    %v2758 = vadd.f32 %v2448, %v2756
    %v2759 = vxor.u32 %v2758, 2147483648
    %v2760 = vmul.f32 %v2759, 1.442695
    %v2761 = vpow.pop %v2760
    %v2762 = vadd.f32 %v2761, 1.0
    %v2763 = vrcp.pop %v2762
    %v2764 = vmul.f32 1.0, %v2763
    %2766 = vrot.lane.b32.xlu0 %v2670, 64
    %v2767 = vpop.permute.xlu0 %2766
    %v2769 = vadd.f32 %v2448, %v2767
    %v2770 = vtanh.pop %v2769
    %2772 = vrot.lane.b32.xlu0 %v2744, 96
    %v2773 = vpop.permute.xlu0 %2772
    %v2775 = vadd.f32 %v2448, %v2773
    %v2776 = vxor.u32 %v2775, 2147483648
    %v2777 = vmul.f32 %v2776, 1.442695
    %v2778 = vpow.pop %v2777
    %v2779 = vadd.f32 %v2778, 1.0
    %v2780 = vrcp.pop %v2779
    %v2781 = vmul.f32 1.0, %v2780
    %v2782 = vmul.f32 %v2764, %v2434
    %2784 = vrot.lane.b32.xlu0 %v2770, 64
    %v2785 = vpop.permute.xlu0 %2784
    %v2787 = vmul.f32 %v2753, %v2785
    %2789 = vrot.lane.b32.xlu0 %v2787, 32
    %v2790 = vpop.permute.xlu0 %2789
    %v2792 = vadd.f32 %v2782, %v2790
    %v2793 = vtanh.pop %v2792
    %2795 = vrot.lane.b32.xlu0 %v2793, 64
    %v2796 = vpop.permute.xlu0 %2795
    %v2798 = vmul.f32 %v2781, %v2796
    %2800 = vrot.lane.b32.xlu0 %v2798, 32
    %v2801 = vpop.permute.xlu0 %2800
    %2803 = vst.msk [vmem:[#allocation3 + $0x6] sm:$0x1] %vm653, %v2801
    %2804 = vst.msk [vmem:[#allocation3 + $0xd] sm:$0x2] %vm655, %v2801
    %s2805 = scalar_lea.vmem [#allocation2], 7
    %v2806 = vld [vmem:[%s2805] ss:$8 sm:$0x3]
    %v2807 = vld [vmem:[%s4] sm:$0xff]
    %v2808 = vld [vmem:[%s4 + $0x8] sm:$0xff]
    %v2809 = vld [vmem:[%s4 + $0x10] sm:$0xff]
    %v2810 = vld [vmem:[%s4 + $0x18] sm:$0xff]
    %v2811 = vsel %vm297, %v2801, 0
    %2813 = vmatprep.subr.mxu0 0.0
    %2814 = vmatpush1.msra.mxu0 %v2807
    %2815 = vmatprep.subr.mxu0 0.0
    %2816 = vmatpush1.msra.mxu0 %v2808
    %2817 = vmatprep.subr.mxu0 0.0
    %2818 = vmatpush1.msra.mxu0 %v2809
    %2819 = vmatprep.subr.mxu0 0.0
    %2820 = vmatpush1.msra.mxu0 %v2810
    %2821 = vmatprep.subr.mxu0 0.0
    %2822 = vmatpush1.msra.mxu0 0.0
    %2823 = vmatprep.subr.mxu0 0.0
    %2824 = vmatpush1.msra.mxu0 0.0
    %2825 = vmatprep.subr.mxu0 0.0
    %2826 = vmatpush1.msra.mxu0 0.0
    %2827 = vmatprep.subr.mxu0 0.0
    %2828 = vmatpush1.msra.mxu0 0.0
    %2829 = vmatprep.subr.mxu0 0.0
    %2830 = vmatpush1.msra.mxu0 0.0
    %2831 = vmatprep.subr.mxu0 0.0
    %2832 = vmatpush1.msra.mxu0 0.0
    %2833 = vmatprep.subr.mxu0 0.0
    %2834 = vmatpush1.msra.mxu0 0.0
    %2835 = vmatprep.subr.mxu0 0.0
    %2836 = vmatpush1.msra.mxu0 0.0
    %2837 = vmatprep.subr.mxu0 0.0
    %2838 = vmatpush1.msra.mxu0 0.0
    %2839 = vmatprep.subr.mxu0 0.0
    %2840 = vmatpush1.msra.mxu0 0.0
    %2841 = vmatprep.subr.mxu0 0.0
    %2842 = vmatpush1.msra.mxu0 0.0
    %2843 = vmatprep.subr.mxu0 0.0
    %2844 = vmatpush1.msra.mxu0 0.0
    %2845 = vmatprep.subr.mxu0 0.0
    %2846 = vmatpush1.msra.mxu0 0.0
    %2847 = vmatprep.subr.mxu0 0.0
    %2848 = vmatpush1.msra.mxu0 0.0
    %2849 = vmatprep.subr.mxu0 0.0
    %2850 = vmatpush1.msra.mxu0 0.0
    %2851 = vmatprep.subr.mxu0 0.0
    %2852 = vmatpush1.msra.mxu0 0.0
    %2853 = vmatprep.subr.mxu0 0.0
    %2854 = vmatpush1.msra.mxu0 0.0
    %2855 = vmatprep.subr.mxu0 0.0
    %2856 = vmatpush1.msra.mxu0 0.0
    %2857 = vmatprep.subr.mxu0 0.0
    %2858 = vmatpush1.msra.mxu0 0.0
    %2859 = vmatprep.subr.mxu0 0.0
    %2860 = vmatpush1.msra.mxu0 0.0
    %2861 = vmatprep.subr.mxu0 0.0
    %2862 = vmatpush1.msra.mxu0 0.0
    %2863 = vmatprep.subr.mxu0 0.0
    %2864 = vmatpush1.msra.mxu0 0.0
    %2865 = vmatprep.subr.mxu0 0.0
    %2866 = vmatpush1.msra.mxu0 0.0
    %2867 = vmatprep.subr.mxu0 0.0
    %2868 = vmatpush1.msra.mxu0 0.0
    %2869 = vmatprep.subr.mxu0 0.0
    %2870 = vmatpush1.msra.mxu0 0.0
    %2871 = vmatprep.subr.mxu0 0.0
    %2872 = vmatpush1.msra.mxu0 0.0
    %2873 = vmatprep.subr.mxu0 0.0
    %2874 = vmatpush1.msra.mxu0 0.0
    %2875 = vmatprep.subr.mxu0 0.0
    %2876 = vmatpush1.msra.mxu0 0.0
    %2877 = vmatprep.mubr.f32.mxu0 0.0
    %2878 = vmatmul.mubr.f32.gmra.mrb[0].mxu0 %v2811
    %v2879 = vpop.f32.mrb[0].mxu0
    %v2880 = vadd.f32 0.0, %v2879
    %v2881 = vpop.f32.mrb[0].mxu0
    %2882 = vdwg.mxu0
    %v2883 = vld [vmem:[%s5] sm:$0xff]
    %v2884 = vld [vmem:[%s5 + $0x8] sm:$0xff]
    %v2885 = vld [vmem:[%s5 + $0x10] sm:$0xff]
    %v2886 = vld [vmem:[%s5 + $0x18] sm:$0xff]
    %2887 = vmatprep.subr.mxu0 0.0
    %2888 = vmatpush1.msra.mxu0 %v2883
    %2889 = vmatprep.subr.mxu0 0.0
    %2890 = vmatpush1.msra.mxu0 %v2884
    %2891 = vmatprep.subr.mxu0 0.0
    %2892 = vmatpush1.msra.mxu0 %v2885
    %2893 = vmatprep.subr.mxu0 0.0
    %2894 = vmatpush1.msra.mxu0 %v2886
    %2895 = vmatprep.subr.mxu0 0.0
    %2896 = vmatpush1.msra.mxu0 0.0
    %2897 = vmatprep.subr.mxu0 0.0
    %2898 = vmatpush1.msra.mxu0 0.0
    %2899 = vmatprep.subr.mxu0 0.0
    %2900 = vmatpush1.msra.mxu0 0.0
    %2901 = vmatprep.subr.mxu0 0.0
    %2902 = vmatpush1.msra.mxu0 0.0
    %2903 = vmatprep.subr.mxu0 0.0
    %2904 = vmatpush1.msra.mxu0 0.0
    %2905 = vmatprep.subr.mxu0 0.0
    %2906 = vmatpush1.msra.mxu0 0.0
    %2907 = vmatprep.subr.mxu0 0.0
    %2908 = vmatpush1.msra.mxu0 0.0
    %2909 = vmatprep.subr.mxu0 0.0
    %2910 = vmatpush1.msra.mxu0 0.0
    %2911 = vmatprep.subr.mxu0 0.0
    %2912 = vmatpush1.msra.mxu0 0.0
    %2913 = vmatprep.subr.mxu0 0.0
    %2914 = vmatpush1.msra.mxu0 0.0
    %2915 = vmatprep.subr.mxu0 0.0
    %2916 = vmatpush1.msra.mxu0 0.0
    %2917 = vmatprep.subr.mxu0 0.0
    %2918 = vmatpush1.msra.mxu0 0.0
    %2919 = vmatprep.subr.mxu0 0.0
    %2920 = vmatpush1.msra.mxu0 0.0
    %2921 = vmatprep.subr.mxu0 0.0
    %2922 = vmatpush1.msra.mxu0 0.0
    %2923 = vmatprep.subr.mxu0 0.0
    %2924 = vmatpush1.msra.mxu0 0.0
    %2925 = vmatprep.subr.mxu0 0.0
    %2926 = vmatpush1.msra.mxu0 0.0
    %2927 = vmatprep.subr.mxu0 0.0
    %2928 = vmatpush1.msra.mxu0 0.0
    %2929 = vmatprep.subr.mxu0 0.0
    %2930 = vmatpush1.msra.mxu0 0.0
    %2931 = vmatprep.subr.mxu0 0.0
    %2932 = vmatpush1.msra.mxu0 0.0
    %2933 = vmatprep.subr.mxu0 0.0
    %2934 = vmatpush1.msra.mxu0 0.0
    %2935 = vmatprep.subr.mxu0 0.0
    %2936 = vmatpush1.msra.mxu0 0.0
    %2937 = vmatprep.subr.mxu0 0.0
    %2938 = vmatpush1.msra.mxu0 0.0
    %2939 = vmatprep.subr.mxu0 0.0
    %2940 = vmatpush1.msra.mxu0 0.0
    %2941 = vmatprep.subr.mxu0 0.0
    %2942 = vmatpush1.msra.mxu0 0.0
    %2943 = vmatprep.subr.mxu0 0.0
    %2944 = vmatpush1.msra.mxu0 0.0
    %2945 = vmatprep.subr.mxu0 0.0
    %2946 = vmatpush1.msra.mxu0 0.0
    %2947 = vmatprep.subr.mxu0 0.0
    %2948 = vmatpush1.msra.mxu0 0.0
    %2949 = vmatprep.subr.mxu0 0.0
    %2950 = vmatpush1.msra.mxu0 0.0
    %2951 = vmatprep.mubr.f32.mxu0 0.0
    %2952 = vmatmul.mubr.f32.gmra.mrb[0].mxu0 %v2811
    %v2953 = vpop.f32.mrb[0].mxu0
    %v2954 = vadd.f32 0.0, %v2953
    %v2955 = vpop.f32.mrb[0].mxu0
    %2956 = vdwg.mxu0
    %v2957 = vld [vmem:[%s6] sm:$0xff]
    %v2958 = vld [vmem:[%s6 + $0x8] sm:$0xff]
    %v2959 = vld [vmem:[%s6 + $0x10] sm:$0xff]
    %v2960 = vld [vmem:[%s6 + $0x18] sm:$0xff]
    %2961 = vmatprep.subr.mxu0 0.0
    %2962 = vmatpush1.msra.mxu0 %v2957
    %2963 = vmatprep.subr.mxu0 0.0
    %2964 = vmatpush1.msra.mxu0 %v2958
    %2965 = vmatprep.subr.mxu0 0.0
    %2966 = vmatpush1.msra.mxu0 %v2959
    %2967 = vmatprep.subr.mxu0 0.0
    %2968 = vmatpush1.msra.mxu0 %v2960
    %2969 = vmatprep.subr.mxu0 0.0
    %2970 = vmatpush1.msra.mxu0 0.0
    %2971 = vmatprep.subr.mxu0 0.0
    %2972 = vmatpush1.msra.mxu0 0.0
    %2973 = vmatprep.subr.mxu0 0.0
    %2974 = vmatpush1.msra.mxu0 0.0
    %2975 = vmatprep.subr.mxu0 0.0
    %2976 = vmatpush1.msra.mxu0 0.0
    %2977 = vmatprep.subr.mxu0 0.0
    %2978 = vmatpush1.msra.mxu0 0.0
    %2979 = vmatprep.subr.mxu0 0.0
    %2980 = vmatpush1.msra.mxu0 0.0
    %2981 = vmatprep.subr.mxu0 0.0
    %2982 = vmatpush1.msra.mxu0 0.0
    %2983 = vmatprep.subr.mxu0 0.0
    %2984 = vmatpush1.msra.mxu0 0.0
    %2985 = vmatprep.subr.mxu0 0.0
    %2986 = vmatpush1.msra.mxu0 0.0
    %2987 = vmatprep.subr.mxu0 0.0
    %2988 = vmatpush1.msra.mxu0 0.0
    %2989 = vmatprep.subr.mxu0 0.0
    %2990 = vmatpush1.msra.mxu0 0.0
    %2991 = vmatprep.subr.mxu0 0.0
    %2992 = vmatpush1.msra.mxu0 0.0
    %2993 = vmatprep.subr.mxu0 0.0
    %2994 = vmatpush1.msra.mxu0 0.0
    %2995 = vmatprep.subr.mxu0 0.0
    %2996 = vmatpush1.msra.mxu0 0.0
    %2997 = vmatprep.subr.mxu0 0.0
    %2998 = vmatpush1.msra.mxu0 0.0
    %2999 = vmatprep.subr.mxu0 0.0
    %3000 = vmatpush1.msra.mxu0 0.0
    %3001 = vmatprep.subr.mxu0 0.0
    %3002 = vmatpush1.msra.mxu0 0.0
    %3003 = vmatprep.subr.mxu0 0.0
    %3004 = vmatpush1.msra.mxu0 0.0
    %3005 = vmatprep.subr.mxu0 0.0
    %3006 = vmatpush1.msra.mxu0 0.0
    %3007 = vmatprep.subr.mxu0 0.0
    %3008 = vmatpush1.msra.mxu0 0.0
    %3009 = vmatprep.subr.mxu0 0.0
    %3010 = vmatpush1.msra.mxu0 0.0
    %3011 = vmatprep.subr.mxu0 0.0
    %3012 = vmatpush1.msra.mxu0 0.0
    %3013 = vmatprep.subr.mxu0 0.0
    %3014 = vmatpush1.msra.mxu0 0.0
    %3015 = vmatprep.subr.mxu0 0.0
    %3016 = vmatpush1.msra.mxu0 0.0
    %3017 = vmatprep.subr.mxu0 0.0
    %3018 = vmatpush1.msra.mxu0 0.0
    %3019 = vmatprep.subr.mxu0 0.0
    %3020 = vmatpush1.msra.mxu0 0.0
    %3021 = vmatprep.subr.mxu0 0.0
    %3022 = vmatpush1.msra.mxu0 0.0
    %3023 = vmatprep.subr.mxu0 0.0
    %3024 = vmatpush1.msra.mxu0 0.0
    %3025 = vmatprep.mubr.f32.mxu0 0.0
    %3026 = vmatmul.mubr.f32.gmra.mrb[0].mxu0 %v2811
    %v3027 = vpop.f32.mrb[0].mxu0
    %v3028 = vadd.f32 0.0, %v3027
    %v3029 = vpop.f32.mrb[0].mxu0
    %3030 = vdwg.mxu0
    %v3031 = vld [vmem:[%s7] sm:$0xff]
    %v3032 = vld [vmem:[%s7 + $0x8] sm:$0xff]
    %v3033 = vld [vmem:[%s7 + $0x10] sm:$0xff]
    %v3034 = vld [vmem:[%s7 + $0x18] sm:$0xff]
    %3035 = vmatprep.subr.mxu0 0.0
    %3036 = vmatpush1.msra.mxu0 %v3031
    %3037 = vmatprep.subr.mxu0 0.0
    %3038 = vmatpush1.msra.mxu0 %v3032
    %3039 = vmatprep.subr.mxu0 0.0
    %3040 = vmatpush1.msra.mxu0 %v3033
    %3041 = vmatprep.subr.mxu0 0.0
    %3042 = vmatpush1.msra.mxu0 %v3034
    %3043 = vmatprep.subr.mxu0 0.0
    %3044 = vmatpush1.msra.mxu0 0.0
    %3045 = vmatprep.subr.mxu0 0.0
    %3046 = vmatpush1.msra.mxu0 0.0
    %3047 = vmatprep.subr.mxu0 0.0
    %3048 = vmatpush1.msra.mxu0 0.0
    %3049 = vmatprep.subr.mxu0 0.0
    %3050 = vmatpush1.msra.mxu0 0.0
    %3051 = vmatprep.subr.mxu0 0.0
    %3052 = vmatpush1.msra.mxu0 0.0
    %3053 = vmatprep.subr.mxu0 0.0
    %3054 = vmatpush1.msra.mxu0 0.0
    %3055 = vmatprep.subr.mxu0 0.0
    %3056 = vmatpush1.msra.mxu0 0.0
    %3057 = vmatprep.subr.mxu0 0.0
    %3058 = vmatpush1.msra.mxu0 0.0
    %3059 = vmatprep.subr.mxu0 0.0
    %3060 = vmatpush1.msra.mxu0 0.0
    %3061 = vmatprep.subr.mxu0 0.0
    %3062 = vmatpush1.msra.mxu0 0.0
    %3063 = vmatprep.subr.mxu0 0.0
    %3064 = vmatpush1.msra.mxu0 0.0
    %3065 = vmatprep.subr.mxu0 0.0
    %3066 = vmatpush1.msra.mxu0 0.0
    %3067 = vmatprep.subr.mxu0 0.0
    %3068 = vmatpush1.msra.mxu0 0.0
    %3069 = vmatprep.subr.mxu0 0.0
    %3070 = vmatpush1.msra.mxu0 0.0
    %3071 = vmatprep.subr.mxu0 0.0
    %3072 = vmatpush1.msra.mxu0 0.0
    %3073 = vmatprep.subr.mxu0 0.0
    %3074 = vmatpush1.msra.mxu0 0.0
    %3075 = vmatprep.subr.mxu0 0.0
    %3076 = vmatpush1.msra.mxu0 0.0
    %3077 = vmatprep.subr.mxu0 0.0
    %3078 = vmatpush1.msra.mxu0 0.0
    %3079 = vmatprep.subr.mxu0 0.0
    %3080 = vmatpush1.msra.mxu0 0.0
    %3081 = vmatprep.subr.mxu0 0.0
    %3082 = vmatpush1.msra.mxu0 0.0
    %3083 = vmatprep.subr.mxu0 0.0
    %3084 = vmatpush1.msra.mxu0 0.0
    %3085 = vmatprep.subr.mxu0 0.0
    %3086 = vmatpush1.msra.mxu0 0.0
    %3087 = vmatprep.subr.mxu0 0.0
    %3088 = vmatpush1.msra.mxu0 0.0
    %3089 = vmatprep.subr.mxu0 0.0
    %3090 = vmatpush1.msra.mxu0 0.0
    %3091 = vmatprep.subr.mxu0 0.0
    %3092 = vmatpush1.msra.mxu0 0.0
    %3093 = vmatprep.subr.mxu0 0.0
    %3094 = vmatpush1.msra.mxu0 0.0
    %3095 = vmatprep.subr.mxu0 0.0
    %3096 = vmatpush1.msra.mxu0 0.0
    %3097 = vmatprep.subr.mxu0 0.0
    %3098 = vmatpush1.msra.mxu0 0.0
    %3099 = vmatprep.mubr.f32.mxu0 0.0
    %3100 = vmatmul.mubr.f32.gmra.mrb[0].mxu0 %v2811
    %v3101 = vpop.f32.mrb[0].mxu0
    %v3102 = vadd.f32 0.0, %v3101
    %v3103 = vpop.f32.mrb[0].mxu0
    %3104 = vdwg.mxu0
    %v3105 = vadd.f32 %v2806, %v2880
    %v3106 = vxor.u32 %v3105, 2147483648
    %v3107 = vmul.f32 %v3106, 1.442695
    %v3108 = vpow.pop %v3107
    %v3109 = vadd.f32 %v3108, 1.0
    %v3110 = vrcp.pop %v3109
    %v3111 = vmul.f32 1.0, %v3110
    %3113 = vrot.lane.b32.xlu0 %v2954, 32
    %v3114 = vpop.permute.xlu0 %3113
    %v3116 = vadd.f32 %v2806, %v3114
    %v3117 = vxor.u32 %v3116, 2147483648
    %v3118 = vmul.f32 %v3117, 1.442695
    %v3119 = vpow.pop %v3118
    %v3120 = vadd.f32 %v3119, 1.0
    %v3121 = vrcp.pop %v3120
    %v3122 = vmul.f32 1.0, %v3121
    %3124 = vrot.lane.b32.xlu0 %v3028, 64
    %v3125 = vpop.permute.xlu0 %3124
    %v3127 = vadd.f32 %v2806, %v3125
    %v3128 = vtanh.pop %v3127
    %3130 = vrot.lane.b32.xlu0 %v3102, 96
    %v3131 = vpop.permute.xlu0 %3130
    %v3133 = vadd.f32 %v2806, %v3131
    %v3134 = vxor.u32 %v3133, 2147483648
    %v3135 = vmul.f32 %v3134, 1.442695
    %v3136 = vpow.pop %v3135
    %v3137 = vadd.f32 %v3136, 1.0
    %v3138 = vrcp.pop %v3137
    %v3139 = vmul.f32 1.0, %v3138
    %v3140 = vmul.f32 %v3122, %v2792
    %3142 = vrot.lane.b32.xlu0 %v3128, 64
    %v3143 = vpop.permute.xlu0 %3142
    %v3145 = vmul.f32 %v3111, %v3143
    %3147 = vrot.lane.b32.xlu0 %v3145, 32
    %v3148 = vpop.permute.xlu0 %3147
    %v3150 = vadd.f32 %v3140, %v3148
    %v3151 = vtanh.pop %v3150
    %3153 = vrot.lane.b32.xlu0 %v3151, 64
    %v3154 = vpop.permute.xlu0 %3153
    %v3156 = vmul.f32 %v3139, %v3154
    %3158 = vrot.lane.b32.xlu0 %v3156, 32
    %v3159 = vpop.permute.xlu0 %3158
    %3161 = vst.msk [vmem:[#allocation3 + $0x7] sm:$0x1] %vm653, %v3159
    %3162 = vst.msk [vmem:[#allocation3 + $0xe] sm:$0x2] %vm655, %v3159
    %v3163 = vld [vmem:[#allocation3] sm:$0xff]
    %v3164 = vld [vmem:[#allocation3 + $0x8] sm:$0xff]
    %v3165 = vld [vmem:[#allocation10] sm:$0xff]
    %v3166 = vld [vmem:[#allocation10 + $0x8] sm:$0xff]
    %v3167 = vld [vmem:[#allocation10 + $0x10] sm:$0xff]
    %v3168 = vld [vmem:[#allocation10 + $0x18] sm:$0xff]
    %v3169 = vld [vmem:[#allocation11] sm:$0x1]
    %v3171 = vlaneseq
    %v3172 = vshrl.u32 %v3171, 7
    %v3173 = vsub.s32 0, %v3172
    %v3174 = vrot.slane %v3169, %v3173
    %v3177 = vsel %vm297, %v3163, 0
    %v3180 = vsel %vm297, %v3164, 0
    %3182 = vmatprep.subr.mxu0 0.0
    %3183 = vmatpush1.msra.mxu0 %v3165
    %3184 = vmatprep.subr.mxu0 0.0
    %3185 = vmatpush1.msra.mxu0 %v3166
    %3186 = vmatprep.subr.mxu0 0.0
    %3187 = vmatpush1.msra.mxu0 %v3167
    %3188 = vmatprep.subr.mxu0 0.0
    %3189 = vmatpush1.msra.mxu0 %v3168
    %3190 = vmatprep.subr.mxu0 0.0
    %3191 = vmatpush1.msra.mxu0 0.0
    %3192 = vmatprep.subr.mxu0 0.0
    %3193 = vmatpush1.msra.mxu0 0.0
    %3194 = vmatprep.subr.mxu0 0.0
    %3195 = vmatpush1.msra.mxu0 0.0
    %3196 = vmatprep.subr.mxu0 0.0
    %3197 = vmatpush1.msra.mxu0 0.0
    %3198 = vmatprep.subr.mxu0 0.0
    %3199 = vmatpush1.msra.mxu0 0.0
    %3200 = vmatprep.subr.mxu0 0.0
    %3201 = vmatpush1.msra.mxu0 0.0
    %3202 = vmatprep.subr.mxu0 0.0
    %3203 = vmatpush1.msra.mxu0 0.0
    %3204 = vmatprep.subr.mxu0 0.0
    %3205 = vmatpush1.msra.mxu0 0.0
    %3206 = vmatprep.subr.mxu0 0.0
    %3207 = vmatpush1.msra.mxu0 0.0
    %3208 = vmatprep.subr.mxu0 0.0
    %3209 = vmatpush1.msra.mxu0 0.0
    %3210 = vmatprep.subr.mxu0 0.0
    %3211 = vmatpush1.msra.mxu0 0.0
    %3212 = vmatprep.subr.mxu0 0.0
    %3213 = vmatpush1.msra.mxu0 0.0
    %3214 = vmatprep.subr.mxu0 0.0
    %3215 = vmatpush1.msra.mxu0 0.0
    %3216 = vmatprep.subr.mxu0 0.0
    %3217 = vmatpush1.msra.mxu0 0.0
    %3218 = vmatprep.subr.mxu0 0.0
    %3219 = vmatpush1.msra.mxu0 0.0
    %3220 = vmatprep.subr.mxu0 0.0
    %3221 = vmatpush1.msra.mxu0 0.0
    %3222 = vmatprep.subr.mxu0 0.0
    %3223 = vmatpush1.msra.mxu0 0.0
    %3224 = vmatprep.subr.mxu0 0.0
    %3225 = vmatpush1.msra.mxu0 0.0
    %3226 = vmatprep.subr.mxu0 0.0
    %3227 = vmatpush1.msra.mxu0 0.0
    %3228 = vmatprep.subr.mxu0 0.0
    %3229 = vmatpush1.msra.mxu0 0.0
    %3230 = vmatprep.subr.mxu0 0.0
    %3231 = vmatpush1.msra.mxu0 0.0
    %3232 = vmatprep.subr.mxu0 0.0
    %3233 = vmatpush1.msra.mxu0 0.0
    %3234 = vmatprep.subr.mxu0 0.0
    %3235 = vmatpush1.msra.mxu0 0.0
    %3236 = vmatprep.subr.mxu0 0.0
    %3237 = vmatpush1.msra.mxu0 0.0
    %3238 = vmatprep.subr.mxu0 0.0
    %3239 = vmatpush1.msra.mxu0 0.0
    %3240 = vmatprep.subr.mxu0 0.0
    %3241 = vmatpush1.msra.mxu0 0.0
    %3242 = vmatprep.subr.mxu0 0.0
    %3243 = vmatpush1.msra.mxu0 0.0
    %3244 = vmatprep.subr.mxu0 0.0
    %3245 = vmatpush1.msra.mxu0 0.0
    %3246 = vmatprep.mubr.f32.mxu0 0.0
    %3247 = vmatmul.mubr.f32.gmra.mrb[0].mxu0 %v3177
    %v3248 = vpop.f32.mrb[0].mxu0
    %v3249 = vadd.f32 %v3174, %v3248
    %v3250 = vpop.f32.mrb[0].mxu0
    %3251 = vmatprep.mubr.f32.mxu0 0.0
    %3252 = vmatmul.mubr.f32.gmra.mrb[0].mxu0 %v3180
    %v3253 = vpop.f32.mrb[0].mxu0
    %v3254 = vadd.f32 %v3174, %v3253
    %v3255 = vpop.f32.mrb[0].mxu0
    %3256 = vdwg.mxu0
    %s3257 = sld [smem:[#allocation4]]
    %vm3258 = vcmp.ge.f32.partialorder %v3249, 0.0
    %vm3259 = vcmp.ge.f32.partialorder %v3254, 0.0
    %v3260 = vstv %s3257
    %v3261 = vmul.f32 %v3260, %v3249
    %v3262 = vmul.f32 %v3260, %v3254
    %v3263 = vsel %vm3258, %v3249, %v3261
    %v3264 = vsel %vm3259, %v3254, %v3262
    %v3265 = vld [vmem:[%s12] sm:$0xff]
    %v3266 = vld [vmem:[%s12 + $0x8] sm:$0xff]
    %v3267 = vld [vmem:[%s12 + $0x10] sm:$0xff]
    %v3268 = vld [vmem:[%s12 + $0x18] sm:$0xff]
    %v3269 = vld [vmem:[#allocation13] sm:$0x1]
    %v3271 = vlaneseq
    %v3272 = vshrl.u32 %v3271, 7
    %v3273 = vsub.s32 0, %v3272
    %v3274 = vrot.slane %v3269, %v3273
    %v3277 = vsel %vm297, %v3263, 0
    %v3280 = vsel %vm297, %v3264, 0
    %3282 = vmatprep.subr.mxu0 0.0
    %3283 = vmatpush1.msra.mxu0 %v3265
    %3284 = vmatprep.subr.mxu0 0.0
    %3285 = vmatpush1.msra.mxu0 %v3266
    %3286 = vmatprep.subr.mxu0 0.0
    %3287 = vmatpush1.msra.mxu0 %v3267
    %3288 = vmatprep.subr.mxu0 0.0
    %3289 = vmatpush1.msra.mxu0 %v3268
    %3290 = vmatprep.subr.mxu0 0.0
    %3291 = vmatpush1.msra.mxu0 0.0
    %3292 = vmatprep.subr.mxu0 0.0
    %3293 = vmatpush1.msra.mxu0 0.0
    %3294 = vmatprep.subr.mxu0 0.0
    %3295 = vmatpush1.msra.mxu0 0.0
    %3296 = vmatprep.subr.mxu0 0.0
    %3297 = vmatpush1.msra.mxu0 0.0
    %3298 = vmatprep.subr.mxu0 0.0
    %3299 = vmatpush1.msra.mxu0 0.0
    %3300 = vmatprep.subr.mxu0 0.0
    %3301 = vmatpush1.msra.mxu0 0.0
    %3302 = vmatprep.subr.mxu0 0.0
    %3303 = vmatpush1.msra.mxu0 0.0
    %3304 = vmatprep.subr.mxu0 0.0
    %3305 = vmatpush1.msra.mxu0 0.0
    %3306 = vmatprep.subr.mxu0 0.0
    %3307 = vmatpush1.msra.mxu0 0.0
    %3308 = vmatprep.subr.mxu0 0.0
    %3309 = vmatpush1.msra.mxu0 0.0
    %3310 = vmatprep.subr.mxu0 0.0
    %3311 = vmatpush1.msra.mxu0 0.0
    %3312 = vmatprep.subr.mxu0 0.0
    %3313 = vmatpush1.msra.mxu0 0.0
    %3314 = vmatprep.subr.mxu0 0.0
    %3315 = vmatpush1.msra.mxu0 0.0
    %3316 = vmatprep.subr.mxu0 0.0
    %3317 = vmatpush1.msra.mxu0 0.0
    %3318 = vmatprep.subr.mxu0 0.0
    %3319 = vmatpush1.msra.mxu0 0.0
    %3320 = vmatprep.subr.mxu0 0.0
    %3321 = vmatpush1.msra.mxu0 0.0
    %3322 = vmatprep.subr.mxu0 0.0
    %3323 = vmatpush1.msra.mxu0 0.0
    %3324 = vmatprep.subr.mxu0 0.0
    %3325 = vmatpush1.msra.mxu0 0.0
    %3326 = vmatprep.subr.mxu0 0.0
    %3327 = vmatpush1.msra.mxu0 0.0
    %3328 = vmatprep.subr.mxu0 0.0
    %3329 = vmatpush1.msra.mxu0 0.0
    %3330 = vmatprep.subr.mxu0 0.0
    %3331 = vmatpush1.msra.mxu0 0.0
    %3332 = vmatprep.subr.mxu0 0.0
    %3333 = vmatpush1.msra.mxu0 0.0
    %3334 = vmatprep.subr.mxu0 0.0
    %3335 = vmatpush1.msra.mxu0 0.0
    %3336 = vmatprep.subr.mxu0 0.0
    %3337 = vmatpush1.msra.mxu0 0.0
    %3338 = vmatprep.subr.mxu0 0.0
    %3339 = vmatpush1.msra.mxu0 0.0
    %3340 = vmatprep.subr.mxu0 0.0
    %3341 = vmatpush1.msra.mxu0 0.0
    %3342 = vmatprep.subr.mxu0 0.0
    %3343 = vmatpush1.msra.mxu0 0.0
    %3344 = vmatprep.subr.mxu0 0.0
    %3345 = vmatpush1.msra.mxu0 0.0
    %3346 = vmatprep.mubr.f32.mxu0 0.0
    %3347 = vmatmul.mubr.f32.gmra.mrb[0].mxu0 %v3277
    %v3348 = vpop.f32.mrb[0].mxu0
    %v3349 = vadd.f32 %v3274, %v3348
    %v3350 = vpop.f32.mrb[0].mxu0
    %3351 = vmatprep.mubr.f32.mxu0 0.0
    %3352 = vmatmul.mubr.f32.gmra.mrb[0].mxu0 %v3280
    %v3353 = vpop.f32.mrb[0].mxu0
    %v3354 = vadd.f32 %v3274, %v3353
    %v3355 = vpop.f32.mrb[0].mxu0
    %3356 = vdwg.mxu0
    %vm3357 = vcmp.gt.f32.partialorder %v3349, 20.0
    %vm3358 = vcmp.gt.f32.partialorder %v3354, 20.0
    %v3359 = vmin.f32 %v3349, 20.0
    %v3360 = vmin.f32 %v3354, 20.0
    %v3361 = vmul.f32 %v3359, 1.442695
    %v3362 = vpow.pop %v3361
    %v3363 = vmul.f32 %v3360, 1.442695
    %v3364 = vpow.pop %v3363
    %v3365 = vadd.f32 %v3362, 1.0
    %v3366 = vlog2.pop %v3365
    %v3367 = vmul.f32 %v3366, 0.6931472
    %v3368 = vmul.f32 -0.5, %v3362
    %v3369 = vadd.f32 %v3368, 1.0
    %v3370 = vmul.f32 %v3369, %v3362
    %v3371 = vand.u32 2147483647, %v3362
    %vm3372 = vcmp.lt.f32.partialorder %v3371, 0.0004427343
    %v3373 = vsel %vm3372, %v3370, %v3367
    %v3374 = vadd.f32 %v3364, 1.0
    %v3375 = vlog2.pop %v3374
    %v3376 = vmul.f32 %v3375, 0.6931472
    %v3377 = vmul.f32 -0.5, %v3364
    %v3378 = vadd.f32 %v3377, 1.0
    %v3379 = vmul.f32 %v3378, %v3364
    %v3380 = vand.u32 2147483647, %v3364
    %vm3381 = vcmp.lt.f32.partialorder %v3380, 0.0004427343
    %v3382 = vsel %vm3381, %v3379, %v3376
    %v3383 = vsel %vm3357, %v3349, %v3373
    %v3384 = vsel %vm3358, %v3354, %v3382
    %v3385 = vld [vmem:[%s14] sm:$0xff]
    %v3386 = vld [vmem:[%s14 + $0x8] sm:$0xff]
    %s3387 = sld [smem:[#allocation5]]
    %v3388 = vstv %s3387
    %vm3389 = vcmask 130048
    %v3391 = vsel %vm3389, %v3383, 0
    %v3394 = vsel %vm3389, %v3384, 0
    %3396 = vmatprep.subr.mxu0 0.0
    %3397 = vmatpush1.msra.mxu0 %v3385
    %3398 = vmatprep.subr.mxu0 0.0
    %3399 = vmatpush1.msra.mxu0 %v3386
    %3400 = vmatprep.subr.mxu0 0.0
    %3401 = vmatpush1.msra.mxu0 0.0
    %3402 = vmatprep.subr.mxu0 0.0
    %3403 = vmatpush1.msra.mxu0 0.0
    %3404 = vmatprep.subr.mxu0 0.0
    %3405 = vmatpush1.msra.mxu0 0.0
    %3406 = vmatprep.subr.mxu0 0.0
    %3407 = vmatpush1.msra.mxu0 0.0
    %3408 = vmatprep.subr.mxu0 0.0
    %3409 = vmatpush1.msra.mxu0 0.0
    %3410 = vmatprep.subr.mxu0 0.0
    %3411 = vmatpush1.msra.mxu0 0.0
    %3412 = vmatprep.subr.mxu0 0.0
    %3413 = vmatpush1.msra.mxu0 0.0
    %3414 = vmatprep.subr.mxu0 0.0
    %3415 = vmatpush1.msra.mxu0 0.0
    %3416 = vmatprep.subr.mxu0 0.0
    %3417 = vmatpush1.msra.mxu0 0.0
    %3418 = vmatprep.subr.mxu0 0.0
    %3419 = vmatpush1.msra.mxu0 0.0
    %3420 = vmatprep.subr.mxu0 0.0
    %3421 = vmatpush1.msra.mxu0 0.0
    %3422 = vmatprep.subr.mxu0 0.0
    %3423 = vmatpush1.msra.mxu0 0.0
    %3424 = vmatprep.subr.mxu0 0.0
    %3425 = vmatpush1.msra.mxu0 0.0
    %3426 = vmatprep.subr.mxu0 0.0
    %3427 = vmatpush1.msra.mxu0 0.0
    %3428 = vmatprep.subr.mxu0 0.0
    %3429 = vmatpush1.msra.mxu0 0.0
    %3430 = vmatprep.subr.mxu0 0.0
    %3431 = vmatpush1.msra.mxu0 0.0
    %3432 = vmatprep.subr.mxu0 0.0
    %3433 = vmatpush1.msra.mxu0 0.0
    %3434 = vmatprep.subr.mxu0 0.0
    %3435 = vmatpush1.msra.mxu0 0.0
    %3436 = vmatprep.subr.mxu0 0.0
    %3437 = vmatpush1.msra.mxu0 0.0
    %3438 = vmatprep.subr.mxu0 0.0
    %3439 = vmatpush1.msra.mxu0 0.0
    %3440 = vmatprep.subr.mxu0 0.0
    %3441 = vmatpush1.msra.mxu0 0.0
    %3442 = vmatprep.subr.mxu0 0.0
    %3443 = vmatpush1.msra.mxu0 0.0
    %3444 = vmatprep.subr.mxu0 0.0
    %3445 = vmatpush1.msra.mxu0 0.0
    %3446 = vmatprep.subr.mxu0 0.0
    %3447 = vmatpush1.msra.mxu0 0.0
    %3448 = vmatprep.subr.mxu0 0.0
    %3449 = vmatpush1.msra.mxu0 0.0
    %3450 = vmatprep.subr.mxu0 0.0
    %3451 = vmatpush1.msra.mxu0 0.0
    %3452 = vmatprep.subr.mxu0 0.0
    %3453 = vmatpush1.msra.mxu0 0.0
    %3454 = vmatprep.subr.mxu0 0.0
    %3455 = vmatpush1.msra.mxu0 0.0
    %3456 = vmatprep.subr.mxu0 0.0
    %3457 = vmatpush1.msra.mxu0 0.0
    %3458 = vmatprep.subr.mxu0 0.0
    %3459 = vmatpush1.msra.mxu0 0.0
    %3460 = vmatprep.mubr.f32.mxu0 0.0
    %3461 = vmatmul.mubr.f32.gmra.mrb[0].mxu0 %v3391
    %v3462 = vpop.f32.mrb[0].mxu0
    %v3463 = vadd.f32 %v3388, %v3462
    %v3464 = vpop.f32.mrb[0].mxu0
    %3465 = vmatprep.mubr.f32.mxu0 0.0
    %3466 = vmatmul.mubr.f32.gmra.mrb[0].mxu0 %v3394
    %v3467 = vpop.f32.mrb[0].mxu0
    %v3468 = vadd.f32 %v3388, %v3467
    %v3469 = vpop.f32.mrb[0].mxu0
    %3470 = vdwg.mxu0
    %v3471 = vand.u32 2147483647, %v3463
    %v3472 = vand.u32 2147483647, %v3468
    %vm3473 = vcmask 7168
    %3474 = vst.msk [vmem:[%s16] sm:$0xff] %vm3473, %v3471
    %s3475 = scalar_lea.vmem %s16, 8
    %3476 = vst.msk [vmem:[%s3475] sm:$0xff] %vm3473, %v3472
    // Predicated region
    $region86: #{lstm_nn_forward.1} parent=1 // pred_check
      _
    $region87: #{lstm_nn_forward.1} parent=1 // pred_check_branch
      %3478 = sbr.rel (0) target = $region89
    $region88: #{lstm_nn_forward.1} parent=1 // pred_region
      _
    $region89: #{lstm_nn_forward.1} parent=1 // pred_fallthru
      _
    // Predicated region
    $region90: #{lstm_nn_forward.1} parent=1 // pred_check
      _
    $region91: #{lstm_nn_forward.1} parent=1 // pred_check_branch
      %3480 = sbr.rel (0) target = $region93
    $region92: #{lstm_nn_forward.1} parent=1 // pred_region
      _
    $region93: #{lstm_nn_forward.1} parent=1 // pred_fallthru
      _
    %3481 = vsyncpa [#allocation7], 1
    %3482 = vsyncpa [#allocation9], 1
    %3483 = vsyncpa [#allocation12], 1

</llo_original>
